<compile_context>
chip_gen: v5e
topology: v5e:2x2
jax: 0.10.0
libtpu: 0.0.40
codegen_flags: <defaults>
</compile_context>

<pallas_src>
import functools

import jax
import jax.numpy as jnp
from jax.experimental import pallas as pl
from jax.experimental.pallas import tpu as pltpu

SELU_ALPHA = 1.6732632423543772
SELU_SCALE = 1.0507009873554805
LANE = 128


def _round_up(n, m):
    return ((n + m - 1) // m) * m


# ----------------------------------------------------------------------------
# Fused MolDecoder kernel (one batch tile per grid step)
# ----------------------------------------------------------------------------
def _mol_decoder_kernel(
    # inputs
    x_ref, w_lat_ref, b_lat_ref,
    w0_ref, w1_ref, w2_ref, b_gru_ref,
    w_dec_ref, b_dec_ref,
    # output: (bt, T*Cp) batch-major, each row = T contiguous 128-lane Cp blocks
    out_ref,
    # scratch
    seq_ref,     # (T*bt, Hp)  bf16  inter-layer sequence buffer
    gx_ref,      # (T*bt, 3Hp) f32   hoisted input-side gate activations
    *, bt, T, Ip, Hp, Cp,
):
    f32, bf16 = jnp.float32, jnp.bfloat16
    H2, H3 = 2 * Hp, 3 * Hp

    # ---------------- prologue: latent Linear + SELU (computed once) --------
    z = jnp.dot(x_ref[...].astype(bf16), w_lat_ref[...],
                preferred_element_type=f32) + b_lat_ref[...]
    lat = SELU_SCALE * jnp.where(
        z > 0, z, SELU_ALPHA * (jnp.exp(jnp.minimum(z, 0.0)) - 1.0))
    lat_bf = lat.astype(bf16)

    def bias_row(idx):                       # (1, 3Hp) f32 row of packed biases
        return b_gru_ref[pl.ds(idx, 1), :]

    # PyTorch GRU semantics, gates lane-packed as [r | z | n], each Hp lanes wide
    # (Hp multiple of 128 -> every slice below is vreg-aligned):
    #   r = sig(gx_r + gh_r); z = sig(gx_z + gh_z)
    #   n = tanh(gx_n + r*gh_n); h' = (1-z)*n + z*h
    def gru_step(gx_t, h, whh_bf, bhh_b):
        gh = jnp.dot(h.astype(bf16), whh_bf, preferred_element_type=f32) + bhh_b
        r = jax.nn.sigmoid(gx_t[:, :Hp] + gh[:, :Hp])
        zg = jax.nn.sigmoid(gx_t[:, Hp:H2] + gh[:, Hp:H2])
        n = jnp.tanh(gx_t[:, H2:] + r * gh[:, H2:])
        return (1.0 - zg) * n + zg * h

    def run_layer(get_gx, whh_bf, bhh_row):
        bhh_b = jnp.broadcast_to(bhh_row, (bt, H3))       # hoisted broadcast
        h = jnp.zeros((bt, Hp), f32)
        for t in range(T):       # T static & small -> fully unrolled
            h = gru_step(get_gx(t), h, whh_bf, bhh_b)
            seq_ref[pl.ds(t * bt, bt), :] = h.astype(bf16)
        # TODO(synk): for long sequences (o=120) switch to lax.fori_loop(unroll=True);
        # gx already lives in VMEM scratch so only h stays in vregs.

    # Layer 0: Repeat(o) => input identical at every step -> input gates once.
    wih0 = w0_ref[pl.ds(0, Ip), :]
    whh0 = w0_ref[pl.ds(Ip, Hp), :]
    gx0 = (jnp.dot(lat_bf, wih0, preferred_element_type=f32)
           + jnp.broadcast_to(bias_row(0), (bt, H3)))
    run_layer(lambda t: gx0, whh0, bias_row(1))

    # Layers 1 & 2: input-side gates hoisted out of the recurrence as one batched
    # (T*bt, Hp) @ (Hp, 3Hp) matmul, parked in VMEM scratch (bounded vreg pressure;
    # also makes the read-before-overwrite of seq_ref explicit and robust).
    def layer(w_ref, bih_idx, bhh_idx):
        wih = w_ref[pl.ds(0, Hp), :]
        whh = w_ref[pl.ds(Hp, Hp), :]
        gx_ref[...] = (jnp.dot(seq_ref[...], wih, preferred_element_type=f32)
                       + jnp.broadcast_to(bias_row(bih_idx), (T * bt, H3)))
        run_layer(lambda t: gx_ref[pl.ds(t * bt, bt), :], whh, bias_row(bhh_idx))

    layer(w1_ref, 2, 3)
    layer(w2_ref, 4, 5)

    # ---------------- epilogue: TimeDistributed(Linear + Softmax) ------------
    logits = (jnp.dot(seq_ref[...], w_dec_ref[...], preferred_element_type=f32)
              + jnp.broadcast_to(b_dec_ref[...], (T * bt, Cp)))
    m = jnp.max(logits, axis=-1, keepdims=True)
    e = jnp.exp(logits - m)                   # padded lanes (-1e9 bias) -> exp == 0
    probs = e / jnp.sum(e, axis=-1, keepdims=True)     # exact normalization
    # batch-major, 128-lane-aligned stores: row b gets T contiguous Cp-wide blocks
    for t in range(T):
        out_ref[:, pl.ds(t * Cp, Cp)] = (
            probs[t * bt:(t + 1) * bt, :].astype(out_ref.dtype))


# ----------------------------------------------------------------------------
# Wrapper: gate packing / lane padding / bf16 casts + pallas_call
# ----------------------------------------------------------------------------
def _pack_gate_weight(w3, in_pad, hp):
    """(3, in, H) per-gate weights -> (in_pad, 3*hp), zero-padded, order [r|z|n]."""
    _, in_dim, h = w3.shape
    out = jnp.zeros((in_pad, 3 * hp), jnp.float32)
    for g in range(3):
        out = out.at[:in_dim, g * hp:g * hp + h].set(w3[g])
    return out


def _pack_gate_bias(b3, hp):
    h = b3.shape[1]
    out = jnp.zeros((3 * hp,), jnp.float32)
    for g in range(3):
        out = out.at[g * hp:g * hp + h].set(b3[g])
    return out


def mol_decoder_forward(x, params, *, batch_tile=None):
    """x: (B, I) latent vector -> (B, T, C) per-step charset probabilities."""
    B, I = x.shape
    T, H = params["seq_len"], params["hidden"]
    C = params["w_dec"].shape[1]
    Hp = _round_up(H, LANE)   # each GRU gate owns whole 128-lane groups
    Cp = _round_up(C, LANE)   # lane-dense softmax reduces + unmasked output stores
    Ip = _round_up(I, 8)      # sublane-aligned slice offset for [wih0 ; whh0]
    bt = batch_tile or B
    assert B % bt == 0
    f32, bf16 = jnp.float32, jnp.bfloat16

    # latent Linear, column-padded to Ip (SELU(0) == 0 so padded lanes stay 0)
    w_lat = jnp.zeros((I, Ip), f32).at[:, :I].set(params["w_lat"]).astype(bf16)
    b_lat = jnp.zeros((1, Ip), f32).at[0, :I].set(params["b_lat"])

    # per-layer GRU weights: [wih ; whh] stacked on the contraction axis (bf16);
    # all 6 bias rows in one (6, 3Hp) f32 array -> fewer args / DMA descriptors.
    in_pads = [Ip, Hp, Hp]
    gru_w, bias_rows = [], []
    for l, (wih, whh, bih, bhh) in enumerate(params["gru"]):
        wih_p = _pack_gate_weight(wih, in_pads[l], Hp)
        whh_p = _pack_gate_weight(whh, Hp, Hp)
        gru_w.append(jnp.concatenate([wih_p, whh_p], axis=0).astype(bf16))
        bias_rows.append(_pack_gate_bias(bih, Hp))
        bias_rows.append(_pack_gate_bias(bhh, Hp))
    gru_b = jnp.stack(bias_rows, axis=0)

    # decoder: zero-pad input rows H->Hp; pad charset lanes with -1e9 bias so the
    # padded lanes softmax to exactly 0 and the output stores stay 128-lane dense.
    w_dec = jnp.zeros((Hp, Cp), f32).at[:H, :C].set(params["w_dec"]).astype(bf16)
    b_dec = jnp.full((1, Cp), -1e9, f32).at[0, :C].set(params["b_dec"])

    args = [x, w_lat, b_lat, *gru_w, gru_b, w_dec, b_dec]

    def full_spec(a):
        return pl.BlockSpec(a.shape, lambda i: (0,) * a.ndim)

    flops = (2 * B * I * Ip                       # latent linear
             + 2 * B * Ip * 3 * Hp                # layer-0 input gates (once)
             + 2 * 2 * T * B * Hp * 3 * Hp        # layers 1-2 hoisted input gates
             + 3 * T * 2 * B * Hp * 3 * Hp        # recurrent gates, 3 layers x T
             + 2 * T * B * Hp * Cp)               # decoder
    transcendentals = B * I + 3 * T * B * 3 * Hp + T * B * Cp
    bytes_accessed = int(sum(a.size * a.dtype.itemsize for a in args)
                         + B * T * Cp * 4)

    kernel = functools.partial(_mol_decoder_kernel, bt=bt, T=T, Ip=Ip, Hp=Hp, Cp=Cp)
    out_flat = pl.pallas_call(
        kernel,
        out_shape=jax.ShapeDtypeStruct((B, T * Cp), jnp.float32),
        grid_spec=pltpu.PrefetchScalarGridSpec(
            num_scalar_prefetch=0,
            grid=(B // bt,),
            in_specs=[pl.BlockSpec((bt, I), lambda i: (i, 0))]
                     + [full_spec(a) for a in args[1:]],
            out_specs=pl.BlockSpec((bt, T * Cp), lambda i: (i, 0)),
            scratch_shapes=[pltpu.VMEM((T * bt, Hp), bf16),
                            pltpu.VMEM((T * bt, 3 * Hp), f32)],
        ),
        compiler_params=pltpu.CompilerParams(
            dimension_semantics=("parallel",),
            vmem_limit_bytes=32 * 1024 * 1024),
        cost_estimate=pl.CostEstimate(flops=flops,
                                      transcendentals=transcendentals,
                                      bytes_accessed=bytes_accessed),
    )(*args)
    # (B, T*Cp) -> (B, T, Cp) is a free view reshape; drop the padded lanes.
    return out_flat.reshape(B, T, Cp)[:, :, :C]


# ----------------------------------------------------------------------------
# Deterministic parameter init + pure-JAX f32 reference for verification
# ----------------------------------------------------------------------------
def init_params(key, latent, seq_len, hidden, charset):
    ks = jax.random.split(key, 16)
    kidx = iter(range(16))

    def nrm(k, shape, scale=0.1):
        return scale * jax.random.normal(k, shape, dtype=jnp.float32)

    params = {
        "seq_len": seq_len,
        "hidden": hidden,
        "w_lat": nrm(ks[next(kidx)], (latent, latent)),
        "b_lat": nrm(ks[next(kidx)], (latent,)),
        "w_dec": nrm(ks[next(kidx)], (hidden, charset)),
        "b_dec": nrm(ks[next(kidx)], (charset,)),
        "gru": [],
    }
    in_dim = latent
    for _ in range(3):
        wih = nrm(ks[next(kidx)], (3, in_dim, hidden))
        whh = nrm(ks[next(kidx)], (3, hidden, hidden))
        bih = nrm(ks[next(kidx)], (3, hidden))
        bhh = nrm(ks[next(kidx)], (3, hidden))
        params["gru"].append((wih, whh, bih, bhh))
        in_dim = hidden
    return params


def ref_forward(x, params):
    B, _ = x.shape
    T, H = params["seq_len"], params["hidden"]
    z = x @ params["w_lat"] + params["b_lat"]
    lat = SELU_SCALE * jnp.where(z > 0, z,
                                 SELU_ALPHA * (jnp.exp(jnp.minimum(z, 0.0)) - 1.0))
    inp = jnp.broadcast_to(lat[None, :, :], (T, B, lat.shape[1]))
    for (wih, whh, bih, bhh) in params["gru"]:
        h = jnp.zeros((B, H), jnp.float32)
        outs = []
        for t in range(T):
            x_t = inp[t]
            gx = [x_t @ wih[g] + bih[g] for g in range(3)]
            gh = [h @ whh[g] + bhh[g] for g in range(3)]
            r = jax.nn.sigmoid(gx[0] + gh[0])
            zg = jax.nn.sigmoid(gx[1] + gh[1])
            n = jnp.tanh(gx[2] + r * gh[2])
            h = (1.0 - zg) * n + zg * h
            outs.append(h)
        inp = jnp.stack(outs, axis=0)
    logits = inp @ params["w_dec"] + params["b_dec"]
    return jax.nn.softmax(logits, axis=-1).transpose(1, 0, 2)


if __name__ == "__main__":
    # Small shapes consistent with MolDecoder(i, o, c): latent i=32, seq len o=8,
    # GRU hidden=64, charset c=16.  Batch=8 keeps the batch dim sublane-aligned.
    # TODO(synk): for production throughput, pack many molecules per call so the
    # recurrent matmul M-dim approaches the MXU tile (128/256 rows).
    B, I, T, H, C = 8, 32, 8, 64, 16

    key = jax.random.PRNGKey(0)
    kx, kp = jax.random.split(key)
    x = jax.random.normal(kx, (B, I), dtype=jnp.float32)
    params = init_params(kp, latent=I, seq_len=T, hidden=H, charset=C)

    out = jax.block_until_ready(mol_decoder_forward(x, params))
    ref = jax.block_until_ready(ref_forward(x, params))

    assert out.shape == (B, T, C), out.shape
    assert bool(jnp.all(jnp.isfinite(out)))
    # exact softmax normalization -> rows sum to 1 up to f32 rounding
    assert bool(jnp.allclose(jnp.sum(out, axis=-1), 1.0, atol=1e-3))
    # compare against the pure-f32 JAX reference (kernel uses bf16 MXU operands)
    err = float(jnp.max(jnp.abs(out - ref)))
    assert err < 1e-2, err

    print("KERNEL_OK")
</pallas_src>

<mosaic_0001>
module attributes {stable_mosaic.version = 11 : i64} {
  func.func @_mol_decoder_kernel(%arg0: i32, %arg1: memref<8x32xf32, #tpu.memory_space<vmem>>, %arg2: memref<32x32xbf16, #tpu.memory_space<vmem>>, %arg3: memref<1x32xf32, #tpu.memory_space<vmem>>, %arg4: memref<160x384xbf16, #tpu.memory_space<vmem>>, %arg5: memref<256x384xbf16, #tpu.memory_space<vmem>>, %arg6: memref<256x384xbf16, #tpu.memory_space<vmem>>, %arg7: memref<6x384xf32, #tpu.memory_space<vmem>>, %arg8: memref<128x128xbf16, #tpu.memory_space<vmem>>, %arg9: memref<1x128xf32, #tpu.memory_space<vmem>>, %arg10: memref<8x1024xf32, #tpu.memory_space<vmem>>, %arg11: memref<64x128xbf16, #tpu.memory_space<vmem>>, %arg12: memref<64x384xf32, #tpu.memory_space<vmem>>) attributes {dimension_semantics = [#tpu.dimension_semantics<parallel>], iteration_bounds = array<i64: 1>, scalar_prefetch = 0 : i64, scratch_operands = 2 : i64, tpu.core_type = #tpu.core_type<tc>, window_params = [{transform_indices = @transform_0, window_bounds = array<i64: 8, 32>}, {pipeline_mode = #tpu.pipeline_mode<synchronous>, transform_indices = @transform_1, window_bounds = array<i64: 32, 32>}, {pipeline_mode = #tpu.pipeline_mode<synchronous>, transform_indices = @transform_2, window_bounds = array<i64: 1, 32>}, {pipeline_mode = #tpu.pipeline_mode<synchronous>, transform_indices = @transform_3, window_bounds = array<i64: 160, 384>}, {pipeline_mode = #tpu.pipeline_mode<synchronous>, transform_indices = @transform_4, window_bounds = array<i64: 256, 384>}, {pipeline_mode = #tpu.pipeline_mode<synchronous>, transform_indices = @transform_5, window_bounds = array<i64: 256, 384>}, {pipeline_mode = #tpu.pipeline_mode<synchronous>, transform_indices = @transform_6, window_bounds = array<i64: 6, 384>}, {pipeline_mode = #tpu.pipeline_mode<synchronous>, transform_indices = @transform_7, window_bounds = array<i64: 128, 128>}, {pipeline_mode = #tpu.pipeline_mode<synchronous>, transform_indices = @transform_8, window_bounds = array<i64: 1, 128>}, {transform_indices = @transform_9, window_bounds = array<i64: 8, 1024>}]} {
    %c0 = arith.constant 0 : index
    %c0_0 = arith.constant 0 : index
    %0 = vector.load %arg1[%c0, %c0_0] : memref<8x32xf32, #tpu.memory_space<vmem>>, vector<8x32xf32>
    %1 = arith.truncf %0 : vector<8x32xf32> to vector<8x32xbf16>
    %c0_1 = arith.constant 0 : index
    %c0_2 = arith.constant 0 : index
    %2 = vector.load %arg2[%c0_1, %c0_2] : memref<32x32xbf16, #tpu.memory_space<vmem>>, vector<32x32xbf16>
    %cst = arith.constant dense<0.000000e+00> : vector<8x32xf32>
    %3 = tpu.matmul %1, %2, %cst {dimension_numbers = #tpu.dot_dimension_numbers<[1], [0], [0], [1], [0, 0, 1, 1], [], []>} : vector<8x32xbf16>, vector<32x32xbf16>, vector<8x32xf32> -> vector<8x32xf32>
    %c0_3 = arith.constant 0 : index
    %c0_4 = arith.constant 0 : index
    %4 = vector.load %arg3[%c0_3, %c0_4] : memref<1x32xf32, #tpu.memory_space<vmem>>, vector<1x32xf32>
    %5 = vector.broadcast %4 : vector<1x32xf32> to vector<8x32xf32>
    %6 = arith.addf %3, %5 : vector<8x32xf32>
    %cst_5 = arith.constant 0.000000e+00 : f32
    %7 = vector.broadcast %cst_5 : f32 to vector<8x32xf32>
    %8 = arith.cmpf ogt, %6, %7 : vector<8x32xf32>
    %cst_6 = arith.constant 0.000000e+00 : f32
    %9 = vector.broadcast %cst_6 : f32 to vector<8x32xf32>
    %10 = arith.minimumf %6, %9 : vector<8x32xf32>
    %11 = math.exp %10 : vector<8x32xf32>
    %cst_7 = arith.constant 1.000000e+00 : f32
    %12 = vector.broadcast %cst_7 : f32 to vector<8x32xf32>
    %13 = arith.subf %11, %12 : vector<8x32xf32>
    %cst_8 = arith.constant 1.67326319 : f32
    %14 = vector.broadcast %cst_8 : f32 to vector<8x32xf32>
    %15 = arith.mulf %14, %13 : vector<8x32xf32>
    %16 = arith.select %8, %6, %15 : vector<8x32xi1>, vector<8x32xf32>
    %cst_9 = arith.constant 1.05070102 : f32
    %17 = vector.broadcast %cst_9 : f32 to vector<8x32xf32>
    %18 = arith.mulf %17, %16 : vector<8x32xf32>
    %19 = arith.truncf %18 : vector<8x32xf32> to vector<8x32xbf16>
    %c0_10 = arith.constant 0 : index
    %c0_11 = arith.constant 0 : index
    %20 = vector.load %arg4[%c0_10, %c0_11] : memref<160x384xbf16, #tpu.memory_space<vmem>>, vector<32x384xbf16>
    %c32 = arith.constant 32 : index
    %c0_12 = arith.constant 0 : index
    %21 = vector.load %arg4[%c32, %c0_12] : memref<160x384xbf16, #tpu.memory_space<vmem>>, vector<128x384xbf16>
    %cst_13 = arith.constant dense<0.000000e+00> : vector<8x384xf32>
    %22 = tpu.matmul %19, %20, %cst_13 {dimension_numbers = #tpu.dot_dimension_numbers<[1], [0], [0], [1], [0, 0, 1, 1], [], []>} : vector<8x32xbf16>, vector<32x384xbf16>, vector<8x384xf32> -> vector<8x384xf32>
    %c0_14 = arith.constant 0 : index
    %c0_15 = arith.constant 0 : index
    %23 = vector.load %arg7[%c0_14, %c0_15] : memref<6x384xf32, #tpu.memory_space<vmem>>, vector<1x384xf32>
    %24 = vector.shape_cast %23 : vector<1x384xf32> to vector<1x384xf32>
    %25 = vector.broadcast %24 : vector<1x384xf32> to vector<8x384xf32>
    %26 = arith.addf %22, %25 : vector<8x384xf32>
    %c1 = arith.constant 1 : index
    %c0_16 = arith.constant 0 : index
    %27 = vector.load %arg7[%c1, %c0_16] : memref<6x384xf32, #tpu.memory_space<vmem>>, vector<1x384xf32>
    %28 = vector.shape_cast %27 : vector<1x384xf32> to vector<1x384xf32>
    %29 = vector.broadcast %28 : vector<1x384xf32> to vector<8x384xf32>
    %cst_17 = arith.constant 0.000000e+00 : f32
    %30 = vector.broadcast %cst_17 : f32 to vector<8x128xf32>
    %31 = arith.truncf %30 : vector<8x128xf32> to vector<8x128xbf16>
    %cst_18 = arith.constant dense<0.000000e+00> : vector<8x384xf32>
    %32 = tpu.matmul %31, %21, %cst_18 {dimension_numbers = #tpu.dot_dimension_numbers<[1], [0], [0], [1], [0, 0, 1, 1], [], []>} : vector<8x128xbf16>, vector<128x384xbf16>, vector<8x384xf32> -> vector<8x384xf32>
    %33 = arith.addf %32, %29 : vector<8x384xf32>
    %34 = vector.extract_strided_slice %26 {offsets = [0, 0], sizes = [8, 128], strides = [1, 1]} : vector<8x384xf32> to vector<8x128xf32>
    %35 = vector.extract_strided_slice %33 {offsets = [0, 0], sizes = [8, 128], strides = [1, 1]} : vector<8x384xf32> to vector<8x128xf32>
    %36 = arith.addf %34, %35 : vector<8x128xf32>
    %37 = arith.negf %36 : vector<8x128xf32>
    %38 = math.exp %37 : vector<8x128xf32>
    %cst_19 = arith.constant 1.000000e+00 : f32
    %39 = vector.broadcast %cst_19 : f32 to vector<8x128xf32>
    %40 = arith.addf %39, %38 : vector<8x128xf32>
    %41 = arith.divf %39, %40 : vector<8x128xf32>
    %42 = vector.extract_strided_slice %26 {offsets = [0, 128], sizes = [8, 128], strides = [1, 1]} : vector<8x384xf32> to vector<8x128xf32>
    %43 = vector.extract_strided_slice %33 {offsets = [0, 128], sizes = [8, 128], strides = [1, 1]} : vector<8x384xf32> to vector<8x128xf32>
    %44 = arith.addf %42, %43 : vector<8x128xf32>
    %45 = arith.negf %44 : vector<8x128xf32>
    %46 = math.exp %45 : vector<8x128xf32>
    %cst_20 = arith.constant 1.000000e+00 : f32
    %47 = vector.broadcast %cst_20 : f32 to vector<8x128xf32>
    %48 = arith.addf %47, %46 : vector<8x128xf32>
    %49 = arith.divf %47, %48 : vector<8x128xf32>
    %50 = vector.extract_strided_slice %26 {offsets = [0, 256], sizes = [8, 128], strides = [1, 1]} : vector<8x384xf32> to vector<8x128xf32>
    %51 = vector.extract_strided_slice %33 {offsets = [0, 256], sizes = [8, 128], strides = [1, 1]} : vector<8x384xf32> to vector<8x128xf32>
    %52 = arith.mulf %41, %51 : vector<8x128xf32>
    %53 = arith.addf %50, %52 : vector<8x128xf32>
    %54 = math.tanh %53 : vector<8x128xf32>
    %cst_21 = arith.constant 1.000000e+00 : f32
    %55 = vector.broadcast %cst_21 : f32 to vector<8x128xf32>
    %56 = arith.subf %55, %49 : vector<8x128xf32>
    %57 = arith.mulf %56, %54 : vector<8x128xf32>
    %58 = arith.mulf %49, %30 : vector<8x128xf32>
    %59 = arith.addf %57, %58 : vector<8x128xf32>
    %60 = arith.truncf %59 : vector<8x128xf32> to vector<8x128xbf16>
    %c0_22 = arith.constant 0 : index
    %c0_23 = arith.constant 0 : index
    %61 = vector.load %arg11[%c0_22, %c0_23] : memref<64x128xbf16, #tpu.memory_space<vmem>>, vector<8x128xbf16>
    tpu.vector_store %arg11[%c0_22, %c0_23], %60 {strides = array<i32>} : memref<64x128xbf16, #tpu.memory_space<vmem>>, vector<8x128xbf16>,
    %62 = arith.truncf %59 : vector<8x128xf32> to vector<8x128xbf16>
    %cst_24 = arith.constant dense<0.000000e+00> : vector<8x384xf32>
    %63 = tpu.matmul %62, %21, %cst_24 {dimension_numbers = #tpu.dot_dimension_numbers<[1], [0], [0], [1], [0, 0, 1, 1], [], []>} : vector<8x128xbf16>, vector<128x384xbf16>, vector<8x384xf32> -> vector<8x384xf32>
    %64 = arith.addf %63, %29 : vector<8x384xf32>
    %65 = vector.extract_strided_slice %26 {offsets = [0, 0], sizes = [8, 128], strides = [1, 1]} : vector<8x384xf32> to vector<8x128xf32>
    %66 = vector.extract_strided_slice %64 {offsets = [0, 0], sizes = [8, 128], strides = [1, 1]} : vector<8x384xf32> to vector<8x128xf32>
    %67 = arith.addf %65, %66 : vector<8x128xf32>
    %68 = arith.negf %67 : vector<8x128xf32>
    %69 = math.exp %68 : vector<8x128xf32>
    %cst_25 = arith.constant 1.000000e+00 : f32
    %70 = vector.broadcast %cst_25 : f32 to vector<8x128xf32>
    %71 = arith.addf %70, %69 : vector<8x128xf32>
    %72 = arith.divf %70, %71 : vector<8x128xf32>
    %73 = vector.extract_strided_slice %26 {offsets = [0, 128], sizes = [8, 128], strides = [1, 1]} : vector<8x384xf32> to vector<8x128xf32>
    %74 = vector.extract_strided_slice %64 {offsets = [0, 128], sizes = [8, 128], strides = [1, 1]} : vector<8x384xf32> to vector<8x128xf32>
    %75 = arith.addf %73, %74 : vector<8x128xf32>
    %76 = arith.negf %75 : vector<8x128xf32>
    %77 = math.exp %76 : vector<8x128xf32>
    %cst_26 = arith.constant 1.000000e+00 : f32
    %78 = vector.broadcast %cst_26 : f32 to vector<8x128xf32>
    %79 = arith.addf %78, %77 : vector<8x128xf32>
    %80 = arith.divf %78, %79 : vector<8x128xf32>
    %81 = vector.extract_strided_slice %26 {offsets = [0, 256], sizes = [8, 128], strides = [1, 1]} : vector<8x384xf32> to vector<8x128xf32>
    %82 = vector.extract_strided_slice %64 {offsets = [0, 256], sizes = [8, 128], strides = [1, 1]} : vector<8x384xf32> to vector<8x128xf32>
    %83 = arith.mulf %72, %82 : vector<8x128xf32>
    %84 = arith.addf %81, %83 : vector<8x128xf32>
    %85 = math.tanh %84 : vector<8x128xf32>
    %cst_27 = arith.constant 1.000000e+00 : f32
    %86 = vector.broadcast %cst_27 : f32 to vector<8x128xf32>
    %87 = arith.subf %86, %80 : vector<8x128xf32>
    %88 = arith.mulf %87, %85 : vector<8x128xf32>
    %89 = arith.mulf %80, %59 : vector<8x128xf32>
    %90 = arith.addf %88, %89 : vector<8x128xf32>
    %91 = arith.truncf %90 : vector<8x128xf32> to vector<8x128xbf16>
    %c8 = arith.constant 8 : index
    %c0_28 = arith.constant 0 : index
    %92 = vector.load %arg11[%c8, %c0_28] : memref<64x128xbf16, #tpu.memory_space<vmem>>, vector<8x128xbf16>
    tpu.vector_store %arg11[%c8, %c0_28], %91 {strides = array<i32>} : memref<64x128xbf16, #tpu.memory_space<vmem>>, vector<8x128xbf16>,
    %93 = arith.truncf %90 : vector<8x128xf32> to vector<8x128xbf16>
    %cst_29 = arith.constant dense<0.000000e+00> : vector<8x384xf32>
    %94 = tpu.matmul %93, %21, %cst_29 {dimension_numbers = #tpu.dot_dimension_numbers<[1], [0], [0], [1], [0, 0, 1, 1], [], []>} : vector<8x128xbf16>, vector<128x384xbf16>, vector<8x384xf32> -> vector<8x384xf32>
    %95 = arith.addf %94, %29 : vector<8x384xf32>
    %96 = vector.extract_strided_slice %26 {offsets = [0, 0], sizes = [8, 128], strides = [1, 1]} : vector<8x384xf32> to vector<8x128xf32>
    %97 = vector.extract_strided_slice %95 {offsets = [0, 0], sizes = [8, 128], strides = [1, 1]} : vector<8x384xf32> to vector<8x128xf32>
    %98 = arith.addf %96, %97 : vector<8x128xf32>
    %99 = arith.negf %98 : vector<8x128xf32>
    %100 = math.exp %99 : vector<8x128xf32>
    %cst_30 = arith.constant 1.000000e+00 : f32
    %101 = vector.broadcast %cst_30 : f32 to vector<8x128xf32>
    %102 = arith.addf %101, %100 : vector<8x128xf32>
    %103 = arith.divf %101, %102 : vector<8x128xf32>
    %104 = vector.extract_strided_slice %26 {offsets = [0, 128], sizes = [8, 128], strides = [1, 1]} : vector<8x384xf32> to vector<8x128xf32>
    %105 = vector.extract_strided_slice %95 {offsets = [0, 128], sizes = [8, 128], strides = [1, 1]} : vector<8x384xf32> to vector<8x128xf32>
    %106 = arith.addf %104, %105 : vector<8x128xf32>
    %107 = arith.negf %106 : vector<8x128xf32>
    %108 = math.exp %107 : vector<8x128xf32>
    %cst_31 = arith.constant 1.000000e+00 : f32
    %109 = vector.broadcast %cst_31 : f32 to vector<8x128xf32>
    %110 = arith.addf %109, %108 : vector<8x128xf32>
    %111 = arith.divf %109, %110 : vector<8x128xf32>
    %112 = vector.extract_strided_slice %26 {offsets = [0, 256], sizes = [8, 128], strides = [1, 1]} : vector<8x384xf32> to vector<8x128xf32>
    %113 = vector.extract_strided_slice %95 {offsets = [0, 256], sizes = [8, 128], strides = [1, 1]} : vector<8x384xf32> to vector<8x128xf32>
    %114 = arith.mulf %103, %113 : vector<8x128xf32>
    %115 = arith.addf %112, %114 : vector<8x128xf32>
    %116 = math.tanh %115 : vector<8x128xf32>
    %cst_32 = arith.constant 1.000000e+00 : f32
    %117 = vector.broadcast %cst_32 : f32 to vector<8x128xf32>
    %118 = arith.subf %117, %111 : vector<8x128xf32>
    %119 = arith.mulf %118, %116 : vector<8x128xf32>
    %120 = arith.mulf %111, %90 : vector<8x128xf32>
    %121 = arith.addf %119, %120 : vector<8x128xf32>
    %122 = arith.truncf %121 : vector<8x128xf32> to vector<8x128xbf16>
    %c16 = arith.constant 16 : index
    %c0_33 = arith.constant 0 : index
    %123 = vector.load %arg11[%c16, %c0_33] : memref<64x128xbf16, #tpu.memory_space<vmem>>, vector<8x128xbf16>
    tpu.vector_store %arg11[%c16, %c0_33], %122 {strides = array<i32>} : memref<64x128xbf16, #tpu.memory_space<vmem>>, vector<8x128xbf16>,
    %124 = arith.truncf %121 : vector<8x128xf32> to vector<8x128xbf16>
    %cst_34 = arith.constant dense<0.000000e+00> : vector<8x384xf32>
    %125 = tpu.matmul %124, %21, %cst_34 {dimension_numbers = #tpu.dot_dimension_numbers<[1], [0], [0], [1], [0, 0, 1, 1], [], []>} : vector<8x128xbf16>, vector<128x384xbf16>, vector<8x384xf32> -> vector<8x384xf32>
    %126 = arith.addf %125, %29 : vector<8x384xf32>
    %127 = vector.extract_strided_slice %26 {offsets = [0, 0], sizes = [8, 128], strides = [1, 1]} : vector<8x384xf32> to vector<8x128xf32>
    %128 = vector.extract_strided_slice %126 {offsets = [0, 0], sizes = [8, 128], strides = [1, 1]} : vector<8x384xf32> to vector<8x128xf32>
    %129 = arith.addf %127, %128 : vector<8x128xf32>
    %130 = arith.negf %129 : vector<8x128xf32>
    %131 = math.exp %130 : vector<8x128xf32>
    %cst_35 = arith.constant 1.000000e+00 : f32
    %132 = vector.broadcast %cst_35 : f32 to vector<8x128xf32>
    %133 = arith.addf %132, %131 : vector<8x128xf32>
    %134 = arith.divf %132, %133 : vector<8x128xf32>
    %135 = vector.extract_strided_slice %26 {offsets = [0, 128], sizes = [8, 128], strides = [1, 1]} : vector<8x384xf32> to vector<8x128xf32>
    %136 = vector.extract_strided_slice %126 {offsets = [0, 128], sizes = [8, 128], strides = [1, 1]} : vector<8x384xf32> to vector<8x128xf32>
    %137 = arith.addf %135, %136 : vector<8x128xf32>
    %138 = arith.negf %137 : vector<8x128xf32>
    %139 = math.exp %138 : vector<8x128xf32>
    %cst_36 = arith.constant 1.000000e+00 : f32
    %140 = vector.broadcast %cst_36 : f32 to vector<8x128xf32>
    %141 = arith.addf %140, %139 : vector<8x128xf32>
    %142 = arith.divf %140, %141 : vector<8x128xf32>
    %143 = vector.extract_strided_slice %26 {offsets = [0, 256], sizes = [8, 128], strides = [1, 1]} : vector<8x384xf32> to vector<8x128xf32>
    %144 = vector.extract_strided_slice %126 {offsets = [0, 256], sizes = [8, 128], strides = [1, 1]} : vector<8x384xf32> to vector<8x128xf32>
    %145 = arith.mulf %134, %144 : vector<8x128xf32>
    %146 = arith.addf %143, %145 : vector<8x128xf32>
    %147 = math.tanh %146 : vector<8x128xf32>
    %cst_37 = arith.constant 1.000000e+00 : f32
    %148 = vector.broadcast %cst_37 : f32 to vector<8x128xf32>
    %149 = arith.subf %148, %142 : vector<8x128xf32>
    %150 = arith.mulf %149, %147 : vector<8x128xf32>
    %151 = arith.mulf %142, %121 : vector<8x128xf32>
    %152 = arith.addf %150, %151 : vector<8x128xf32>
    %153 = arith.truncf %152 : vector<8x128xf32> to vector<8x128xbf16>
    %c24 = arith.constant 24 : index
    %c0_38 = arith.constant 0 : index
    %154 = vector.load %arg11[%c24, %c0_38] : memref<64x128xbf16, #tpu.memory_space<vmem>>, vector<8x128xbf16>
    tpu.vector_store %arg11[%c24, %c0_38], %153 {strides = array<i32>} : memref<64x128xbf16, #tpu.memory_space<vmem>>, vector<8x128xbf16>,
    %155 = arith.truncf %152 : vector<8x128xf32> to vector<8x128xbf16>
    %cst_39 = arith.constant dense<0.000000e+00> : vector<8x384xf32>
    %156 = tpu.matmul %155, %21, %cst_39 {dimension_numbers = #tpu.dot_dimension_numbers<[1], [0], [0], [1], [0, 0, 1, 1], [], []>} : vector<8x128xbf16>, vector<128x384xbf16>, vector<8x384xf32> -> vector<8x384xf32>
    %157 = arith.addf %156, %29 : vector<8x384xf32>
    %158 = vector.extract_strided_slice %26 {offsets = [0, 0], sizes = [8, 128], strides = [1, 1]} : vector<8x384xf32> to vector<8x128xf32>
    %159 = vector.extract_strided_slice %157 {offsets = [0, 0], sizes = [8, 128], strides = [1, 1]} : vector<8x384xf32> to vector<8x128xf32>
    %160 = arith.addf %158, %159 : vector<8x128xf32>
    %161 = arith.negf %160 : vector<8x128xf32>
    %162 = math.exp %161 : vector<8x128xf32>
    %cst_40 = arith.constant 1.000000e+00 : f32
    %163 = vector.broadcast %cst_40 : f32 to vector<8x128xf32>
    %164 = arith.addf %163, %162 : vector<8x128xf32>
    %165 = arith.divf %163, %164 : vector<8x128xf32>
    %166 = vector.extract_strided_slice %26 {offsets = [0, 128], sizes = [8, 128], strides = [1, 1]} : vector<8x384xf32> to vector<8x128xf32>
    %167 = vector.extract_strided_slice %157 {offsets = [0, 128], sizes = [8, 128], strides = [1, 1]} : vector<8x384xf32> to vector<8x128xf32>
    %168 = arith.addf %166, %167 : vector<8x128xf32>
    %169 = arith.negf %168 : vector<8x128xf32>
    %170 = math.exp %169 : vector<8x128xf32>
    %cst_41 = arith.constant 1.000000e+00 : f32
    %171 = vector.broadcast %cst_41 : f32 to vector<8x128xf32>
    %172 = arith.addf %171, %170 : vector<8x128xf32>
    %173 = arith.divf %171, %172 : vector<8x128xf32>
    %174 = vector.extract_strided_slice %26 {offsets = [0, 256], sizes = [8, 128], strides = [1, 1]} : vector<8x384xf32> to vector<8x128xf32>
    %175 = vector.extract_strided_slice %157 {offsets = [0, 256], sizes = [8, 128], strides = [1, 1]} : vector<8x384xf32> to vector<8x128xf32>
    %176 = arith.mulf %165, %175 : vector<8x128xf32>
    %177 = arith.addf %174, %176 : vector<8x128xf32>
    %178 = math.tanh %177 : vector<8x128xf32>
    %cst_42 = arith.constant 1.000000e+00 : f32
    %179 = vector.broadcast %cst_42 : f32 to vector<8x128xf32>
    %180 = arith.subf %179, %173 : vector<8x128xf32>
    %181 = arith.mulf %180, %178 : vector<8x128xf32>
    %182 = arith.mulf %173, %152 : vector<8x128xf32>
    %183 = arith.addf %181, %182 : vector<8x128xf32>
    %184 = arith.truncf %183 : vector<8x128xf32> to vector<8x128xbf16>
    %c32_43 = arith.constant 32 : index
    %c0_44 = arith.constant 0 : index
    %185 = vector.load %arg11[%c32_43, %c0_44] : memref<64x128xbf16, #tpu.memory_space<vmem>>, vector<8x128xbf16>
    tpu.vector_store %arg11[%c32_43, %c0_44], %184 {strides = array<i32>} : memref<64x128xbf16, #tpu.memory_space<vmem>>, vector<8x128xbf16>,
    %186 = arith.truncf %183 : vector<8x128xf32> to vector<8x128xbf16>
    %cst_45 = arith.constant dense<0.000000e+00> : vector<8x384xf32>
    %187 = tpu.matmul %186, %21, %cst_45 {dimension_numbers = #tpu.dot_dimension_numbers<[1], [0], [0], [1], [0, 0, 1, 1], [], []>} : vector<8x128xbf16>, vector<128x384xbf16>, vector<8x384xf32> -> vector<8x384xf32>
    %188 = arith.addf %187, %29 : vector<8x384xf32>
    %189 = vector.extract_strided_slice %26 {offsets = [0, 0], sizes = [8, 128], strides = [1, 1]} : vector<8x384xf32> to vector<8x128xf32>
    %190 = vector.extract_strided_slice %188 {offsets = [0, 0], sizes = [8, 128], strides = [1, 1]} : vector<8x384xf32> to vector<8x128xf32>
    %191 = arith.addf %189, %190 : vector<8x128xf32>
    %192 = arith.negf %191 : vector<8x128xf32>
    %193 = math.exp %192 : vector<8x128xf32>
    %cst_46 = arith.constant 1.000000e+00 : f32
    %194 = vector.broadcast %cst_46 : f32 to vector<8x128xf32>
    %195 = arith.addf %194, %193 : vector<8x128xf32>
    %196 = arith.divf %194, %195 : vector<8x128xf32>
    %197 = vector.extract_strided_slice %26 {offsets = [0, 128], sizes = [8, 128], strides = [1, 1]} : vector<8x384xf32> to vector<8x128xf32>
    %198 = vector.extract_strided_slice %188 {offsets = [0, 128], sizes = [8, 128], strides = [1, 1]} : vector<8x384xf32> to vector<8x128xf32>
    %199 = arith.addf %197, %198 : vector<8x128xf32>
    %200 = arith.negf %199 : vector<8x128xf32>
    %201 = math.exp %200 : vector<8x128xf32>
    %cst_47 = arith.constant 1.000000e+00 : f32
    %202 = vector.broadcast %cst_47 : f32 to vector<8x128xf32>
    %203 = arith.addf %202, %201 : vector<8x128xf32>
    %204 = arith.divf %202, %203 : vector<8x128xf32>
    %205 = vector.extract_strided_slice %26 {offsets = [0, 256], sizes = [8, 128], strides = [1, 1]} : vector<8x384xf32> to vector<8x128xf32>
    %206 = vector.extract_strided_slice %188 {offsets = [0, 256], sizes = [8, 128], strides = [1, 1]} : vector<8x384xf32> to vector<8x128xf32>
    %207 = arith.mulf %196, %206 : vector<8x128xf32>
    %208 = arith.addf %205, %207 : vector<8x128xf32>
    %209 = math.tanh %208 : vector<8x128xf32>
    %cst_48 = arith.constant 1.000000e+00 : f32
    %210 = vector.broadcast %cst_48 : f32 to vector<8x128xf32>
    %211 = arith.subf %210, %204 : vector<8x128xf32>
    %212 = arith.mulf %211, %209 : vector<8x128xf32>
    %213 = arith.mulf %204, %183 : vector<8x128xf32>
    %214 = arith.addf %212, %213 : vector<8x128xf32>
    %215 = arith.truncf %214 : vector<8x128xf32> to vector<8x128xbf16>
    %c40 = arith.constant 40 : index
    %c0_49 = arith.constant 0 : index
    %216 = vector.load %arg11[%c40, %c0_49] : memref<64x128xbf16, #tpu.memory_space<vmem>>, vector<8x128xbf16>
    tpu.vector_store %arg11[%c40, %c0_49], %215 {strides = array<i32>} : memref<64x128xbf16, #tpu.memory_space<vmem>>, vector<8x128xbf16>,
    %217 = arith.truncf %214 : vector<8x128xf32> to vector<8x128xbf16>
    %cst_50 = arith.constant dense<0.000000e+00> : vector<8x384xf32>
    %218 = tpu.matmul %217, %21, %cst_50 {dimension_numbers = #tpu.dot_dimension_numbers<[1], [0], [0], [1], [0, 0, 1, 1], [], []>} : vector<8x128xbf16>, vector<128x384xbf16>, vector<8x384xf32> -> vector<8x384xf32>
    %219 = arith.addf %218, %29 : vector<8x384xf32>
    %220 = vector.extract_strided_slice %26 {offsets = [0, 0], sizes = [8, 128], strides = [1, 1]} : vector<8x384xf32> to vector<8x128xf32>
    %221 = vector.extract_strided_slice %219 {offsets = [0, 0], sizes = [8, 128], strides = [1, 1]} : vector<8x384xf32> to vector<8x128xf32>
    %222 = arith.addf %220, %221 : vector<8x128xf32>
    %223 = arith.negf %222 : vector<8x128xf32>
    %224 = math.exp %223 : vector<8x128xf32>
    %cst_51 = arith.constant 1.000000e+00 : f32
    %225 = vector.broadcast %cst_51 : f32 to vector<8x128xf32>
    %226 = arith.addf %225, %224 : vector<8x128xf32>
    %227 = arith.divf %225, %226 : vector<8x128xf32>
    %228 = vector.extract_strided_slice %26 {offsets = [0, 128], sizes = [8, 128], strides = [1, 1]} : vector<8x384xf32> to vector<8x128xf32>
    %229 = vector.extract_strided_slice %219 {offsets = [0, 128], sizes = [8, 128], strides = [1, 1]} : vector<8x384xf32> to vector<8x128xf32>
    %230 = arith.addf %228, %229 : vector<8x128xf32>
    %231 = arith.negf %230 : vector<8x128xf32>
    %232 = math.exp %231 : vector<8x128xf32>
    %cst_52 = arith.constant 1.000000e+00 : f32
    %233 = vector.broadcast %cst_52 : f32 to vector<8x128xf32>
    %234 = arith.addf %233, %232 : vector<8x128xf32>
    %235 = arith.divf %233, %234 : vector<8x128xf32>
    %236 = vector.extract_strided_slice %26 {offsets = [0, 256], sizes = [8, 128], strides = [1, 1]} : vector<8x384xf32> to vector<8x128xf32>
    %237 = vector.extract_strided_slice %219 {offsets = [0, 256], sizes = [8, 128], strides = [1, 1]} : vector<8x384xf32> to vector<8x128xf32>
    %238 = arith.mulf %227, %237 : vector<8x128xf32>
    %239 = arith.addf %236, %238 : vector<8x128xf32>
    %240 = math.tanh %239 : vector<8x128xf32>
    %cst_53 = arith.constant 1.000000e+00 : f32
    %241 = vector.broadcast %cst_53 : f32 to vector<8x128xf32>
    %242 = arith.subf %241, %235 : vector<8x128xf32>
    %243 = arith.mulf %242, %240 : vector<8x128xf32>
    %244 = arith.mulf %235, %214 : vector<8x128xf32>
    %245 = arith.addf %243, %244 : vector<8x128xf32>
    %246 = arith.truncf %245 : vector<8x128xf32> to vector<8x128xbf16>
    %c48 = arith.constant 48 : index
    %c0_54 = arith.constant 0 : index
    %247 = vector.load %arg11[%c48, %c0_54] : memref<64x128xbf16, #tpu.memory_space<vmem>>, vector<8x128xbf16>
    tpu.vector_store %arg11[%c48, %c0_54], %246 {strides = array<i32>} : memref<64x128xbf16, #tpu.memory_space<vmem>>, vector<8x128xbf16>,
    %248 = arith.truncf %245 : vector<8x128xf32> to vector<8x128xbf16>
    %cst_55 = arith.constant dense<0.000000e+00> : vector<8x384xf32>
    %249 = tpu.matmul %248, %21, %cst_55 {dimension_numbers = #tpu.dot_dimension_numbers<[1], [0], [0], [1], [0, 0, 1, 1], [], []>} : vector<8x128xbf16>, vector<128x384xbf16>, vector<8x384xf32> -> vector<8x384xf32>
    %250 = arith.addf %249, %29 : vector<8x384xf32>
    %251 = vector.extract_strided_slice %26 {offsets = [0, 0], sizes = [8, 128], strides = [1, 1]} : vector<8x384xf32> to vector<8x128xf32>
    %252 = vector.extract_strided_slice %250 {offsets = [0, 0], sizes = [8, 128], strides = [1, 1]} : vector<8x384xf32> to vector<8x128xf32>
    %253 = arith.addf %251, %252 : vector<8x128xf32>
    %254 = arith.negf %253 : vector<8x128xf32>
    %255 = math.exp %254 : vector<8x128xf32>
    %cst_56 = arith.constant 1.000000e+00 : f32
    %256 = vector.broadcast %cst_56 : f32 to vector<8x128xf32>
    %257 = arith.addf %256, %255 : vector<8x128xf32>
    %258 = arith.divf %256, %257 : vector<8x128xf32>
    %259 = vector.extract_strided_slice %26 {offsets = [0, 128], sizes = [8, 128], strides = [1, 1]} : vector<8x384xf32> to vector<8x128xf32>
    %260 = vector.extract_strided_slice %250 {offsets = [0, 128], sizes = [8, 128], strides = [1, 1]} : vector<8x384xf32> to vector<8x128xf32>
    %261 = arith.addf %259, %260 : vector<8x128xf32>
    %262 = arith.negf %261 : vector<8x128xf32>
    %263 = math.exp %262 : vector<8x128xf32>
    %cst_57 = arith.constant 1.000000e+00 : f32
    %264 = vector.broadcast %cst_57 : f32 to vector<8x128xf32>
    %265 = arith.addf %264, %263 : vector<8x128xf32>
    %266 = arith.divf %264, %265 : vector<8x128xf32>
    %267 = vector.extract_strided_slice %26 {offsets = [0, 256], sizes = [8, 128], strides = [1, 1]} : vector<8x384xf32> to vector<8x128xf32>
    %268 = vector.extract_strided_slice %250 {offsets = [0, 256], sizes = [8, 128], strides = [1, 1]} : vector<8x384xf32> to vector<8x128xf32>
    %269 = arith.mulf %258, %268 : vector<8x128xf32>
    %270 = arith.addf %267, %269 : vector<8x128xf32>
    %271 = math.tanh %270 : vector<8x128xf32>
    %cst_58 = arith.constant 1.000000e+00 : f32
    %272 = vector.broadcast %cst_58 : f32 to vector<8x128xf32>
    %273 = arith.subf %272, %266 : vector<8x128xf32>
    %274 = arith.mulf %273, %271 : vector<8x128xf32>
    %275 = arith.mulf %266, %245 : vector<8x128xf32>
    %276 = arith.addf %274, %275 : vector<8x128xf32>
    %277 = arith.truncf %276 : vector<8x128xf32> to vector<8x128xbf16>
    %c56 = arith.constant 56 : index
    %c0_59 = arith.constant 0 : index
    %278 = vector.load %arg11[%c56, %c0_59] : memref<64x128xbf16, #tpu.memory_space<vmem>>, vector<8x128xbf16>
    tpu.vector_store %arg11[%c56, %c0_59], %277 {strides = array<i32>} : memref<64x128xbf16, #tpu.memory_space<vmem>>, vector<8x128xbf16>,
    %c0_60 = arith.constant 0 : index
    %c0_61 = arith.constant 0 : index
    %279 = vector.load %arg5[%c0_60, %c0_61] : memref<256x384xbf16, #tpu.memory_space<vmem>>, vector<128x384xbf16>
    %c128 = arith.constant 128 : index
    %c0_62 = arith.constant 0 : index
    %280 = vector.load %arg5[%c128, %c0_62] : memref<256x384xbf16, #tpu.memory_space<vmem>>, vector<128x384xbf16>
    %c0_63 = arith.constant 0 : index
    %c0_64 = arith.constant 0 : index
    %281 = vector.load %arg11[%c0_63, %c0_64] : memref<64x128xbf16, #tpu.memory_space<vmem>>, vector<64x128xbf16>
    %cst_65 = arith.constant dense<0.000000e+00> : vector<64x384xf32>
    %282 = tpu.matmul %281, %279, %cst_65 {dimension_numbers = #tpu.dot_dimension_numbers<[1], [0], [0], [1], [0, 0, 1, 1], [], []>} : vector<64x128xbf16>, vector<128x384xbf16>, vector<64x384xf32> -> vector<64x384xf32>
    %c2 = arith.constant 2 : index
    %c0_66 = arith.constant 0 : index
    %283 = vector.load %arg7[%c2, %c0_66] : memref<6x384xf32, #tpu.memory_space<vmem>>, vector<1x384xf32>
    %284 = vector.shape_cast %283 : vector<1x384xf32> to vector<1x384xf32>
    %285 = vector.broadcast %284 : vector<1x384xf32> to vector<64x384xf32>
    %286 = arith.addf %282, %285 : vector<64x384xf32>
    %c0_67 = arith.constant 0 : index
    %c0_68 = arith.constant 0 : index
    %287 = vector.load %arg12[%c0_67, %c0_68] : memref<64x384xf32, #tpu.memory_space<vmem>>, vector<64x384xf32>
    tpu.vector_store %arg12[%c0_67, %c0_68], %286 {strides = array<i32>} : memref<64x384xf32, #tpu.memory_space<vmem>>, vector<64x384xf32>,
    %c3 = arith.constant 3 : index
    %c0_69 = arith.constant 0 : index
    %288 = vector.load %arg7[%c3, %c0_69] : memref<6x384xf32, #tpu.memory_space<vmem>>, vector<1x384xf32>
    %289 = vector.shape_cast %288 : vector<1x384xf32> to vector<1x384xf32>
    %290 = vector.broadcast %289 : vector<1x384xf32> to vector<8x384xf32>
    %cst_70 = arith.constant 0.000000e+00 : f32
    %291 = vector.broadcast %cst_70 : f32 to vector<8x128xf32>
    %c0_71 = arith.constant 0 : index
    %c0_72 = arith.constant 0 : index
    %292 = vector.load %arg12[%c0_71, %c0_72] : memref<64x384xf32, #tpu.memory_space<vmem>>, vector<8x384xf32>
    %293 = arith.truncf %291 : vector<8x128xf32> to vector<8x128xbf16>
    %cst_73 = arith.constant dense<0.000000e+00> : vector<8x384xf32>
    %294 = tpu.matmul %293, %280, %cst_73 {dimension_numbers = #tpu.dot_dimension_numbers<[1], [0], [0], [1], [0, 0, 1, 1], [], []>} : vector<8x128xbf16>, vector<128x384xbf16>, vector<8x384xf32> -> vector<8x384xf32>
    %295 = arith.addf %294, %290 : vector<8x384xf32>
    %296 = vector.extract_strided_slice %292 {offsets = [0, 0], sizes = [8, 128], strides = [1, 1]} : vector<8x384xf32> to vector<8x128xf32>
    %297 = vector.extract_strided_slice %295 {offsets = [0, 0], sizes = [8, 128], strides = [1, 1]} : vector<8x384xf32> to vector<8x128xf32>
    %298 = arith.addf %296, %297 : vector<8x128xf32>
    %299 = arith.negf %298 : vector<8x128xf32>
    %300 = math.exp %299 : vector<8x128xf32>
    %cst_74 = arith.constant 1.000000e+00 : f32
    %301 = vector.broadcast %cst_74 : f32 to vector<8x128xf32>
    %302 = arith.addf %301, %300 : vector<8x128xf32>
    %303 = arith.divf %301, %302 : vector<8x128xf32>
    %304 = vector.extract_strided_slice %292 {offsets = [0, 128], sizes = [8, 128], strides = [1, 1]} : vector<8x384xf32> to vector<8x128xf32>
    %305 = vector.extract_strided_slice %295 {offsets = [0, 128], sizes = [8, 128], strides = [1, 1]} : vector<8x384xf32> to vector<8x128xf32>
    %306 = arith.addf %304, %305 : vector<8x128xf32>
    %307 = arith.negf %306 : vector<8x128xf32>
    %308 = math.exp %307 : vector<8x128xf32>
    %cst_75 = arith.constant 1.000000e+00 : f32
    %309 = vector.broadcast %cst_75 : f32 to vector<8x128xf32>
    %310 = arith.addf %309, %308 : vector<8x128xf32>
    %311 = arith.divf %309, %310 : vector<8x128xf32>
    %312 = vector.extract_strided_slice %292 {offsets = [0, 256], sizes = [8, 128], strides = [1, 1]} : vector<8x384xf32> to vector<8x128xf32>
    %313 = vector.extract_strided_slice %295 {offsets = [0, 256], sizes = [8, 128], strides = [1, 1]} : vector<8x384xf32> to vector<8x128xf32>
    %314 = arith.mulf %303, %313 : vector<8x128xf32>
    %315 = arith.addf %312, %314 : vector<8x128xf32>
    %316 = math.tanh %315 : vector<8x128xf32>
    %cst_76 = arith.constant 1.000000e+00 : f32
    %317 = vector.broadcast %cst_76 : f32 to vector<8x128xf32>
    %318 = arith.subf %317, %311 : vector<8x128xf32>
    %319 = arith.mulf %318, %316 : vector<8x128xf32>
    %320 = arith.mulf %311, %291 : vector<8x128xf32>
    %321 = arith.addf %319, %320 : vector<8x128xf32>
    %322 = arith.truncf %321 : vector<8x128xf32> to vector<8x128xbf16>
    %c0_77 = arith.constant 0 : index
    %c0_78 = arith.constant 0 : index
    %323 = vector.load %arg11[%c0_77, %c0_78] : memref<64x128xbf16, #tpu.memory_space<vmem>>, vector<8x128xbf16>
    tpu.vector_store %arg11[%c0_77, %c0_78], %322 {strides = array<i32>} : memref<64x128xbf16, #tpu.memory_space<vmem>>, vector<8x128xbf16>,
    %c8_79 = arith.constant 8 : index
    %c0_80 = arith.constant 0 : index
    %324 = vector.load %arg12[%c8_79, %c0_80] : memref<64x384xf32, #tpu.memory_space<vmem>>, vector<8x384xf32>
    %325 = arith.truncf %321 : vector<8x128xf32> to vector<8x128xbf16>
    %cst_81 = arith.constant dense<0.000000e+00> : vector<8x384xf32>
    %326 = tpu.matmul %325, %280, %cst_81 {dimension_numbers = #tpu.dot_dimension_numbers<[1], [0], [0], [1], [0, 0, 1, 1], [], []>} : vector<8x128xbf16>, vector<128x384xbf16>, vector<8x384xf32> -> vector<8x384xf32>
    %327 = arith.addf %326, %290 : vector<8x384xf32>
    %328 = vector.extract_strided_slice %324 {offsets = [0, 0], sizes = [8, 128], strides = [1, 1]} : vector<8x384xf32> to vector<8x128xf32>
    %329 = vector.extract_strided_slice %327 {offsets = [0, 0], sizes = [8, 128], strides = [1, 1]} : vector<8x384xf32> to vector<8x128xf32>
    %330 = arith.addf %328, %329 : vector<8x128xf32>
    %331 = arith.negf %330 : vector<8x128xf32>
    %332 = math.exp %331 : vector<8x128xf32>
    %cst_82 = arith.constant 1.000000e+00 : f32
    %333 = vector.broadcast %cst_82 : f32 to vector<8x128xf32>
    %334 = arith.addf %333, %332 : vector<8x128xf32>
    %335 = arith.divf %333, %334 : vector<8x128xf32>
    %336 = vector.extract_strided_slice %324 {offsets = [0, 128], sizes = [8, 128], strides = [1, 1]} : vector<8x384xf32> to vector<8x128xf32>
    %337 = vector.extract_strided_slice %327 {offsets = [0, 128], sizes = [8, 128], strides = [1, 1]} : vector<8x384xf32> to vector<8x128xf32>
    %338 = arith.addf %336, %337 : vector<8x128xf32>
    %339 = arith.negf %338 : vector<8x128xf32>
    %340 = math.exp %339 : vector<8x128xf32>
    %cst_83 = arith.constant 1.000000e+00 : f32
    %341 = vector.broadcast %cst_83 : f32 to vector<8x128xf32>
    %342 = arith.addf %341, %340 : vector<8x128xf32>
    %343 = arith.divf %341, %342 : vector<8x128xf32>
    %344 = vector.extract_strided_slice %324 {offsets = [0, 256], sizes = [8, 128], strides = [1, 1]} : vector<8x384xf32> to vector<8x128xf32>
    %345 = vector.extract_strided_slice %327 {offsets = [0, 256], sizes = [8, 128], strides = [1, 1]} : vector<8x384xf32> to vector<8x128xf32>
    %346 = arith.mulf %335, %345 : vector<8x128xf32>
    %347 = arith.addf %344, %346 : vector<8x128xf32>
    %348 = math.tanh %347 : vector<8x128xf32>
    %cst_84 = arith.constant 1.000000e+00 : f32
    %349 = vector.broadcast %cst_84 : f32 to vector<8x128xf32>
    %350 = arith.subf %349, %343 : vector<8x128xf32>
    %351 = arith.mulf %350, %348 : vector<8x128xf32>
    %352 = arith.mulf %343, %321 : vector<8x128xf32>
    %353 = arith.addf %351, %352 : vector<8x128xf32>
    %354 = arith.truncf %353 : vector<8x128xf32> to vector<8x128xbf16>
    %c8_85 = arith.constant 8 : index
    %c0_86 = arith.constant 0 : index
    %355 = vector.load %arg11[%c8_85, %c0_86] : memref<64x128xbf16, #tpu.memory_space<vmem>>, vector<8x128xbf16>
    tpu.vector_store %arg11[%c8_85, %c0_86], %354 {strides = array<i32>} : memref<64x128xbf16, #tpu.memory_space<vmem>>, vector<8x128xbf16>,
    %c16_87 = arith.constant 16 : index
    %c0_88 = arith.constant 0 : index
    %356 = vector.load %arg12[%c16_87, %c0_88] : memref<64x384xf32, #tpu.memory_space<vmem>>, vector<8x384xf32>
    %357 = arith.truncf %353 : vector<8x128xf32> to vector<8x128xbf16>
    %cst_89 = arith.constant dense<0.000000e+00> : vector<8x384xf32>
    %358 = tpu.matmul %357, %280, %cst_89 {dimension_numbers = #tpu.dot_dimension_numbers<[1], [0], [0], [1], [0, 0, 1, 1], [], []>} : vector<8x128xbf16>, vector<128x384xbf16>, vector<8x384xf32> -> vector<8x384xf32>
    %359 = arith.addf %358, %290 : vector<8x384xf32>
    %360 = vector.extract_strided_slice %356 {offsets = [0, 0], sizes = [8, 128], strides = [1, 1]} : vector<8x384xf32> to vector<8x128xf32>
    %361 = vector.extract_strided_slice %359 {offsets = [0, 0], sizes = [8, 128], strides = [1, 1]} : vector<8x384xf32> to vector<8x128xf32>
    %362 = arith.addf %360, %361 : vector<8x128xf32>
    %363 = arith.negf %362 : vector<8x128xf32>
    %364 = math.exp %363 : vector<8x128xf32>
    %cst_90 = arith.constant 1.000000e+00 : f32
    %365 = vector.broadcast %cst_90 : f32 to vector<8x128xf32>
    %366 = arith.addf %365, %364 : vector<8x128xf32>
    %367 = arith.divf %365, %366 : vector<8x128xf32>
    %368 = vector.extract_strided_slice %356 {offsets = [0, 128], sizes = [8, 128], strides = [1, 1]} : vector<8x384xf32> to vector<8x128xf32>
    %369 = vector.extract_strided_slice %359 {offsets = [0, 128], sizes = [8, 128], strides = [1, 1]} : vector<8x384xf32> to vector<8x128xf32>
    %370 = arith.addf %368, %369 : vector<8x128xf32>
    %371 = arith.negf %370 : vector<8x128xf32>
    %372 = math.exp %371 : vector<8x128xf32>
    %cst_91 = arith.constant 1.000000e+00 : f32
    %373 = vector.broadcast %cst_91 : f32 to vector<8x128xf32>
    %374 = arith.addf %373, %372 : vector<8x128xf32>
    %375 = arith.divf %373, %374 : vector<8x128xf32>
    %376 = vector.extract_strided_slice %356 {offsets = [0, 256], sizes = [8, 128], strides = [1, 1]} : vector<8x384xf32> to vector<8x128xf32>
    %377 = vector.extract_strided_slice %359 {offsets = [0, 256], sizes = [8, 128], strides = [1, 1]} : vector<8x384xf32> to vector<8x128xf32>
    %378 = arith.mulf %367, %377 : vector<8x128xf32>
    %379 = arith.addf %376, %378 : vector<8x128xf32>
    %380 = math.tanh %379 : vector<8x128xf32>
    %cst_92 = arith.constant 1.000000e+00 : f32
    %381 = vector.broadcast %cst_92 : f32 to vector<8x128xf32>
    %382 = arith.subf %381, %375 : vector<8x128xf32>
    %383 = arith.mulf %382, %380 : vector<8x128xf32>
    %384 = arith.mulf %375, %353 : vector<8x128xf32>
    %385 = arith.addf %383, %384 : vector<8x128xf32>
    %386 = arith.truncf %385 : vector<8x128xf32> to vector<8x128xbf16>
    %c16_93 = arith.constant 16 : index
    %c0_94 = arith.constant 0 : index
    %387 = vector.load %arg11[%c16_93, %c0_94] : memref<64x128xbf16, #tpu.memory_space<vmem>>, vector<8x128xbf16>
    tpu.vector_store %arg11[%c16_93, %c0_94], %386 {strides = array<i32>} : memref<64x128xbf16, #tpu.memory_space<vmem>>, vector<8x128xbf16>,
    %c24_95 = arith.constant 24 : index
    %c0_96 = arith.constant 0 : index
    %388 = vector.load %arg12[%c24_95, %c0_96] : memref<64x384xf32, #tpu.memory_space<vmem>>, vector<8x384xf32>
    %389 = arith.truncf %385 : vector<8x128xf32> to vector<8x128xbf16>
    %cst_97 = arith.constant dense<0.000000e+00> : vector<8x384xf32>
    %390 = tpu.matmul %389, %280, %cst_97 {dimension_numbers = #tpu.dot_dimension_numbers<[1], [0], [0], [1], [0, 0, 1, 1], [], []>} : vector<8x128xbf16>, vector<128x384xbf16>, vector<8x384xf32> -> vector<8x384xf32>
    %391 = arith.addf %390, %290 : vector<8x384xf32>
    %392 = vector.extract_strided_slice %388 {offsets = [0, 0], sizes = [8, 128], strides = [1, 1]} : vector<8x384xf32> to vector<8x128xf32>
    %393 = vector.extract_strided_slice %391 {offsets = [0, 0], sizes = [8, 128], strides = [1, 1]} : vector<8x384xf32> to vector<8x128xf32>
    %394 = arith.addf %392, %393 : vector<8x128xf32>
    %395 = arith.negf %394 : vector<8x128xf32>
    %396 = math.exp %395 : vector<8x128xf32>
    %cst_98 = arith.constant 1.000000e+00 : f32
    %397 = vector.broadcast %cst_98 : f32 to vector<8x128xf32>
    %398 = arith.addf %397, %396 : vector<8x128xf32>
    %399 = arith.divf %397, %398 : vector<8x128xf32>
    %400 = vector.extract_strided_slice %388 {offsets = [0, 128], sizes = [8, 128], strides = [1, 1]} : vector<8x384xf32> to vector<8x128xf32>
    %401 = vector.extract_strided_slice %391 {offsets = [0, 128], sizes = [8, 128], strides = [1, 1]} : vector<8x384xf32> to vector<8x128xf32>
    %402 = arith.addf %400, %401 : vector<8x128xf32>
    %403 = arith.negf %402 : vector<8x128xf32>
    %404 = math.exp %403 : vector<8x128xf32>
    %cst_99 = arith.constant 1.000000e+00 : f32
    %405 = vector.broadcast %cst_99 : f32 to vector<8x128xf32>
    %406 = arith.addf %405, %404 : vector<8x128xf32>
    %407 = arith.divf %405, %406 : vector<8x128xf32>
    %408 = vector.extract_strided_slice %388 {offsets = [0, 256], sizes = [8, 128], strides = [1, 1]} : vector<8x384xf32> to vector<8x128xf32>
    %409 = vector.extract_strided_slice %391 {offsets = [0, 256], sizes = [8, 128], strides = [1, 1]} : vector<8x384xf32> to vector<8x128xf32>
    %410 = arith.mulf %399, %409 : vector<8x128xf32>
    %411 = arith.addf %408, %410 : vector<8x128xf32>
    %412 = math.tanh %411 : vector<8x128xf32>
    %cst_100 = arith.constant 1.000000e+00 : f32
    %413 = vector.broadcast %cst_100 : f32 to vector<8x128xf32>
    %414 = arith.subf %413, %407 : vector<8x128xf32>
    %415 = arith.mulf %414, %412 : vector<8x128xf32>
    %416 = arith.mulf %407, %385 : vector<8x128xf32>
    %417 = arith.addf %415, %416 : vector<8x128xf32>
    %418 = arith.truncf %417 : vector<8x128xf32> to vector<8x128xbf16>
    %c24_101 = arith.constant 24 : index
    %c0_102 = arith.constant 0 : index
    %419 = vector.load %arg11[%c24_101, %c0_102] : memref<64x128xbf16, #tpu.memory_space<vmem>>, vector<8x128xbf16>
    tpu.vector_store %arg11[%c24_101, %c0_102], %418 {strides = array<i32>} : memref<64x128xbf16, #tpu.memory_space<vmem>>, vector<8x128xbf16>,
    %c32_103 = arith.constant 32 : index
    %c0_104 = arith.constant 0 : index
    %420 = vector.load %arg12[%c32_103, %c0_104] : memref<64x384xf32, #tpu.memory_space<vmem>>, vector<8x384xf32>
    %421 = arith.truncf %417 : vector<8x128xf32> to vector<8x128xbf16>
    %cst_105 = arith.constant dense<0.000000e+00> : vector<8x384xf32>
    %422 = tpu.matmul %421, %280, %cst_105 {dimension_numbers = #tpu.dot_dimension_numbers<[1], [0], [0], [1], [0, 0, 1, 1], [], []>} : vector<8x128xbf16>, vector<128x384xbf16>, vector<8x384xf32> -> vector<8x384xf32>
    %423 = arith.addf %422, %290 : vector<8x384xf32>
    %424 = vector.extract_strided_slice %420 {offsets = [0, 0], sizes = [8, 128], strides = [1, 1]} : vector<8x384xf32> to vector<8x128xf32>
    %425 = vector.extract_strided_slice %423 {offsets = [0, 0], sizes = [8, 128], strides = [1, 1]} : vector<8x384xf32> to vector<8x128xf32>
    %426 = arith.addf %424, %425 : vector<8x128xf32>
    %427 = arith.negf %426 : vector<8x128xf32>
    %428 = math.exp %427 : vector<8x128xf32>
    %cst_106 = arith.constant 1.000000e+00 : f32
    %429 = vector.broadcast %cst_106 : f32 to vector<8x128xf32>
    %430 = arith.addf %429, %428 : vector<8x128xf32>
    %431 = arith.divf %429, %430 : vector<8x128xf32>
    %432 = vector.extract_strided_slice %420 {offsets = [0, 128], sizes = [8, 128], strides = [1, 1]} : vector<8x384xf32> to vector<8x128xf32>
    %433 = vector.extract_strided_slice %423 {offsets = [0, 128], sizes = [8, 128], strides = [1, 1]} : vector<8x384xf32> to vector<8x128xf32>
    %434 = arith.addf %432, %433 : vector<8x128xf32>
    %435 = arith.negf %434 : vector<8x128xf32>
    %436 = math.exp %435 : vector<8x128xf32>
    %cst_107 = arith.constant 1.000000e+00 : f32
    %437 = vector.broadcast %cst_107 : f32 to vector<8x128xf32>
    %438 = arith.addf %437, %436 : vector<8x128xf32>
    %439 = arith.divf %437, %438 : vector<8x128xf32>
    %440 = vector.extract_strided_slice %420 {offsets = [0, 256], sizes = [8, 128], strides = [1, 1]} : vector<8x384xf32> to vector<8x128xf32>
    %441 = vector.extract_strided_slice %423 {offsets = [0, 256], sizes = [8, 128], strides = [1, 1]} : vector<8x384xf32> to vector<8x128xf32>
    %442 = arith.mulf %431, %441 : vector<8x128xf32>
    %443 = arith.addf %440, %442 : vector<8x128xf32>
    %444 = math.tanh %443 : vector<8x128xf32>
    %cst_108 = arith.constant 1.000000e+00 : f32
    %445 = vector.broadcast %cst_108 : f32 to vector<8x128xf32>
    %446 = arith.subf %445, %439 : vector<8x128xf32>
    %447 = arith.mulf %446, %444 : vector<8x128xf32>
    %448 = arith.mulf %439, %417 : vector<8x128xf32>
    %449 = arith.addf %447, %448 : vector<8x128xf32>
    %450 = arith.truncf %449 : vector<8x128xf32> to vector<8x128xbf16>
    %c32_109 = arith.constant 32 : index
    %c0_110 = arith.constant 0 : index
    %451 = vector.load %arg11[%c32_109, %c0_110] : memref<64x128xbf16, #tpu.memory_space<vmem>>, vector<8x128xbf16>
    tpu.vector_store %arg11[%c32_109, %c0_110], %450 {strides = array<i32>} : memref<64x128xbf16, #tpu.memory_space<vmem>>, vector<8x128xbf16>,
    %c40_111 = arith.constant 40 : index
    %c0_112 = arith.constant 0 : index
    %452 = vector.load %arg12[%c40_111, %c0_112] : memref<64x384xf32, #tpu.memory_space<vmem>>, vector<8x384xf32>
    %453 = arith.truncf %449 : vector<8x128xf32> to vector<8x128xbf16>
    %cst_113 = arith.constant dense<0.000000e+00> : vector<8x384xf32>
    %454 = tpu.matmul %453, %280, %cst_113 {dimension_numbers = #tpu.dot_dimension_numbers<[1], [0], [0], [1], [0, 0, 1, 1], [], []>} : vector<8x128xbf16>, vector<128x384xbf16>, vector<8x384xf32> -> vector<8x384xf32>
    %455 = arith.addf %454, %290 : vector<8x384xf32>
    %456 = vector.extract_strided_slice %452 {offsets = [0, 0], sizes = [8, 128], strides = [1, 1]} : vector<8x384xf32> to vector<8x128xf32>
    %457 = vector.extract_strided_slice %455 {offsets = [0, 0], sizes = [8, 128], strides = [1, 1]} : vector<8x384xf32> to vector<8x128xf32>
    %458 = arith.addf %456, %457 : vector<8x128xf32>
    %459 = arith.negf %458 : vector<8x128xf32>
    %460 = math.exp %459 : vector<8x128xf32>
    %cst_114 = arith.constant 1.000000e+00 : f32
    %461 = vector.broadcast %cst_114 : f32 to vector<8x128xf32>
    %462 = arith.addf %461, %460 : vector<8x128xf32>
    %463 = arith.divf %461, %462 : vector<8x128xf32>
    %464 = vector.extract_strided_slice %452 {offsets = [0, 128], sizes = [8, 128], strides = [1, 1]} : vector<8x384xf32> to vector<8x128xf32>
    %465 = vector.extract_strided_slice %455 {offsets = [0, 128], sizes = [8, 128], strides = [1, 1]} : vector<8x384xf32> to vector<8x128xf32>
    %466 = arith.addf %464, %465 : vector<8x128xf32>
    %467 = arith.negf %466 : vector<8x128xf32>
    %468 = math.exp %467 : vector<8x128xf32>
    %cst_115 = arith.constant 1.000000e+00 : f32
    %469 = vector.broadcast %cst_115 : f32 to vector<8x128xf32>
    %470 = arith.addf %469, %468 : vector<8x128xf32>
    %471 = arith.divf %469, %470 : vector<8x128xf32>
    %472 = vector.extract_strided_slice %452 {offsets = [0, 256], sizes = [8, 128], strides = [1, 1]} : vector<8x384xf32> to vector<8x128xf32>
    %473 = vector.extract_strided_slice %455 {offsets = [0, 256], sizes = [8, 128], strides = [1, 1]} : vector<8x384xf32> to vector<8x128xf32>
    %474 = arith.mulf %463, %473 : vector<8x128xf32>
    %475 = arith.addf %472, %474 : vector<8x128xf32>
    %476 = math.tanh %475 : vector<8x128xf32>
    %cst_116 = arith.constant 1.000000e+00 : f32
    %477 = vector.broadcast %cst_116 : f32 to vector<8x128xf32>
    %478 = arith.subf %477, %471 : vector<8x128xf32>
    %479 = arith.mulf %478, %476 : vector<8x128xf32>
    %480 = arith.mulf %471, %449 : vector<8x128xf32>
    %481 = arith.addf %479, %480 : vector<8x128xf32>
    %482 = arith.truncf %481 : vector<8x128xf32> to vector<8x128xbf16>
    %c40_117 = arith.constant 40 : index
    %c0_118 = arith.constant 0 : index
    %483 = vector.load %arg11[%c40_117, %c0_118] : memref<64x128xbf16, #tpu.memory_space<vmem>>, vector<8x128xbf16>
    tpu.vector_store %arg11[%c40_117, %c0_118], %482 {strides = array<i32>} : memref<64x128xbf16, #tpu.memory_space<vmem>>, vector<8x128xbf16>,
    %c48_119 = arith.constant 48 : index
    %c0_120 = arith.constant 0 : index
    %484 = vector.load %arg12[%c48_119, %c0_120] : memref<64x384xf32, #tpu.memory_space<vmem>>, vector<8x384xf32>
    %485 = arith.truncf %481 : vector<8x128xf32> to vector<8x128xbf16>
    %cst_121 = arith.constant dense<0.000000e+00> : vector<8x384xf32>
    %486 = tpu.matmul %485, %280, %cst_121 {dimension_numbers = #tpu.dot_dimension_numbers<[1], [0], [0], [1], [0, 0, 1, 1], [], []>} : vector<8x128xbf16>, vector<128x384xbf16>, vector<8x384xf32> -> vector<8x384xf32>
    %487 = arith.addf %486, %290 : vector<8x384xf32>
    %488 = vector.extract_strided_slice %484 {offsets = [0, 0], sizes = [8, 128], strides = [1, 1]} : vector<8x384xf32> to vector<8x128xf32>
    %489 = vector.extract_strided_slice %487 {offsets = [0, 0], sizes = [8, 128], strides = [1, 1]} : vector<8x384xf32> to vector<8x128xf32>
    %490 = arith.addf %488, %489 : vector<8x128xf32>
    %491 = arith.negf %490 : vector<8x128xf32>
    %492 = math.exp %491 : vector<8x128xf32>
    %cst_122 = arith.constant 1.000000e+00 : f32
    %493 = vector.broadcast %cst_122 : f32 to vector<8x128xf32>
    %494 = arith.addf %493, %492 : vector<8x128xf32>
    %495 = arith.divf %493, %494 : vector<8x128xf32>
    %496 = vector.extract_strided_slice %484 {offsets = [0, 128], sizes = [8, 128], strides = [1, 1]} : vector<8x384xf32> to vector<8x128xf32>
    %497 = vector.extract_strided_slice %487 {offsets = [0, 128], sizes = [8, 128], strides = [1, 1]} : vector<8x384xf32> to vector<8x128xf32>
    %498 = arith.addf %496, %497 : vector<8x128xf32>
    %499 = arith.negf %498 : vector<8x128xf32>
    %500 = math.exp %499 : vector<8x128xf32>
    %cst_123 = arith.constant 1.000000e+00 : f32
    %501 = vector.broadcast %cst_123 : f32 to vector<8x128xf32>
    %502 = arith.addf %501, %500 : vector<8x128xf32>
    %503 = arith.divf %501, %502 : vector<8x128xf32>
    %504 = vector.extract_strided_slice %484 {offsets = [0, 256], sizes = [8, 128], strides = [1, 1]} : vector<8x384xf32> to vector<8x128xf32>
    %505 = vector.extract_strided_slice %487 {offsets = [0, 256], sizes = [8, 128], strides = [1, 1]} : vector<8x384xf32> to vector<8x128xf32>
    %506 = arith.mulf %495, %505 : vector<8x128xf32>
    %507 = arith.addf %504, %506 : vector<8x128xf32>
    %508 = math.tanh %507 : vector<8x128xf32>
    %cst_124 = arith.constant 1.000000e+00 : f32
    %509 = vector.broadcast %cst_124 : f32 to vector<8x128xf32>
    %510 = arith.subf %509, %503 : vector<8x128xf32>
    %511 = arith.mulf %510, %508 : vector<8x128xf32>
    %512 = arith.mulf %503, %481 : vector<8x128xf32>
    %513 = arith.addf %511, %512 : vector<8x128xf32>
    %514 = arith.truncf %513 : vector<8x128xf32> to vector<8x128xbf16>
    %c48_125 = arith.constant 48 : index
    %c0_126 = arith.constant 0 : index
    %515 = vector.load %arg11[%c48_125, %c0_126] : memref<64x128xbf16, #tpu.memory_space<vmem>>, vector<8x128xbf16>
    tpu.vector_store %arg11[%c48_125, %c0_126], %514 {strides = array<i32>} : memref<64x128xbf16, #tpu.memory_space<vmem>>, vector<8x128xbf16>,
    %c56_127 = arith.constant 56 : index
    %c0_128 = arith.constant 0 : index
    %516 = vector.load %arg12[%c56_127, %c0_128] : memref<64x384xf32, #tpu.memory_space<vmem>>, vector<8x384xf32>
    %517 = arith.truncf %513 : vector<8x128xf32> to vector<8x128xbf16>
    %cst_129 = arith.constant dense<0.000000e+00> : vector<8x384xf32>
    %518 = tpu.matmul %517, %280, %cst_129 {dimension_numbers = #tpu.dot_dimension_numbers<[1], [0], [0], [1], [0, 0, 1, 1], [], []>} : vector<8x128xbf16>, vector<128x384xbf16>, vector<8x384xf32> -> vector<8x384xf32>
    %519 = arith.addf %518, %290 : vector<8x384xf32>
    %520 = vector.extract_strided_slice %516 {offsets = [0, 0], sizes = [8, 128], strides = [1, 1]} : vector<8x384xf32> to vector<8x128xf32>
    %521 = vector.extract_strided_slice %519 {offsets = [0, 0], sizes = [8, 128], strides = [1, 1]} : vector<8x384xf32> to vector<8x128xf32>
    %522 = arith.addf %520, %521 : vector<8x128xf32>
    %523 = arith.negf %522 : vector<8x128xf32>
    %524 = math.exp %523 : vector<8x128xf32>
    %cst_130 = arith.constant 1.000000e+00 : f32
    %525 = vector.broadcast %cst_130 : f32 to vector<8x128xf32>
    %526 = arith.addf %525, %524 : vector<8x128xf32>
    %527 = arith.divf %525, %526 : vector<8x128xf32>
    %528 = vector.extract_strided_slice %516 {offsets = [0, 128], sizes = [8, 128], strides = [1, 1]} : vector<8x384xf32> to vector<8x128xf32>
    %529 = vector.extract_strided_slice %519 {offsets = [0, 128], sizes = [8, 128], strides = [1, 1]} : vector<8x384xf32> to vector<8x128xf32>
    %530 = arith.addf %528, %529 : vector<8x128xf32>
    %531 = arith.negf %530 : vector<8x128xf32>
    %532 = math.exp %531 : vector<8x128xf32>
    %cst_131 = arith.constant 1.000000e+00 : f32
    %533 = vector.broadcast %cst_131 : f32 to vector<8x128xf32>
    %534 = arith.addf %533, %532 : vector<8x128xf32>
    %535 = arith.divf %533, %534 : vector<8x128xf32>
    %536 = vector.extract_strided_slice %516 {offsets = [0, 256], sizes = [8, 128], strides = [1, 1]} : vector<8x384xf32> to vector<8x128xf32>
    %537 = vector.extract_strided_slice %519 {offsets = [0, 256], sizes = [8, 128], strides = [1, 1]} : vector<8x384xf32> to vector<8x128xf32>
    %538 = arith.mulf %527, %537 : vector<8x128xf32>
    %539 = arith.addf %536, %538 : vector<8x128xf32>
    %540 = math.tanh %539 : vector<8x128xf32>
    %cst_132 = arith.constant 1.000000e+00 : f32
    %541 = vector.broadcast %cst_132 : f32 to vector<8x128xf32>
    %542 = arith.subf %541, %535 : vector<8x128xf32>
    %543 = arith.mulf %542, %540 : vector<8x128xf32>
    %544 = arith.mulf %535, %513 : vector<8x128xf32>
    %545 = arith.addf %543, %544 : vector<8x128xf32>
    %546 = arith.truncf %545 : vector<8x128xf32> to vector<8x128xbf16>
    %c56_133 = arith.constant 56 : index
    %c0_134 = arith.constant 0 : index
    %547 = vector.load %arg11[%c56_133, %c0_134] : memref<64x128xbf16, #tpu.memory_space<vmem>>, vector<8x128xbf16>
    tpu.vector_store %arg11[%c56_133, %c0_134], %546 {strides = array<i32>} : memref<64x128xbf16, #tpu.memory_space<vmem>>, vector<8x128xbf16>,
    %c0_135 = arith.constant 0 : index
    %c0_136 = arith.constant 0 : index
    %548 = vector.load %arg6[%c0_135, %c0_136] : memref<256x384xbf16, #tpu.memory_space<vmem>>, vector<128x384xbf16>
    %c128_137 = arith.constant 128 : index
    %c0_138 = arith.constant 0 : index
    %549 = vector.load %arg6[%c128_137, %c0_138] : memref<256x384xbf16, #tpu.memory_space<vmem>>, vector<128x384xbf16>
    %c0_139 = arith.constant 0 : index
    %c0_140 = arith.constant 0 : index
    %550 = vector.load %arg11[%c0_139, %c0_140] : memref<64x128xbf16, #tpu.memory_space<vmem>>, vector<64x128xbf16>
    %cst_141 = arith.constant dense<0.000000e+00> : vector<64x384xf32>
    %551 = tpu.matmul %550, %548, %cst_141 {dimension_numbers = #tpu.dot_dimension_numbers<[1], [0], [0], [1], [0, 0, 1, 1], [], []>} : vector<64x128xbf16>, vector<128x384xbf16>, vector<64x384xf32> -> vector<64x384xf32>
    %c4 = arith.constant 4 : index
    %c0_142 = arith.constant 0 : index
    %552 = vector.load %arg7[%c4, %c0_142] : memref<6x384xf32, #tpu.memory_space<vmem>>, vector<1x384xf32>
    %553 = vector.shape_cast %552 : vector<1x384xf32> to vector<1x384xf32>
    %554 = vector.broadcast %553 : vector<1x384xf32> to vector<64x384xf32>
    %555 = arith.addf %551, %554 : vector<64x384xf32>
    %c0_143 = arith.constant 0 : index
    %c0_144 = arith.constant 0 : index
    %556 = vector.load %arg12[%c0_143, %c0_144] : memref<64x384xf32, #tpu.memory_space<vmem>>, vector<64x384xf32>
    tpu.vector_store %arg12[%c0_143, %c0_144], %555 {strides = array<i32>} : memref<64x384xf32, #tpu.memory_space<vmem>>, vector<64x384xf32>,
    %c5 = arith.constant 5 : index
    %c0_145 = arith.constant 0 : index
    %557 = vector.load %arg7[%c5, %c0_145] : memref<6x384xf32, #tpu.memory_space<vmem>>, vector<1x384xf32>
    %558 = vector.shape_cast %557 : vector<1x384xf32> to vector<1x384xf32>
    %559 = vector.broadcast %558 : vector<1x384xf32> to vector<8x384xf32>
    %cst_146 = arith.constant 0.000000e+00 : f32
    %560 = vector.broadcast %cst_146 : f32 to vector<8x128xf32>
    %c0_147 = arith.constant 0 : index
    %c0_148 = arith.constant 0 : index
    %561 = vector.load %arg12[%c0_147, %c0_148] : memref<64x384xf32, #tpu.memory_space<vmem>>, vector<8x384xf32>
    %562 = arith.truncf %560 : vector<8x128xf32> to vector<8x128xbf16>
    %cst_149 = arith.constant dense<0.000000e+00> : vector<8x384xf32>
    %563 = tpu.matmul %562, %549, %cst_149 {dimension_numbers = #tpu.dot_dimension_numbers<[1], [0], [0], [1], [0, 0, 1, 1], [], []>} : vector<8x128xbf16>, vector<128x384xbf16>, vector<8x384xf32> -> vector<8x384xf32>
    %564 = arith.addf %563, %559 : vector<8x384xf32>
    %565 = vector.extract_strided_slice %561 {offsets = [0, 0], sizes = [8, 128], strides = [1, 1]} : vector<8x384xf32> to vector<8x128xf32>
    %566 = vector.extract_strided_slice %564 {offsets = [0, 0], sizes = [8, 128], strides = [1, 1]} : vector<8x384xf32> to vector<8x128xf32>
    %567 = arith.addf %565, %566 : vector<8x128xf32>
    %568 = arith.negf %567 : vector<8x128xf32>
    %569 = math.exp %568 : vector<8x128xf32>
    %cst_150 = arith.constant 1.000000e+00 : f32
    %570 = vector.broadcast %cst_150 : f32 to vector<8x128xf32>
    %571 = arith.addf %570, %569 : vector<8x128xf32>
    %572 = arith.divf %570, %571 : vector<8x128xf32>
    %573 = vector.extract_strided_slice %561 {offsets = [0, 128], sizes = [8, 128], strides = [1, 1]} : vector<8x384xf32> to vector<8x128xf32>
    %574 = vector.extract_strided_slice %564 {offsets = [0, 128], sizes = [8, 128], strides = [1, 1]} : vector<8x384xf32> to vector<8x128xf32>
    %575 = arith.addf %573, %574 : vector<8x128xf32>
    %576 = arith.negf %575 : vector<8x128xf32>
    %577 = math.exp %576 : vector<8x128xf32>
    %cst_151 = arith.constant 1.000000e+00 : f32
    %578 = vector.broadcast %cst_151 : f32 to vector<8x128xf32>
    %579 = arith.addf %578, %577 : vector<8x128xf32>
    %580 = arith.divf %578, %579 : vector<8x128xf32>
    %581 = vector.extract_strided_slice %561 {offsets = [0, 256], sizes = [8, 128], strides = [1, 1]} : vector<8x384xf32> to vector<8x128xf32>
    %582 = vector.extract_strided_slice %564 {offsets = [0, 256], sizes = [8, 128], strides = [1, 1]} : vector<8x384xf32> to vector<8x128xf32>
    %583 = arith.mulf %572, %582 : vector<8x128xf32>
    %584 = arith.addf %581, %583 : vector<8x128xf32>
    %585 = math.tanh %584 : vector<8x128xf32>
    %cst_152 = arith.constant 1.000000e+00 : f32
    %586 = vector.broadcast %cst_152 : f32 to vector<8x128xf32>
    %587 = arith.subf %586, %580 : vector<8x128xf32>
    %588 = arith.mulf %587, %585 : vector<8x128xf32>
    %589 = arith.mulf %580, %560 : vector<8x128xf32>
    %590 = arith.addf %588, %589 : vector<8x128xf32>
    %591 = arith.truncf %590 : vector<8x128xf32> to vector<8x128xbf16>
    %c0_153 = arith.constant 0 : index
    %c0_154 = arith.constant 0 : index
    %592 = vector.load %arg11[%c0_153, %c0_154] : memref<64x128xbf16, #tpu.memory_space<vmem>>, vector<8x128xbf16>
    tpu.vector_store %arg11[%c0_153, %c0_154], %591 {strides = array<i32>} : memref<64x128xbf16, #tpu.memory_space<vmem>>, vector<8x128xbf16>,
    %c8_155 = arith.constant 8 : index
    %c0_156 = arith.constant 0 : index
    %593 = vector.load %arg12[%c8_155, %c0_156] : memref<64x384xf32, #tpu.memory_space<vmem>>, vector<8x384xf32>
    %594 = arith.truncf %590 : vector<8x128xf32> to vector<8x128xbf16>
    %cst_157 = arith.constant dense<0.000000e+00> : vector<8x384xf32>
    %595 = tpu.matmul %594, %549, %cst_157 {dimension_numbers = #tpu.dot_dimension_numbers<[1], [0], [0], [1], [0, 0, 1, 1], [], []>} : vector<8x128xbf16>, vector<128x384xbf16>, vector<8x384xf32> -> vector<8x384xf32>
    %596 = arith.addf %595, %559 : vector<8x384xf32>
    %597 = vector.extract_strided_slice %593 {offsets = [0, 0], sizes = [8, 128], strides = [1, 1]} : vector<8x384xf32> to vector<8x128xf32>
    %598 = vector.extract_strided_slice %596 {offsets = [0, 0], sizes = [8, 128], strides = [1, 1]} : vector<8x384xf32> to vector<8x128xf32>
    %599 = arith.addf %597, %598 : vector<8x128xf32>
    %600 = arith.negf %599 : vector<8x128xf32>
    %601 = math.exp %600 : vector<8x128xf32>
    %cst_158 = arith.constant 1.000000e+00 : f32
    %602 = vector.broadcast %cst_158 : f32 to vector<8x128xf32>
    %603 = arith.addf %602, %601 : vector<8x128xf32>
    %604 = arith.divf %602, %603 : vector<8x128xf32>
    %605 = vector.extract_strided_slice %593 {offsets = [0, 128], sizes = [8, 128], strides = [1, 1]} : vector<8x384xf32> to vector<8x128xf32>
    %606 = vector.extract_strided_slice %596 {offsets = [0, 128], sizes = [8, 128], strides = [1, 1]} : vector<8x384xf32> to vector<8x128xf32>
    %607 = arith.addf %605, %606 : vector<8x128xf32>
    %608 = arith.negf %607 : vector<8x128xf32>
    %609 = math.exp %608 : vector<8x128xf32>
    %cst_159 = arith.constant 1.000000e+00 : f32
    %610 = vector.broadcast %cst_159 : f32 to vector<8x128xf32>
    %611 = arith.addf %610, %609 : vector<8x128xf32>
    %612 = arith.divf %610, %611 : vector<8x128xf32>
    %613 = vector.extract_strided_slice %593 {offsets = [0, 256], sizes = [8, 128], strides = [1, 1]} : vector<8x384xf32> to vector<8x128xf32>
    %614 = vector.extract_strided_slice %596 {offsets = [0, 256], sizes = [8, 128], strides = [1, 1]} : vector<8x384xf32> to vector<8x128xf32>
    %615 = arith.mulf %604, %614 : vector<8x128xf32>
    %616 = arith.addf %613, %615 : vector<8x128xf32>
    %617 = math.tanh %616 : vector<8x128xf32>
    %cst_160 = arith.constant 1.000000e+00 : f32
    %618 = vector.broadcast %cst_160 : f32 to vector<8x128xf32>
    %619 = arith.subf %618, %612 : vector<8x128xf32>
    %620 = arith.mulf %619, %617 : vector<8x128xf32>
    %621 = arith.mulf %612, %590 : vector<8x128xf32>
    %622 = arith.addf %620, %621 : vector<8x128xf32>
    %623 = arith.truncf %622 : vector<8x128xf32> to vector<8x128xbf16>
    %c8_161 = arith.constant 8 : index
    %c0_162 = arith.constant 0 : index
    %624 = vector.load %arg11[%c8_161, %c0_162] : memref<64x128xbf16, #tpu.memory_space<vmem>>, vector<8x128xbf16>
    tpu.vector_store %arg11[%c8_161, %c0_162], %623 {strides = array<i32>} : memref<64x128xbf16, #tpu.memory_space<vmem>>, vector<8x128xbf16>,
    %c16_163 = arith.constant 16 : index
    %c0_164 = arith.constant 0 : index
    %625 = vector.load %arg12[%c16_163, %c0_164] : memref<64x384xf32, #tpu.memory_space<vmem>>, vector<8x384xf32>
    %626 = arith.truncf %622 : vector<8x128xf32> to vector<8x128xbf16>
    %cst_165 = arith.constant dense<0.000000e+00> : vector<8x384xf32>
    %627 = tpu.matmul %626, %549, %cst_165 {dimension_numbers = #tpu.dot_dimension_numbers<[1], [0], [0], [1], [0, 0, 1, 1], [], []>} : vector<8x128xbf16>, vector<128x384xbf16>, vector<8x384xf32> -> vector<8x384xf32>
    %628 = arith.addf %627, %559 : vector<8x384xf32>
    %629 = vector.extract_strided_slice %625 {offsets = [0, 0], sizes = [8, 128], strides = [1, 1]} : vector<8x384xf32> to vector<8x128xf32>
    %630 = vector.extract_strided_slice %628 {offsets = [0, 0], sizes = [8, 128], strides = [1, 1]} : vector<8x384xf32> to vector<8x128xf32>
    %631 = arith.addf %629, %630 : vector<8x128xf32>
    %632 = arith.negf %631 : vector<8x128xf32>
    %633 = math.exp %632 : vector<8x128xf32>
    %cst_166 = arith.constant 1.000000e+00 : f32
    %634 = vector.broadcast %cst_166 : f32 to vector<8x128xf32>
    %635 = arith.addf %634, %633 : vector<8x128xf32>
    %636 = arith.divf %634, %635 : vector<8x128xf32>
    %637 = vector.extract_strided_slice %625 {offsets = [0, 128], sizes = [8, 128], strides = [1, 1]} : vector<8x384xf32> to vector<8x128xf32>
    %638 = vector.extract_strided_slice %628 {offsets = [0, 128], sizes = [8, 128], strides = [1, 1]} : vector<8x384xf32> to vector<8x128xf32>
    %639 = arith.addf %637, %638 : vector<8x128xf32>
    %640 = arith.negf %639 : vector<8x128xf32>
    %641 = math.exp %640 : vector<8x128xf32>
    %cst_167 = arith.constant 1.000000e+00 : f32
    %642 = vector.broadcast %cst_167 : f32 to vector<8x128xf32>
    %643 = arith.addf %642, %641 : vector<8x128xf32>
    %644 = arith.divf %642, %643 : vector<8x128xf32>
    %645 = vector.extract_strided_slice %625 {offsets = [0, 256], sizes = [8, 128], strides = [1, 1]} : vector<8x384xf32> to vector<8x128xf32>
    %646 = vector.extract_strided_slice %628 {offsets = [0, 256], sizes = [8, 128], strides = [1, 1]} : vector<8x384xf32> to vector<8x128xf32>
    %647 = arith.mulf %636, %646 : vector<8x128xf32>
    %648 = arith.addf %645, %647 : vector<8x128xf32>
    %649 = math.tanh %648 : vector<8x128xf32>
    %cst_168 = arith.constant 1.000000e+00 : f32
    %650 = vector.broadcast %cst_168 : f32 to vector<8x128xf32>
    %651 = arith.subf %650, %644 : vector<8x128xf32>
    %652 = arith.mulf %651, %649 : vector<8x128xf32>
    %653 = arith.mulf %644, %622 : vector<8x128xf32>
    %654 = arith.addf %652, %653 : vector<8x128xf32>
    %655 = arith.truncf %654 : vector<8x128xf32> to vector<8x128xbf16>
    %c16_169 = arith.constant 16 : index
    %c0_170 = arith.constant 0 : index
    %656 = vector.load %arg11[%c16_169, %c0_170] : memref<64x128xbf16, #tpu.memory_space<vmem>>, vector<8x128xbf16>
    tpu.vector_store %arg11[%c16_169, %c0_170], %655 {strides = array<i32>} : memref<64x128xbf16, #tpu.memory_space<vmem>>, vector<8x128xbf16>,
    %c24_171 = arith.constant 24 : index
    %c0_172 = arith.constant 0 : index
    %657 = vector.load %arg12[%c24_171, %c0_172] : memref<64x384xf32, #tpu.memory_space<vmem>>, vector<8x384xf32>
    %658 = arith.truncf %654 : vector<8x128xf32> to vector<8x128xbf16>
    %cst_173 = arith.constant dense<0.000000e+00> : vector<8x384xf32>
    %659 = tpu.matmul %658, %549, %cst_173 {dimension_numbers = #tpu.dot_dimension_numbers<[1], [0], [0], [1], [0, 0, 1, 1], [], []>} : vector<8x128xbf16>, vector<128x384xbf16>, vector<8x384xf32> -> vector<8x384xf32>
    %660 = arith.addf %659, %559 : vector<8x384xf32>
    %661 = vector.extract_strided_slice %657 {offsets = [0, 0], sizes = [8, 128], strides = [1, 1]} : vector<8x384xf32> to vector<8x128xf32>
    %662 = vector.extract_strided_slice %660 {offsets = [0, 0], sizes = [8, 128], strides = [1, 1]} : vector<8x384xf32> to vector<8x128xf32>
    %663 = arith.addf %661, %662 : vector<8x128xf32>
    %664 = arith.negf %663 : vector<8x128xf32>
    %665 = math.exp %664 : vector<8x128xf32>
    %cst_174 = arith.constant 1.000000e+00 : f32
    %666 = vector.broadcast %cst_174 : f32 to vector<8x128xf32>
    %667 = arith.addf %666, %665 : vector<8x128xf32>
    %668 = arith.divf %666, %667 : vector<8x128xf32>
    %669 = vector.extract_strided_slice %657 {offsets = [0, 128], sizes = [8, 128], strides = [1, 1]} : vector<8x384xf32> to vector<8x128xf32>
    %670 = vector.extract_strided_slice %660 {offsets = [0, 128], sizes = [8, 128], strides = [1, 1]} : vector<8x384xf32> to vector<8x128xf32>
    %671 = arith.addf %669, %670 : vector<8x128xf32>
    %672 = arith.negf %671 : vector<8x128xf32>
    %673 = math.exp %672 : vector<8x128xf32>
    %cst_175 = arith.constant 1.000000e+00 : f32
    %674 = vector.broadcast %cst_175 : f32 to vector<8x128xf32>
    %675 = arith.addf %674, %673 : vector<8x128xf32>
    %676 = arith.divf %674, %675 : vector<8x128xf32>
    %677 = vector.extract_strided_slice %657 {offsets = [0, 256], sizes = [8, 128], strides = [1, 1]} : vector<8x384xf32> to vector<8x128xf32>
    %678 = vector.extract_strided_slice %660 {offsets = [0, 256], sizes = [8, 128], strides = [1, 1]} : vector<8x384xf32> to vector<8x128xf32>
    %679 = arith.mulf %668, %678 : vector<8x128xf32>
    %680 = arith.addf %677, %679 : vector<8x128xf32>
    %681 = math.tanh %680 : vector<8x128xf32>
    %cst_176 = arith.constant 1.000000e+00 : f32
    %682 = vector.broadcast %cst_176 : f32 to vector<8x128xf32>
    %683 = arith.subf %682, %676 : vector<8x128xf32>
    %684 = arith.mulf %683, %681 : vector<8x128xf32>
    %685 = arith.mulf %676, %654 : vector<8x128xf32>
    %686 = arith.addf %684, %685 : vector<8x128xf32>
    %687 = arith.truncf %686 : vector<8x128xf32> to vector<8x128xbf16>
    %c24_177 = arith.constant 24 : index
    %c0_178 = arith.constant 0 : index
    %688 = vector.load %arg11[%c24_177, %c0_178] : memref<64x128xbf16, #tpu.memory_space<vmem>>, vector<8x128xbf16>
    tpu.vector_store %arg11[%c24_177, %c0_178], %687 {strides = array<i32>} : memref<64x128xbf16, #tpu.memory_space<vmem>>, vector<8x128xbf16>,
    %c32_179 = arith.constant 32 : index
    %c0_180 = arith.constant 0 : index
    %689 = vector.load %arg12[%c32_179, %c0_180] : memref<64x384xf32, #tpu.memory_space<vmem>>, vector<8x384xf32>
    %690 = arith.truncf %686 : vector<8x128xf32> to vector<8x128xbf16>
    %cst_181 = arith.constant dense<0.000000e+00> : vector<8x384xf32>
    %691 = tpu.matmul %690, %549, %cst_181 {dimension_numbers = #tpu.dot_dimension_numbers<[1], [0], [0], [1], [0, 0, 1, 1], [], []>} : vector<8x128xbf16>, vector<128x384xbf16>, vector<8x384xf32> -> vector<8x384xf32>
    %692 = arith.addf %691, %559 : vector<8x384xf32>
    %693 = vector.extract_strided_slice %689 {offsets = [0, 0], sizes = [8, 128], strides = [1, 1]} : vector<8x384xf32> to vector<8x128xf32>
    %694 = vector.extract_strided_slice %692 {offsets = [0, 0], sizes = [8, 128], strides = [1, 1]} : vector<8x384xf32> to vector<8x128xf32>
    %695 = arith.addf %693, %694 : vector<8x128xf32>
    %696 = arith.negf %695 : vector<8x128xf32>
    %697 = math.exp %696 : vector<8x128xf32>
    %cst_182 = arith.constant 1.000000e+00 : f32
    %698 = vector.broadcast %cst_182 : f32 to vector<8x128xf32>
    %699 = arith.addf %698, %697 : vector<8x128xf32>
    %700 = arith.divf %698, %699 : vector<8x128xf32>
    %701 = vector.extract_strided_slice %689 {offsets = [0, 128], sizes = [8, 128], strides = [1, 1]} : vector<8x384xf32> to vector<8x128xf32>
    %702 = vector.extract_strided_slice %692 {offsets = [0, 128], sizes = [8, 128], strides = [1, 1]} : vector<8x384xf32> to vector<8x128xf32>
    %703 = arith.addf %701, %702 : vector<8x128xf32>
    %704 = arith.negf %703 : vector<8x128xf32>
    %705 = math.exp %704 : vector<8x128xf32>
    %cst_183 = arith.constant 1.000000e+00 : f32
    %706 = vector.broadcast %cst_183 : f32 to vector<8x128xf32>
    %707 = arith.addf %706, %705 : vector<8x128xf32>
    %708 = arith.divf %706, %707 : vector<8x128xf32>
    %709 = vector.extract_strided_slice %689 {offsets = [0, 256], sizes = [8, 128], strides = [1, 1]} : vector<8x384xf32> to vector<8x128xf32>
    %710 = vector.extract_strided_slice %692 {offsets = [0, 256], sizes = [8, 128], strides = [1, 1]} : vector<8x384xf32> to vector<8x128xf32>
    %711 = arith.mulf %700, %710 : vector<8x128xf32>
    %712 = arith.addf %709, %711 : vector<8x128xf32>
    %713 = math.tanh %712 : vector<8x128xf32>
    %cst_184 = arith.constant 1.000000e+00 : f32
    %714 = vector.broadcast %cst_184 : f32 to vector<8x128xf32>
    %715 = arith.subf %714, %708 : vector<8x128xf32>
    %716 = arith.mulf %715, %713 : vector<8x128xf32>
    %717 = arith.mulf %708, %686 : vector<8x128xf32>
    %718 = arith.addf %716, %717 : vector<8x128xf32>
    %719 = arith.truncf %718 : vector<8x128xf32> to vector<8x128xbf16>
    %c32_185 = arith.constant 32 : index
    %c0_186 = arith.constant 0 : index
    %720 = vector.load %arg11[%c32_185, %c0_186] : memref<64x128xbf16, #tpu.memory_space<vmem>>, vector<8x128xbf16>
    tpu.vector_store %arg11[%c32_185, %c0_186], %719 {strides = array<i32>} : memref<64x128xbf16, #tpu.memory_space<vmem>>, vector<8x128xbf16>,
    %c40_187 = arith.constant 40 : index
    %c0_188 = arith.constant 0 : index
    %721 = vector.load %arg12[%c40_187, %c0_188] : memref<64x384xf32, #tpu.memory_space<vmem>>, vector<8x384xf32>
    %722 = arith.truncf %718 : vector<8x128xf32> to vector<8x128xbf16>
    %cst_189 = arith.constant dense<0.000000e+00> : vector<8x384xf32>
    %723 = tpu.matmul %722, %549, %cst_189 {dimension_numbers = #tpu.dot_dimension_numbers<[1], [0], [0], [1], [0, 0, 1, 1], [], []>} : vector<8x128xbf16>, vector<128x384xbf16>, vector<8x384xf32> -> vector<8x384xf32>
    %724 = arith.addf %723, %559 : vector<8x384xf32>
    %725 = vector.extract_strided_slice %721 {offsets = [0, 0], sizes = [8, 128], strides = [1, 1]} : vector<8x384xf32> to vector<8x128xf32>
    %726 = vector.extract_strided_slice %724 {offsets = [0, 0], sizes = [8, 128], strides = [1, 1]} : vector<8x384xf32> to vector<8x128xf32>
    %727 = arith.addf %725, %726 : vector<8x128xf32>
    %728 = arith.negf %727 : vector<8x128xf32>
    %729 = math.exp %728 : vector<8x128xf32>
    %cst_190 = arith.constant 1.000000e+00 : f32
    %730 = vector.broadcast %cst_190 : f32 to vector<8x128xf32>
    %731 = arith.addf %730, %729 : vector<8x128xf32>
    %732 = arith.divf %730, %731 : vector<8x128xf32>
    %733 = vector.extract_strided_slice %721 {offsets = [0, 128], sizes = [8, 128], strides = [1, 1]} : vector<8x384xf32> to vector<8x128xf32>
    %734 = vector.extract_strided_slice %724 {offsets = [0, 128], sizes = [8, 128], strides = [1, 1]} : vector<8x384xf32> to vector<8x128xf32>
    %735 = arith.addf %733, %734 : vector<8x128xf32>
    %736 = arith.negf %735 : vector<8x128xf32>
    %737 = math.exp %736 : vector<8x128xf32>
    %cst_191 = arith.constant 1.000000e+00 : f32
    %738 = vector.broadcast %cst_191 : f32 to vector<8x128xf32>
    %739 = arith.addf %738, %737 : vector<8x128xf32>
    %740 = arith.divf %738, %739 : vector<8x128xf32>
    %741 = vector.extract_strided_slice %721 {offsets = [0, 256], sizes = [8, 128], strides = [1, 1]} : vector<8x384xf32> to vector<8x128xf32>
    %742 = vector.extract_strided_slice %724 {offsets = [0, 256], sizes = [8, 128], strides = [1, 1]} : vector<8x384xf32> to vector<8x128xf32>
    %743 = arith.mulf %732, %742 : vector<8x128xf32>
    %744 = arith.addf %741, %743 : vector<8x128xf32>
    %745 = math.tanh %744 : vector<8x128xf32>
    %cst_192 = arith.constant 1.000000e+00 : f32
    %746 = vector.broadcast %cst_192 : f32 to vector<8x128xf32>
    %747 = arith.subf %746, %740 : vector<8x128xf32>
    %748 = arith.mulf %747, %745 : vector<8x128xf32>
    %749 = arith.mulf %740, %718 : vector<8x128xf32>
    %750 = arith.addf %748, %749 : vector<8x128xf32>
    %751 = arith.truncf %750 : vector<8x128xf32> to vector<8x128xbf16>
    %c40_193 = arith.constant 40 : index
    %c0_194 = arith.constant 0 : index
    %752 = vector.load %arg11[%c40_193, %c0_194] : memref<64x128xbf16, #tpu.memory_space<vmem>>, vector<8x128xbf16>
    tpu.vector_store %arg11[%c40_193, %c0_194], %751 {strides = array<i32>} : memref<64x128xbf16, #tpu.memory_space<vmem>>, vector<8x128xbf16>,
    %c48_195 = arith.constant 48 : index
    %c0_196 = arith.constant 0 : index
    %753 = vector.load %arg12[%c48_195, %c0_196] : memref<64x384xf32, #tpu.memory_space<vmem>>, vector<8x384xf32>
    %754 = arith.truncf %750 : vector<8x128xf32> to vector<8x128xbf16>
    %cst_197 = arith.constant dense<0.000000e+00> : vector<8x384xf32>
    %755 = tpu.matmul %754, %549, %cst_197 {dimension_numbers = #tpu.dot_dimension_numbers<[1], [0], [0], [1], [0, 0, 1, 1], [], []>} : vector<8x128xbf16>, vector<128x384xbf16>, vector<8x384xf32> -> vector<8x384xf32>
    %756 = arith.addf %755, %559 : vector<8x384xf32>
    %757 = vector.extract_strided_slice %753 {offsets = [0, 0], sizes = [8, 128], strides = [1, 1]} : vector<8x384xf32> to vector<8x128xf32>
    %758 = vector.extract_strided_slice %756 {offsets = [0, 0], sizes = [8, 128], strides = [1, 1]} : vector<8x384xf32> to vector<8x128xf32>
    %759 = arith.addf %757, %758 : vector<8x128xf32>
    %760 = arith.negf %759 : vector<8x128xf32>
    %761 = math.exp %760 : vector<8x128xf32>
    %cst_198 = arith.constant 1.000000e+00 : f32
    %762 = vector.broadcast %cst_198 : f32 to vector<8x128xf32>
    %763 = arith.addf %762, %761 : vector<8x128xf32>
    %764 = arith.divf %762, %763 : vector<8x128xf32>
    %765 = vector.extract_strided_slice %753 {offsets = [0, 128], sizes = [8, 128], strides = [1, 1]} : vector<8x384xf32> to vector<8x128xf32>
    %766 = vector.extract_strided_slice %756 {offsets = [0, 128], sizes = [8, 128], strides = [1, 1]} : vector<8x384xf32> to vector<8x128xf32>
    %767 = arith.addf %765, %766 : vector<8x128xf32>
    %768 = arith.negf %767 : vector<8x128xf32>
    %769 = math.exp %768 : vector<8x128xf32>
    %cst_199 = arith.constant 1.000000e+00 : f32
    %770 = vector.broadcast %cst_199 : f32 to vector<8x128xf32>
    %771 = arith.addf %770, %769 : vector<8x128xf32>
    %772 = arith.divf %770, %771 : vector<8x128xf32>
    %773 = vector.extract_strided_slice %753 {offsets = [0, 256], sizes = [8, 128], strides = [1, 1]} : vector<8x384xf32> to vector<8x128xf32>
    %774 = vector.extract_strided_slice %756 {offsets = [0, 256], sizes = [8, 128], strides = [1, 1]} : vector<8x384xf32> to vector<8x128xf32>
    %775 = arith.mulf %764, %774 : vector<8x128xf32>
    %776 = arith.addf %773, %775 : vector<8x128xf32>
    %777 = math.tanh %776 : vector<8x128xf32>
    %cst_200 = arith.constant 1.000000e+00 : f32
    %778 = vector.broadcast %cst_200 : f32 to vector<8x128xf32>
    %779 = arith.subf %778, %772 : vector<8x128xf32>
    %780 = arith.mulf %779, %777 : vector<8x128xf32>
    %781 = arith.mulf %772, %750 : vector<8x128xf32>
    %782 = arith.addf %780, %781 : vector<8x128xf32>
    %783 = arith.truncf %782 : vector<8x128xf32> to vector<8x128xbf16>
    %c48_201 = arith.constant 48 : index
    %c0_202 = arith.constant 0 : index
    %784 = vector.load %arg11[%c48_201, %c0_202] : memref<64x128xbf16, #tpu.memory_space<vmem>>, vector<8x128xbf16>
    tpu.vector_store %arg11[%c48_201, %c0_202], %783 {strides = array<i32>} : memref<64x128xbf16, #tpu.memory_space<vmem>>, vector<8x128xbf16>,
    %c56_203 = arith.constant 56 : index
    %c0_204 = arith.constant 0 : index
    %785 = vector.load %arg12[%c56_203, %c0_204] : memref<64x384xf32, #tpu.memory_space<vmem>>, vector<8x384xf32>
    %786 = arith.truncf %782 : vector<8x128xf32> to vector<8x128xbf16>
    %cst_205 = arith.constant dense<0.000000e+00> : vector<8x384xf32>
    %787 = tpu.matmul %786, %549, %cst_205 {dimension_numbers = #tpu.dot_dimension_numbers<[1], [0], [0], [1], [0, 0, 1, 1], [], []>} : vector<8x128xbf16>, vector<128x384xbf16>, vector<8x384xf32> -> vector<8x384xf32>
    %788 = arith.addf %787, %559 : vector<8x384xf32>
    %789 = vector.extract_strided_slice %785 {offsets = [0, 0], sizes = [8, 128], strides = [1, 1]} : vector<8x384xf32> to vector<8x128xf32>
    %790 = vector.extract_strided_slice %788 {offsets = [0, 0], sizes = [8, 128], strides = [1, 1]} : vector<8x384xf32> to vector<8x128xf32>
    %791 = arith.addf %789, %790 : vector<8x128xf32>
    %792 = arith.negf %791 : vector<8x128xf32>
    %793 = math.exp %792 : vector<8x128xf32>
    %cst_206 = arith.constant 1.000000e+00 : f32
    %794 = vector.broadcast %cst_206 : f32 to vector<8x128xf32>
    %795 = arith.addf %794, %793 : vector<8x128xf32>
    %796 = arith.divf %794, %795 : vector<8x128xf32>
    %797 = vector.extract_strided_slice %785 {offsets = [0, 128], sizes = [8, 128], strides = [1, 1]} : vector<8x384xf32> to vector<8x128xf32>
    %798 = vector.extract_strided_slice %788 {offsets = [0, 128], sizes = [8, 128], strides = [1, 1]} : vector<8x384xf32> to vector<8x128xf32>
    %799 = arith.addf %797, %798 : vector<8x128xf32>
    %800 = arith.negf %799 : vector<8x128xf32>
    %801 = math.exp %800 : vector<8x128xf32>
    %cst_207 = arith.constant 1.000000e+00 : f32
    %802 = vector.broadcast %cst_207 : f32 to vector<8x128xf32>
    %803 = arith.addf %802, %801 : vector<8x128xf32>
    %804 = arith.divf %802, %803 : vector<8x128xf32>
    %805 = vector.extract_strided_slice %785 {offsets = [0, 256], sizes = [8, 128], strides = [1, 1]} : vector<8x384xf32> to vector<8x128xf32>
    %806 = vector.extract_strided_slice %788 {offsets = [0, 256], sizes = [8, 128], strides = [1, 1]} : vector<8x384xf32> to vector<8x128xf32>
    %807 = arith.mulf %796, %806 : vector<8x128xf32>
    %808 = arith.addf %805, %807 : vector<8x128xf32>
    %809 = math.tanh %808 : vector<8x128xf32>
    %cst_208 = arith.constant 1.000000e+00 : f32
    %810 = vector.broadcast %cst_208 : f32 to vector<8x128xf32>
    %811 = arith.subf %810, %804 : vector<8x128xf32>
    %812 = arith.mulf %811, %809 : vector<8x128xf32>
    %813 = arith.mulf %804, %782 : vector<8x128xf32>
    %814 = arith.addf %812, %813 : vector<8x128xf32>
    %815 = arith.truncf %814 : vector<8x128xf32> to vector<8x128xbf16>
    %c56_209 = arith.constant 56 : index
    %c0_210 = arith.constant 0 : index
    %816 = vector.load %arg11[%c56_209, %c0_210] : memref<64x128xbf16, #tpu.memory_space<vmem>>, vector<8x128xbf16>
    tpu.vector_store %arg11[%c56_209, %c0_210], %815 {strides = array<i32>} : memref<64x128xbf16, #tpu.memory_space<vmem>>, vector<8x128xbf16>,
    %c0_211 = arith.constant 0 : index
    %c0_212 = arith.constant 0 : index
    %817 = vector.load %arg11[%c0_211, %c0_212] : memref<64x128xbf16, #tpu.memory_space<vmem>>, vector<64x128xbf16>
    %c0_213 = arith.constant 0 : index
    %c0_214 = arith.constant 0 : index
    %818 = vector.load %arg8[%c0_213, %c0_214] : memref<128x128xbf16, #tpu.memory_space<vmem>>, vector<128x128xbf16>
    %cst_215 = arith.constant dense<0.000000e+00> : vector<64x128xf32>
    %819 = tpu.matmul %817, %818, %cst_215 {dimension_numbers = #tpu.dot_dimension_numbers<[1], [0], [0], [1], [0, 0, 1, 1], [], []>} : vector<64x128xbf16>, vector<128x128xbf16>, vector<64x128xf32> -> vector<64x128xf32>
    %c0_216 = arith.constant 0 : index
    %c0_217 = arith.constant 0 : index
    %820 = vector.load %arg9[%c0_216, %c0_217] : memref<1x128xf32, #tpu.memory_space<vmem>>, vector<1x128xf32>
    %821 = vector.shape_cast %820 : vector<1x128xf32> to vector<1x128xf32>
    %822 = vector.broadcast %821 : vector<1x128xf32> to vector<64x128xf32>
    %823 = arith.addf %819, %822 : vector<64x128xf32>
    %cst_218 = arith.constant dense<0xFF800000> : vector<64xf32>
    %824 = vector.multi_reduction <maximumf>, %823, %cst_218 [1] : vector<64x128xf32> to vector<64xf32>
    %825 = vector.shape_cast %824 : vector<64xf32> to vector<64x1xf32>
    %826 = vector.broadcast %825 : vector<64x1xf32> to vector<64x128xf32>
    %827 = arith.subf %823, %826 : vector<64x128xf32>
    %828 = math.exp %827 : vector<64x128xf32>
    %cst_219 = arith.constant dense<0.000000e+00> : vector<64xf32>
    %829 = vector.multi_reduction <add>, %828, %cst_219 [1] : vector<64x128xf32> to vector<64xf32>
    %830 = vector.shape_cast %829 : vector<64xf32> to vector<64x1xf32>
    %831 = vector.broadcast %830 : vector<64x1xf32> to vector<64x128xf32>
    %832 = arith.divf %828, %831 : vector<64x128xf32>
    %833 = vector.extract_strided_slice %832 {offsets = [0, 0], sizes = [8, 128], strides = [1, 1]} : vector<64x128xf32> to vector<8x128xf32>
    %c0_220 = arith.constant 0 : index
    %c0_221 = arith.constant 0 : index
    %834 = vector.load %arg10[%c0_220, %c0_221] : memref<8x1024xf32, #tpu.memory_space<vmem>>, vector<8x128xf32>
    tpu.vector_store %arg10[%c0_220, %c0_221], %833 {strides = array<i32>} : memref<8x1024xf32, #tpu.memory_space<vmem>>, vector<8x128xf32>,
    %835 = vector.extract_strided_slice %832 {offsets = [8, 0], sizes = [8, 128], strides = [1, 1]} : vector<64x128xf32> to vector<8x128xf32>
    %c0_222 = arith.constant 0 : index
    %c128_223 = arith.constant 128 : index
    %836 = vector.load %arg10[%c0_222, %c128_223] : memref<8x1024xf32, #tpu.memory_space<vmem>>, vector<8x128xf32>
    tpu.vector_store %arg10[%c0_222, %c128_223], %835 {strides = array<i32>} : memref<8x1024xf32, #tpu.memory_space<vmem>>, vector<8x128xf32>,
    %837 = vector.extract_strided_slice %832 {offsets = [16, 0], sizes = [8, 128], strides = [1, 1]} : vector<64x128xf32> to vector<8x128xf32>
    %c0_224 = arith.constant 0 : index
    %c256 = arith.constant 256 : index
    %838 = vector.load %arg10[%c0_224, %c256] : memref<8x1024xf32, #tpu.memory_space<vmem>>, vector<8x128xf32>
    tpu.vector_store %arg10[%c0_224, %c256], %837 {strides = array<i32>} : memref<8x1024xf32, #tpu.memory_space<vmem>>, vector<8x128xf32>,
    %839 = vector.extract_strided_slice %832 {offsets = [24, 0], sizes = [8, 128], strides = [1, 1]} : vector<64x128xf32> to vector<8x128xf32>
    %c0_225 = arith.constant 0 : index
    %c384 = arith.constant 384 : index
    %840 = vector.load %arg10[%c0_225, %c384] : memref<8x1024xf32, #tpu.memory_space<vmem>>, vector<8x128xf32>
    tpu.vector_store %arg10[%c0_225, %c384], %839 {strides = array<i32>} : memref<8x1024xf32, #tpu.memory_space<vmem>>, vector<8x128xf32>,
    %841 = vector.extract_strided_slice %832 {offsets = [32, 0], sizes = [8, 128], strides = [1, 1]} : vector<64x128xf32> to vector<8x128xf32>
    %c0_226 = arith.constant 0 : index
    %c512 = arith.constant 512 : index
    %842 = vector.load %arg10[%c0_226, %c512] : memref<8x1024xf32, #tpu.memory_space<vmem>>, vector<8x128xf32>
    tpu.vector_store %arg10[%c0_226, %c512], %841 {strides = array<i32>} : memref<8x1024xf32, #tpu.memory_space<vmem>>, vector<8x128xf32>,
    %843 = vector.extract_strided_slice %832 {offsets = [40, 0], sizes = [8, 128], strides = [1, 1]} : vector<64x128xf32> to vector<8x128xf32>
    %c0_227 = arith.constant 0 : index
    %c640 = arith.constant 640 : index
    %844 = vector.load %arg10[%c0_227, %c640] : memref<8x1024xf32, #tpu.memory_space<vmem>>, vector<8x128xf32>
    tpu.vector_store %arg10[%c0_227, %c640], %843 {strides = array<i32>} : memref<8x1024xf32, #tpu.memory_space<vmem>>, vector<8x128xf32>,
    %845 = vector.extract_strided_slice %832 {offsets = [48, 0], sizes = [8, 128], strides = [1, 1]} : vector<64x128xf32> to vector<8x128xf32>
    %c0_228 = arith.constant 0 : index
    %c768 = arith.constant 768 : index
    %846 = vector.load %arg10[%c0_228, %c768] : memref<8x1024xf32, #tpu.memory_space<vmem>>, vector<8x128xf32>
    tpu.vector_store %arg10[%c0_228, %c768], %845 {strides = array<i32>} : memref<8x1024xf32, #tpu.memory_space<vmem>>, vector<8x128xf32>,
    %847 = vector.extract_strided_slice %832 {offsets = [56, 0], sizes = [8, 128], strides = [1, 1]} : vector<64x128xf32> to vector<8x128xf32>
    %c0_229 = arith.constant 0 : index
    %c896 = arith.constant 896 : index
    %848 = vector.load %arg10[%c0_229, %c896] : memref<8x1024xf32, #tpu.memory_space<vmem>>, vector<8x128xf32>
    tpu.vector_store %arg10[%c0_229, %c896], %847 {strides = array<i32>} : memref<8x1024xf32, #tpu.memory_space<vmem>>, vector<8x128xf32>,
    return
  }
  func.func @transform_0(%arg0: i32) -> (i32, i32) {
    %c0_i32 = arith.constant 0 : i32
    %c0_i32_0 = arith.constant 0 : i32
    return %arg0, %c0_i32 : i32, i32
  }
  func.func @transform_1(%arg0: i32) -> (i32, i32) {
    %c0_i32 = arith.constant 0 : i32
    %c0_i32_0 = arith.constant 0 : i32
    %c0_i32_1 = arith.constant 0 : i32
    return %c0_i32, %c0_i32_0 : i32, i32
  }
  func.func @transform_2(%arg0: i32) -> (i32, i32) {
    %c0_i32 = arith.constant 0 : i32
    %c0_i32_0 = arith.constant 0 : i32
    %c0_i32_1 = arith.constant 0 : i32
    return %c0_i32, %c0_i32_0 : i32, i32
  }
  func.func @transform_3(%arg0: i32) -> (i32, i32) {
    %c0_i32 = arith.constant 0 : i32
    %c0_i32_0 = arith.constant 0 : i32
    %c0_i32_1 = arith.constant 0 : i32
    return %c0_i32, %c0_i32_0 : i32, i32
  }
  func.func @transform_4(%arg0: i32) -> (i32, i32) {
    %c0_i32 = arith.constant 0 : i32
    %c0_i32_0 = arith.constant 0 : i32
    %c0_i32_1 = arith.constant 0 : i32
    return %c0_i32, %c0_i32_0 : i32, i32
  }
  func.func @transform_5(%arg0: i32) -> (i32, i32) {
    %c0_i32 = arith.constant 0 : i32
    %c0_i32_0 = arith.constant 0 : i32
    %c0_i32_1 = arith.constant 0 : i32
    return %c0_i32, %c0_i32_0 : i32, i32
  }
  func.func @transform_6(%arg0: i32) -> (i32, i32) {
    %c0_i32 = arith.constant 0 : i32
    %c0_i32_0 = arith.constant 0 : i32
    %c0_i32_1 = arith.constant 0 : i32
    return %c0_i32, %c0_i32_0 : i32, i32
  }
  func.func @transform_7(%arg0: i32) -> (i32, i32) {
    %c0_i32 = arith.constant 0 : i32
    %c0_i32_0 = arith.constant 0 : i32
    %c0_i32_1 = arith.constant 0 : i32
    return %c0_i32, %c0_i32_0 : i32, i32
  }
  func.func @transform_8(%arg0: i32) -> (i32, i32) {
    %c0_i32 = arith.constant 0 : i32
    %c0_i32_0 = arith.constant 0 : i32
    %c0_i32_1 = arith.constant 0 : i32
    return %c0_i32, %c0_i32_0 : i32, i32
  }
  func.func @transform_9(%arg0: i32) -> (i32, i32) {
    %c0_i32 = arith.constant 0 : i32
    %c0_i32_0 = arith.constant 0 : i32
    return %arg0, %c0_i32 : i32, i32
  }
}

</mosaic_0001>

<llo_original>
// kernel: tpu_custom_call.1
$region0: #{tpu_custom_call.1}
  #allocation0 [shape = 'u32[]', space=smem, size = 0x4, offset = 0x4, fixed_abs, tag = 'smem constant byte address 0x4 - core index']
  #allocation1 [shape = 'u32[72,128]{1,0:T(1,128)}', space=vmem, size = 0x9000, scoped, tag = 'internal scratch']
  #allocation2 [shape = 'bf16[64,128]{1,0:T(8,128)(2,1)}', space=vmem, size = 0x4000, scoped, tag = 'scratch operand']
  #allocation3 [shape = 'f32[64,384]{1,0:T(8,128)}', space=vmem, size = 0x18000, scoped, tag = 'scratch operand']
  %s0 = inlined_call_operand.hbm [shape: f32[8,32], index: 0, kind: input, shape index: {}]
  %s1 = inlined_call_operand.hbm [shape: bf16[32,32], index: 1, kind: input, shape index: {}]
  %s2 = inlined_call_operand.vmem [shape: f32[1,32], index: 2, kind: input, shape index: {}]
  %s3 = inlined_call_operand.hbm [shape: bf16[160,384], index: 3, kind: input, shape index: {}]
  %s4 = inlined_call_operand.hbm [shape: bf16[256,384], index: 4, kind: input, shape index: {}]
  %s5 = inlined_call_operand.hbm [shape: bf16[256,384], index: 5, kind: input, shape index: {}]
  %s6 = inlined_call_operand.hbm [shape: f32[6,384], index: 6, kind: input, shape index: {}]
  %s7 = inlined_call_operand.hbm [shape: bf16[128,128], index: 7, kind: input, shape index: {}]
  %s8 = inlined_call_operand.vmem [shape: f32[1,128], index: 8, kind: input, shape index: {}]
  %s9 = inlined_call_operand.hbm [shape: f32[8,1024], index: 9, kind: output, shape index: {}]
  %s10 = sld [smem:[#allocation0]]
  $region74: #{tpu_custom_call.1} parent=0
    _
  %s12 = ssub.s32 1, %s10
  %s13 = scalar_select 0, %s12, %s10
  $region1: #{tpu_custom_call.1} parent=0
    #allocation4 [shape = 'u8[4096]{0}', space=vmem, size = 0x1000, scoped, tag = 'input window, operand 0, single buffered']
    #allocation5 [shape = 's32[1]{0}', space=sflag, size = 0x4, scoped, tag = 'scoped memory for tpu_custom_call.1']
    #allocation6 [shape = 's32[1]{0}', space=sflag, size = 0x4, scoped, tag = 'scoped memory for tpu_custom_call.1']
    #allocation7 [shape = 'u8[8192]{0}', space=vmem, size = 0x2000, scoped, tag = 'input window, operand 1, single buffered']
    #allocation8 [shape = 's32[1]{0}', space=sflag, size = 0x4, scoped, tag = 'scoped memory for tpu_custom_call.1']
    #allocation9 [shape = 'u8[122880]{0}', space=vmem, size = 0x1e000, scoped, tag = 'input window, operand 3, single buffered']
    #allocation10 [shape = 'u8[196608]{0}', space=vmem, size = 0x30000, scoped, tag = 'input window, operand 4, single buffered']
    #allocation11 [shape = 's32[1]{0}', space=sflag, size = 0x4, scoped, tag = 'scoped memory for tpu_custom_call.1']
    #allocation12 [shape = 'u8[196608]{0}', space=vmem, size = 0x30000, scoped, tag = 'input window, operand 5, single buffered']
    #allocation13 [shape = 'u8[12288]{0}', space=vmem, size = 0x3000, scoped, tag = 'input window, operand 6, single buffered']
    #allocation14 [shape = 's32[1]{0}', space=sflag, size = 0x4, scoped, tag = 'scoped memory for tpu_custom_call.1']
    #allocation15 [shape = 'u8[32768]{0}', space=vmem, size = 0x8000, scoped, tag = 'input window, operand 7, single buffered']
    #allocation16 [shape = 'u8[32768]{0}', space=vmem, size = 0x8000, scoped, tag = 'output window, operand 0, single buffered']
    %14 = vsyncpa [#allocation5], 0
    %15 = vsyncpa [#allocation8], 0
    %16 = vsyncpa [#allocation11], 0
    %17 = vsyncpa [#allocation14], 0
    %18 = vsyncpa [#allocation6], 0
    // Predicated region
    $region2: #{tpu_custom_call.1} parent=1 // pred_check
      _
    $region3: #{tpu_custom_call.1} parent=1 // pred_check_branch
      %20 = sbr.rel (0) target = $region5
    $region4: #{tpu_custom_call.1} parent=1 // pred_region
      %22 = vsyncadd [#allocation5], 0
      %s24 = sshll.u32 %s0, 4
      %s25 = int_to_ptr.hbm [resolvable:$true] %s24
      %s26 = sshll.u32 [#allocation4], 4
      %s27 = int_to_ptr.vmem [resolvable:$true] %s26
      %29 = dma.hbm_to_vmem [thread:$0]  %s25, 128, %s27, [#allocation5]
    $region5: #{tpu_custom_call.1} parent=1 // pred_fallthru
      _
    // Predicated region
    $region6: #{tpu_custom_call.1} parent=1 // pred_check
      _
    $region7: #{tpu_custom_call.1} parent=1 // pred_check_branch
      %31 = sbr.rel (0) target = $region9
    $region8: #{tpu_custom_call.1} parent=1 // pred_region
      %33 = vsyncadd [#allocation8], 0
      %s34 = sshll.u32 %s1, 4
      %s35 = int_to_ptr.hbm [resolvable:$true] %s34
      %s36 = sshll.u32 [#allocation7], 4
      %s37 = int_to_ptr.vmem [resolvable:$true] %s36
      %42 = dma.hbm_to_vmem [thread:$0]  %s35, 256, %s37, [#allocation8], 64, 64, 4
    $region9: #{tpu_custom_call.1} parent=1 // pred_fallthru
      _
    // Predicated region
    $region10: #{tpu_custom_call.1} parent=1 // pred_check
      _
    $region11: #{tpu_custom_call.1} parent=1 // pred_check_branch
      %44 = sbr.rel (0) target = $region13
    $region12: #{tpu_custom_call.1} parent=1 // pred_region
      _
    $region13: #{tpu_custom_call.1} parent=1 // pred_fallthru
      _
    // Predicated region
    $region14: #{tpu_custom_call.1} parent=1 // pred_check
      _
    $region15: #{tpu_custom_call.1} parent=1 // pred_check_branch
      %46 = sbr.rel (0) target = $region17
    $region16: #{tpu_custom_call.1} parent=1 // pred_region
      %48 = vsyncadd [#allocation8], 0
      %s49 = sshll.u32 %s3, 4
      %s50 = int_to_ptr.hbm [resolvable:$true] %s49
      %s51 = sshll.u32 [#allocation9], 4
      %s52 = int_to_ptr.vmem [resolvable:$true] %s51
      %57 = dma.hbm_to_vmem [thread:$0]  %s50, 3840, %s52, [#allocation8], 192, 192, 12
    $region17: #{tpu_custom_call.1} parent=1 // pred_fallthru
      _
    // Predicated region
    $region18: #{tpu_custom_call.1} parent=1 // pred_check
      _
    $region19: #{tpu_custom_call.1} parent=1 // pred_check_branch
      %59 = sbr.rel (0) target = $region21
    $region20: #{tpu_custom_call.1} parent=1 // pred_region
      %61 = vsyncadd [#allocation11], 0
      %s62 = sshll.u32 %s4, 4
      %s63 = int_to_ptr.hbm [resolvable:$true] %s62
      %s64 = sshll.u32 [#allocation10], 4
      %s65 = int_to_ptr.vmem [resolvable:$true] %s64
      %70 = dma.hbm_to_vmem [thread:$0]  %s63, 6144, %s65, [#allocation11], 192, 192, 12
    $region21: #{tpu_custom_call.1} parent=1 // pred_fallthru
      _
    // Predicated region
    $region22: #{tpu_custom_call.1} parent=1 // pred_check
      _
    $region23: #{tpu_custom_call.1} parent=1 // pred_check_branch
      %72 = sbr.rel (0) target = $region25
    $region24: #{tpu_custom_call.1} parent=1 // pred_region
      %74 = vsyncadd [#allocation11], 0
      %s75 = sshll.u32 %s5, 4
      %s76 = int_to_ptr.hbm [resolvable:$true] %s75
      %s77 = sshll.u32 [#allocation12], 4
      %s78 = int_to_ptr.vmem [resolvable:$true] %s77
      %83 = dma.hbm_to_vmem [thread:$0]  %s76, 6144, %s78, [#allocation11], 192, 192, 12
    $region25: #{tpu_custom_call.1} parent=1 // pred_fallthru
      _
    // Predicated region
    $region26: #{tpu_custom_call.1} parent=1 // pred_check
      _
    $region27: #{tpu_custom_call.1} parent=1 // pred_check_branch
      %85 = sbr.rel (0) target = $region29
    $region28: #{tpu_custom_call.1} parent=1 // pred_region
      %87 = vsyncadd [#allocation14], 0
      %s89 = sshll.u32 %s6, 4
      %s90 = int_to_ptr.hbm [resolvable:$true] %s89
      %s91 = sshll.u32 [#allocation13], 4
      %s92 = int_to_ptr.vmem [resolvable:$true] %s91
      %94 = dma.hbm_to_vmem [thread:$0]  %s90, 384, %s92, [#allocation14]
    $region29: #{tpu_custom_call.1} parent=1 // pred_fallthru
      _
    // Predicated region
    $region30: #{tpu_custom_call.1} parent=1 // pred_check
      _
    $region31: #{tpu_custom_call.1} parent=1 // pred_check_branch
      %96 = sbr.rel (0) target = $region33
    $region32: #{tpu_custom_call.1} parent=1 // pred_region
      %98 = vsyncadd [#allocation14], 0
      %s99 = sshll.u32 %s7, 4
      %s100 = int_to_ptr.hbm [resolvable:$true] %s99
      %s101 = sshll.u32 [#allocation15], 4
      %s102 = int_to_ptr.vmem [resolvable:$true] %s101
      %107 = dma.hbm_to_vmem [thread:$0]  %s100, 1024, %s102, [#allocation14], 64, 64, 4
    $region33: #{tpu_custom_call.1} parent=1 // pred_fallthru
      _
    // Predicated region
    $region34: #{tpu_custom_call.1} parent=1 // pred_check
      _
    $region35: #{tpu_custom_call.1} parent=1 // pred_check_branch
      %109 = sbr.rel (0) target = $region37
    $region36: #{tpu_custom_call.1} parent=1 // pred_region
      _
    $region37: #{tpu_custom_call.1} parent=1 // pred_fallthru
      _
    // Predicated region
    $region38: #{tpu_custom_call.1} parent=1 // pred_check
      _
    $region39: #{tpu_custom_call.1} parent=1 // pred_check_branch
      %111 = sbr.rel (0) target = $region41
    $region40: #{tpu_custom_call.1} parent=1 // pred_region
      %113 = dma.done [#allocation5], 128
    $region41: #{tpu_custom_call.1} parent=1 // pred_fallthru
      _
    // Predicated region
    $region42: #{tpu_custom_call.1} parent=1 // pred_check
      _
    $region43: #{tpu_custom_call.1} parent=1 // pred_check_branch
      %115 = sbr.rel (0) target = $region45
    $region44: #{tpu_custom_call.1} parent=1 // pred_region
      %117 = dma.done [#allocation8], 256
    $region45: #{tpu_custom_call.1} parent=1 // pred_fallthru
      _
    // Predicated region
    $region46: #{tpu_custom_call.1} parent=1 // pred_check
      _
    $region47: #{tpu_custom_call.1} parent=1 // pred_check_branch
      %119 = sbr.rel (0) target = $region49
    $region48: #{tpu_custom_call.1} parent=1 // pred_region
      %121 = dma.done [#allocation8], 3840
    $region49: #{tpu_custom_call.1} parent=1 // pred_fallthru
      _
    // Predicated region
    $region50: #{tpu_custom_call.1} parent=1 // pred_check
      _
    $region51: #{tpu_custom_call.1} parent=1 // pred_check_branch
      %123 = sbr.rel (0) target = $region53
    $region52: #{tpu_custom_call.1} parent=1 // pred_region
      %125 = dma.done [#allocation11], 6144
    $region53: #{tpu_custom_call.1} parent=1 // pred_fallthru
      _
    // Predicated region
    $region54: #{tpu_custom_call.1} parent=1 // pred_check
      _
    $region55: #{tpu_custom_call.1} parent=1 // pred_check_branch
      %127 = sbr.rel (0) target = $region57
    $region56: #{tpu_custom_call.1} parent=1 // pred_region
      %129 = dma.done [#allocation11], 6144
    $region57: #{tpu_custom_call.1} parent=1 // pred_fallthru
      _
    // Predicated region
    $region58: #{tpu_custom_call.1} parent=1 // pred_check
      _
    $region59: #{tpu_custom_call.1} parent=1 // pred_check_branch
      %131 = sbr.rel (0) target = $region61
    $region60: #{tpu_custom_call.1} parent=1 // pred_region
      %133 = dma.done [#allocation14], 384
    $region61: #{tpu_custom_call.1} parent=1 // pred_fallthru
      _
    // Predicated region
    $region62: #{tpu_custom_call.1} parent=1 // pred_check
      _
    $region63: #{tpu_custom_call.1} parent=1 // pred_check_branch
      %135 = sbr.rel (0) target = $region65
    $region64: #{tpu_custom_call.1} parent=1 // pred_region
      %137 = dma.done [#allocation14], 1024
    $region65: #{tpu_custom_call.1} parent=1 // pred_fallthru
      _
    %v139 = vld [vmem:[#allocation4] sm:$0xff]
    %v140 = vpack.c.bf16 %v139, %v139
    %v141 = vld [vmem:[#allocation7] sm:$0xf]
    %v142 = vld [vmem:[#allocation7 + $0x4] sm:$0xf]
    %v143 = vld [vmem:[#allocation7 + $0x8] sm:$0xf]
    %v144 = vld [vmem:[#allocation7 + $0xc] sm:$0xf]
    %v145 = vld [vmem:[%s2] sm:$0x1]
    %v147 = vperm.slane %v145, 0
    %v153 = vunpack.c.l.b16 %v141
    %v154 = vunpack.c.l.b16 %v142
    %v155 = vunpack.c.l.b16 %v143
    %v156 = vunpack.c.l.b16 %v144
    %v157 = vpack.c.b16 %v154, %v153
    %v158 = vpack.c.b16 %v156, %v155
    %vm161 = vcmask 261120
    %v163 = vsel %vm161, %v140, 0
    %165 = vmatpush.bf16.msra.mxu0 0
    %166 = vmatpush.bf16.msra.mxu0 0
    %167 = vmatpush.bf16.msra.mxu0 0
    %168 = vmatpush.bf16.msra.mxu0 0
    %169 = vmatpush.bf16.msra.mxu0 0
    %170 = vmatpush.bf16.msra.mxu0 0
    %171 = vmatpush.bf16.msra.mxu0 %v158
    %172 = vmatpush.bf16.msra.mxu0 %v157
    %173 = vmatmul.bf16.gmra.mxu0 %v163
    %v174 = vpop.f32.mrf.mxu0
    %v175 = vadd.f32 %v147, %v174
    %v176 = vpop.f32.mrf.mxu0
    %177 = vdwg.mxu0
    %vm178 = vcmp.gt.f32.partialorder %v175, 0.0
    %v179 = vmin.f32 %v175, 0.0
    %v180 = vmul.f32 %v179, 1.442695
    %v181 = vpow.pop %v180
    %v182 = vsub.f32 %v181, 1.0
    %v183 = vmul.f32 %v182, 1.6732632
    %v184 = vsel %vm178, %v175, %v183
    %v185 = vmul.f32 %v184, 1.050701
    %v186 = vpack.c.bf16 %v185, %v185
    %v187 = vld [vmem:[#allocation9] sm:$0xff]
    %v188 = vld [vmem:[#allocation9 + $0x8] sm:$0xf]
    %v189 = vld [vmem:[#allocation9 + $0xc] sm:$0xff]
    %v190 = vld [vmem:[#allocation9 + $0x14] sm:$0xf]
    %v191 = vld [vmem:[#allocation9 + $0x18] sm:$0xff]
    %v192 = vld [vmem:[#allocation9 + $0x20] sm:$0xf]
    %v193 = vld [vmem:[#allocation9 + $0x24] sm:$0xff]
    %v194 = vld [vmem:[#allocation9 + $0x2c] sm:$0xf]
    %v195 = vld [vmem:[#allocation9 + $0x30] sm:$0xff]
    %v196 = vld [vmem:[#allocation9 + $0x38] sm:$0xf]
    %v197 = vld [vmem:[#allocation9 + $0x3c] sm:$0xff]
    %v198 = vld [vmem:[#allocation9 + $0x44] sm:$0xf]
    %v199 = vld [vmem:[#allocation9 + $0x48] sm:$0xff]
    %v200 = vld [vmem:[#allocation9 + $0x50] sm:$0xf]
    %v201 = vld [vmem:[#allocation9 + $0x54] sm:$0xff]
    %v202 = vld [vmem:[#allocation9 + $0x5c] sm:$0xf]
    %v203 = vld [vmem:[#allocation9 + $0x60] sm:$0xff]
    %v204 = vld [vmem:[#allocation9 + $0x68] sm:$0xf]
    %v205 = vld [vmem:[#allocation9 + $0x6c] sm:$0xff]
    %v206 = vld [vmem:[#allocation9 + $0x74] sm:$0xf]
    %v207 = vld [vmem:[#allocation9 + $0x78] sm:$0xff]
    %v208 = vld [vmem:[#allocation9 + $0x80] sm:$0xf]
    %v209 = vld [vmem:[#allocation9 + $0x84] sm:$0xff]
    %v210 = vld [vmem:[#allocation9 + $0x8c] sm:$0xf]
    %v211 = vld [vmem:[#allocation9 + $0x90] sm:$0xff]
    %v212 = vld [vmem:[#allocation9 + $0x98] sm:$0xf]
    %v213 = vld [vmem:[#allocation9 + $0x9c] sm:$0xff]
    %v214 = vld [vmem:[#allocation9 + $0xa4] sm:$0xf]
    %v215 = vld [vmem:[#allocation9 + $0xa8] sm:$0xff]
    %v216 = vld [vmem:[#allocation9 + $0xb0] sm:$0xf]
    %v217 = vld [vmem:[#allocation9 + $0xb4] sm:$0xff]
    %v218 = vld [vmem:[#allocation9 + $0xbc] sm:$0xf]
    %v219 = vld [vmem:[#allocation9 + $0xc0] sm:$0xff]
    %v220 = vld [vmem:[#allocation9 + $0xc8] sm:$0xf]
    %v221 = vld [vmem:[#allocation9 + $0xcc] sm:$0xff]
    %v222 = vld [vmem:[#allocation9 + $0xd4] sm:$0xf]
    %v223 = vld [vmem:[#allocation9 + $0xd8] sm:$0xff]
    %v224 = vld [vmem:[#allocation9 + $0xe0] sm:$0xf]
    %v225 = vld [vmem:[#allocation9 + $0xe4] sm:$0xff]
    %v226 = vld [vmem:[#allocation9 + $0xec] sm:$0xf]
    %v227 = vld [vmem:[#allocation13] ss:$8 sm:$0x7]
    %v229 = vperm.slane %v227, 0
    %v230 = vperm.slane %v227, 1
    %v231 = vperm.slane %v227, 2
    %v243 = vunpack.c.l.b16 %v187
    %v244 = vunpack.c.h.b16 %v187
    %v245 = vunpack.c.l.b16 %v188
    %v246 = vunpack.c.l.b16 %v189
    %v247 = vunpack.c.h.b16 %v189
    %v248 = vunpack.c.l.b16 %v190
    %v249 = vunpack.c.l.b16 %v191
    %v250 = vunpack.c.h.b16 %v191
    %v251 = vunpack.c.l.b16 %v192
    %v252 = vunpack.c.l.b16 %v193
    %v253 = vunpack.c.h.b16 %v193
    %v254 = vunpack.c.l.b16 %v194
    %v255 = vpack.c.b16 %v246, %v243
    %v256 = vpack.c.b16 %v247, %v244
    %v257 = vpack.c.b16 %v248, %v245
    %v258 = vpack.c.b16 %v252, %v249
    %v259 = vpack.c.b16 %v253, %v250
    %v260 = vpack.c.b16 %v254, %v251
    %v268 = vsel %vm161, %v186, 0
    %270 = vmatpush.bf16.msra.mxu0 0
    %271 = vmatpush.bf16.msra.mxu0 0
    %272 = vmatpush.bf16.msra.mxu0 0
    %273 = vmatpush.bf16.msra.mxu0 0
    %274 = vmatpush.bf16.msra.mxu0 0
    %275 = vmatpush.bf16.msra.mxu0 0
    %276 = vmatpush.bf16.msra.mxu0 %v258
    %277 = vmatpush.bf16.msra.mxu0 %v255
    %278 = vmatmul.bf16.gmra.mxu0 %v268
    %v279 = vpop.f32.mrf.mxu0
    %v280 = vadd.f32 %v229, %v279
    %v281 = vpop.f32.mrf.mxu0
    %282 = vdwg.mxu0
    %283 = vmatpush.bf16.msra.mxu0 0
    %284 = vmatpush.bf16.msra.mxu0 0
    %285 = vmatpush.bf16.msra.mxu0 0
    %286 = vmatpush.bf16.msra.mxu0 0
    %287 = vmatpush.bf16.msra.mxu0 0
    %288 = vmatpush.bf16.msra.mxu0 0
    %289 = vmatpush.bf16.msra.mxu0 %v259
    %290 = vmatpush.bf16.msra.mxu0 %v256
    %291 = vmatmul.bf16.gmra.mxu0 %v268
    %v292 = vpop.f32.mrf.mxu0
    %v293 = vadd.f32 %v230, %v292
    %v294 = vpop.f32.mrf.mxu0
    %295 = vdwg.mxu0
    %296 = vmatpush.bf16.msra.mxu0 0
    %297 = vmatpush.bf16.msra.mxu0 0
    %298 = vmatpush.bf16.msra.mxu0 0
    %299 = vmatpush.bf16.msra.mxu0 0
    %300 = vmatpush.bf16.msra.mxu0 0
    %301 = vmatpush.bf16.msra.mxu0 0
    %302 = vmatpush.bf16.msra.mxu0 %v260
    %303 = vmatpush.bf16.msra.mxu0 %v257
    %304 = vmatmul.bf16.gmra.mxu0 %v268
    %v305 = vpop.f32.mrf.mxu0
    %v306 = vadd.f32 %v231, %v305
    %v307 = vpop.f32.mrf.mxu0
    %308 = vdwg.mxu0
    %s309 = scalar_lea.vmem [#allocation13], 1
    %v310 = vld [vmem:[%s309] ss:$8 sm:$0x7]
    %v312 = vperm.slane %v310, 0
    %v313 = vperm.slane %v310, 1
    %v314 = vperm.slane %v310, 2
    %v350 = vunpack.c.l.b16 %v195
    %v351 = vunpack.c.h.b16 %v195
    %v352 = vunpack.c.l.b16 %v196
    %v353 = vunpack.c.l.b16 %v197
    %v354 = vunpack.c.h.b16 %v197
    %v355 = vunpack.c.l.b16 %v198
    %v356 = vunpack.c.l.b16 %v199
    %v357 = vunpack.c.h.b16 %v199
    %v358 = vunpack.c.l.b16 %v200
    %v359 = vunpack.c.l.b16 %v201
    %v360 = vunpack.c.h.b16 %v201
    %v361 = vunpack.c.l.b16 %v202
    %v362 = vunpack.c.l.b16 %v203
    %v363 = vunpack.c.h.b16 %v203
    %v364 = vunpack.c.l.b16 %v204
    %v365 = vunpack.c.l.b16 %v205
    %v366 = vunpack.c.h.b16 %v205
    %v367 = vunpack.c.l.b16 %v206
    %v368 = vunpack.c.l.b16 %v207
    %v369 = vunpack.c.h.b16 %v207
    %v370 = vunpack.c.l.b16 %v208
    %v371 = vunpack.c.l.b16 %v209
    %v372 = vunpack.c.h.b16 %v209
    %v373 = vunpack.c.l.b16 %v210
    %v374 = vunpack.c.l.b16 %v211
    %v375 = vunpack.c.h.b16 %v211
    %v376 = vunpack.c.l.b16 %v212
    %v377 = vunpack.c.l.b16 %v213
    %v378 = vunpack.c.h.b16 %v213
    %v379 = vunpack.c.l.b16 %v214
    %v380 = vunpack.c.l.b16 %v215
    %v381 = vunpack.c.h.b16 %v215
    %v382 = vunpack.c.l.b16 %v216
    %v383 = vunpack.c.l.b16 %v217
    %v384 = vunpack.c.h.b16 %v217
    %v385 = vunpack.c.l.b16 %v218
    %v386 = vunpack.c.l.b16 %v219
    %v387 = vunpack.c.h.b16 %v219
    %v388 = vunpack.c.l.b16 %v220
    %v389 = vunpack.c.l.b16 %v221
    %v390 = vunpack.c.h.b16 %v221
    %v391 = vunpack.c.l.b16 %v222
    %v392 = vunpack.c.l.b16 %v223
    %v393 = vunpack.c.h.b16 %v223
    %v394 = vunpack.c.l.b16 %v224
    %v395 = vunpack.c.l.b16 %v225
    %v396 = vunpack.c.h.b16 %v225
    %v397 = vunpack.c.l.b16 %v226
    %v398 = vpack.c.b16 %v353, %v350
    %v399 = vpack.c.b16 %v354, %v351
    %v400 = vpack.c.b16 %v355, %v352
    %v401 = vpack.c.b16 %v359, %v356
    %v402 = vpack.c.b16 %v360, %v357
    %v403 = vpack.c.b16 %v361, %v358
    %v404 = vpack.c.b16 %v365, %v362
    %v405 = vpack.c.b16 %v366, %v363
    %v406 = vpack.c.b16 %v367, %v364
    %v407 = vpack.c.b16 %v371, %v368
    %v408 = vpack.c.b16 %v372, %v369
    %v409 = vpack.c.b16 %v373, %v370
    %v410 = vpack.c.b16 %v377, %v374
    %v411 = vpack.c.b16 %v378, %v375
    %v412 = vpack.c.b16 %v379, %v376
    %v413 = vpack.c.b16 %v383, %v380
    %v414 = vpack.c.b16 %v384, %v381
    %v415 = vpack.c.b16 %v385, %v382
    %v416 = vpack.c.b16 %v389, %v386
    %v417 = vpack.c.b16 %v390, %v387
    %v418 = vpack.c.b16 %v391, %v388
    %v419 = vpack.c.b16 %v395, %v392
    %v420 = vpack.c.b16 %v396, %v393
    %v421 = vpack.c.b16 %v397, %v394
    %446 = vmatpush.bf16.msra.mxu0 %v419
    %447 = vmatpush.bf16.msra.mxu0 %v416
    %448 = vmatpush.bf16.msra.mxu0 %v413
    %449 = vmatpush.bf16.msra.mxu0 %v410
    %450 = vmatpush.bf16.msra.mxu0 %v407
    %451 = vmatpush.bf16.msra.mxu0 %v404
    %452 = vmatpush.bf16.msra.mxu0 %v401
    %453 = vmatpush.bf16.msra.mxu0 %v398
    %454 = vmatmul.bf16.gmra.mxu0 0
    %v455 = vpop.f32.mrf.mxu0
    %v456 = vadd.f32 %v312, %v455
    %v457 = vpop.f32.mrf.mxu0
    %458 = vdwg.mxu0
    %459 = vmatpush.bf16.msra.mxu0 %v420
    %460 = vmatpush.bf16.msra.mxu0 %v417
    %461 = vmatpush.bf16.msra.mxu0 %v414
    %462 = vmatpush.bf16.msra.mxu0 %v411
    %463 = vmatpush.bf16.msra.mxu0 %v408
    %464 = vmatpush.bf16.msra.mxu0 %v405
    %465 = vmatpush.bf16.msra.mxu0 %v402
    %466 = vmatpush.bf16.msra.mxu0 %v399
    %467 = vmatmul.bf16.gmra.mxu0 0
    %v468 = vpop.f32.mrf.mxu0
    %v469 = vadd.f32 %v313, %v468
    %v470 = vpop.f32.mrf.mxu0
    %471 = vdwg.mxu0
    %472 = vmatpush.bf16.msra.mxu0 %v421
    %473 = vmatpush.bf16.msra.mxu0 %v418
    %474 = vmatpush.bf16.msra.mxu0 %v415
    %475 = vmatpush.bf16.msra.mxu0 %v412
    %476 = vmatpush.bf16.msra.mxu0 %v409
    %477 = vmatpush.bf16.msra.mxu0 %v406
    %478 = vmatpush.bf16.msra.mxu0 %v403
    %479 = vmatpush.bf16.msra.mxu0 %v400
    %480 = vmatmul.bf16.gmra.mxu0 0
    %v481 = vpop.f32.mrf.mxu0
    %v482 = vadd.f32 %v314, %v481
    %v483 = vpop.f32.mrf.mxu0
    %484 = vdwg.mxu0
    %v485 = vadd.f32 %v280, %v456
    %v486 = vxor.u32 %v485, 2147483648
    %v487 = vmul.f32 %v486, 1.442695
    %v488 = vpow.pop %v487
    %v489 = vadd.f32 %v488, 1.0
    %v490 = vrcp.pop %v489
    %v491 = vmul.f32 %v489, %v490
    %v492 = vsub.f32 1.0, %v491
    %v493 = vmul.f32 %v490, %v492
    %v494 = vadd.f32 %v490, %v493
    %vm495 = vweird.f32 %v489
    %vm496 = vweird.f32 %v490
    %vm497 = vmor %vm495, %vm496
    %v498 = vsel %vm497, %v490, %v494
    %v499 = vand.u32 2147483647, %v489
    %vm500 = vcmp.eq.f32.partialorder %v499, 8.507059e+37
    %v501 = vand.u32 %v489, 2147483648
    %v502 = vor.u32 1.1754944e-38, %v501
    %v503 = vsel %vm500, %v502, %v498
    %v504 = vmul.f32 1.0, %v503
    %v505 = vadd.f32 %v293, %v469
    %v506 = vxor.u32 %v505, 2147483648
    %v507 = vmul.f32 %v506, 1.442695
    %v508 = vpow.pop %v507
    %v509 = vadd.f32 %v508, 1.0
    %v510 = vrcp.pop %v509
    %v511 = vmul.f32 %v509, %v510
    %v512 = vsub.f32 1.0, %v511
    %v513 = vmul.f32 %v510, %v512
    %v514 = vadd.f32 %v510, %v513
    %vm515 = vweird.f32 %v509
    %vm516 = vweird.f32 %v510
    %vm517 = vmor %vm515, %vm516
    %v518 = vsel %vm517, %v510, %v514
    %v519 = vand.u32 2147483647, %v509
    %vm520 = vcmp.eq.f32.partialorder %v519, 8.507059e+37
    %v521 = vand.u32 %v509, 2147483648
    %v522 = vor.u32 1.1754944e-38, %v521
    %v523 = vsel %vm520, %v522, %v518
    %v524 = vmul.f32 1.0, %v523
    %v525 = vmul.f32 %v504, %v482
    %v526 = vadd.f32 %v306, %v525
    %v527 = vtanh.pop %v526
    %v528 = vsub.f32 1.0, %v524
    %v529 = vmul.f32 %v528, %v527
    %v530 = vmul.f32 %v524, 0.0
    %v531 = vadd.f32 %v529, %v530
    %v532 = vpack.c.bf16 %v531, %v531
    %533 = vst [vmem:[#allocation2] sm:$0xf] %v532
    %534 = vmatpush.bf16.msra.mxu0 %v419
    %535 = vmatpush.bf16.msra.mxu0 %v416
    %536 = vmatpush.bf16.msra.mxu0 %v413
    %537 = vmatpush.bf16.msra.mxu0 %v410
    %538 = vmatpush.bf16.msra.mxu0 %v407
    %539 = vmatpush.bf16.msra.mxu0 %v404
    %540 = vmatpush.bf16.msra.mxu0 %v401
    %541 = vmatpush.bf16.msra.mxu0 %v398
    %542 = vmatmul.bf16.gmra.mxu0 %v532
    %v543 = vpop.f32.mrf.mxu0
    %v544 = vadd.f32 %v312, %v543
    %v545 = vpop.f32.mrf.mxu0
    %546 = vdwg.mxu0
    %547 = vmatpush.bf16.msra.mxu0 %v420
    %548 = vmatpush.bf16.msra.mxu0 %v417
    %549 = vmatpush.bf16.msra.mxu0 %v414
    %550 = vmatpush.bf16.msra.mxu0 %v411
    %551 = vmatpush.bf16.msra.mxu0 %v408
    %552 = vmatpush.bf16.msra.mxu0 %v405
    %553 = vmatpush.bf16.msra.mxu0 %v402
    %554 = vmatpush.bf16.msra.mxu0 %v399
    %555 = vmatmul.bf16.gmra.mxu0 %v532
    %v556 = vpop.f32.mrf.mxu0
    %v557 = vadd.f32 %v313, %v556
    %v558 = vpop.f32.mrf.mxu0
    %559 = vdwg.mxu0
    %560 = vmatpush.bf16.msra.mxu0 %v421
    %561 = vmatpush.bf16.msra.mxu0 %v418
    %562 = vmatpush.bf16.msra.mxu0 %v415
    %563 = vmatpush.bf16.msra.mxu0 %v412
    %564 = vmatpush.bf16.msra.mxu0 %v409
    %565 = vmatpush.bf16.msra.mxu0 %v406
    %566 = vmatpush.bf16.msra.mxu0 %v403
    %567 = vmatpush.bf16.msra.mxu0 %v400
    %568 = vmatmul.bf16.gmra.mxu0 %v532
    %v569 = vpop.f32.mrf.mxu0
    %v570 = vadd.f32 %v314, %v569
    %v571 = vpop.f32.mrf.mxu0
    %572 = vdwg.mxu0
    %v573 = vadd.f32 %v280, %v544
    %v574 = vxor.u32 %v573, 2147483648
    %v575 = vmul.f32 %v574, 1.442695
    %v576 = vpow.pop %v575
    %v577 = vadd.f32 %v576, 1.0
    %v578 = vrcp.pop %v577
    %v579 = vmul.f32 %v577, %v578
    %v580 = vsub.f32 1.0, %v579
    %v581 = vmul.f32 %v578, %v580
    %v582 = vadd.f32 %v578, %v581
    %vm583 = vweird.f32 %v577
    %vm584 = vweird.f32 %v578
    %vm585 = vmor %vm583, %vm584
    %v586 = vsel %vm585, %v578, %v582
    %v587 = vand.u32 2147483647, %v577
    %vm588 = vcmp.eq.f32.partialorder %v587, 8.507059e+37
    %v589 = vand.u32 %v577, 2147483648
    %v590 = vor.u32 1.1754944e-38, %v589
    %v591 = vsel %vm588, %v590, %v586
    %v592 = vmul.f32 1.0, %v591
    %v593 = vadd.f32 %v293, %v557
    %v594 = vxor.u32 %v593, 2147483648
    %v595 = vmul.f32 %v594, 1.442695
    %v596 = vpow.pop %v595
    %v597 = vadd.f32 %v596, 1.0
    %v598 = vrcp.pop %v597
    %v599 = vmul.f32 %v597, %v598
    %v600 = vsub.f32 1.0, %v599
    %v601 = vmul.f32 %v598, %v600
    %v602 = vadd.f32 %v598, %v601
    %vm603 = vweird.f32 %v597
    %vm604 = vweird.f32 %v598
    %vm605 = vmor %vm603, %vm604
    %v606 = vsel %vm605, %v598, %v602
    %v607 = vand.u32 2147483647, %v597
    %vm608 = vcmp.eq.f32.partialorder %v607, 8.507059e+37
    %v609 = vand.u32 %v597, 2147483648
    %v610 = vor.u32 1.1754944e-38, %v609
    %v611 = vsel %vm608, %v610, %v606
    %v612 = vmul.f32 1.0, %v611
    %v613 = vmul.f32 %v592, %v570
    %v614 = vadd.f32 %v306, %v613
    %v615 = vtanh.pop %v614
    %v616 = vsub.f32 1.0, %v612
    %v617 = vmul.f32 %v616, %v615
    %v618 = vmul.f32 %v612, %v531
    %v619 = vadd.f32 %v617, %v618
    %v620 = vpack.c.bf16 %v619, %v619
    %621 = vst [vmem:[#allocation2 + $0x4] sm:$0xf] %v620
    %622 = vmatpush.bf16.msra.mxu0 %v419
    %623 = vmatpush.bf16.msra.mxu0 %v416
    %624 = vmatpush.bf16.msra.mxu0 %v413
    %625 = vmatpush.bf16.msra.mxu0 %v410
    %626 = vmatpush.bf16.msra.mxu0 %v407
    %627 = vmatpush.bf16.msra.mxu0 %v404
    %628 = vmatpush.bf16.msra.mxu0 %v401
    %629 = vmatpush.bf16.msra.mxu0 %v398
    %630 = vmatmul.bf16.gmra.mxu0 %v620
    %v631 = vpop.f32.mrf.mxu0
    %v632 = vadd.f32 %v312, %v631
    %v633 = vpop.f32.mrf.mxu0
    %634 = vdwg.mxu0
    %635 = vmatpush.bf16.msra.mxu0 %v420
    %636 = vmatpush.bf16.msra.mxu0 %v417
    %637 = vmatpush.bf16.msra.mxu0 %v414
    %638 = vmatpush.bf16.msra.mxu0 %v411
    %639 = vmatpush.bf16.msra.mxu0 %v408
    %640 = vmatpush.bf16.msra.mxu0 %v405
    %641 = vmatpush.bf16.msra.mxu0 %v402
    %642 = vmatpush.bf16.msra.mxu0 %v399
    %643 = vmatmul.bf16.gmra.mxu0 %v620
    %v644 = vpop.f32.mrf.mxu0
    %v645 = vadd.f32 %v313, %v644
    %v646 = vpop.f32.mrf.mxu0
    %647 = vdwg.mxu0
    %648 = vmatpush.bf16.msra.mxu0 %v421
    %649 = vmatpush.bf16.msra.mxu0 %v418
    %650 = vmatpush.bf16.msra.mxu0 %v415
    %651 = vmatpush.bf16.msra.mxu0 %v412
    %652 = vmatpush.bf16.msra.mxu0 %v409
    %653 = vmatpush.bf16.msra.mxu0 %v406
    %654 = vmatpush.bf16.msra.mxu0 %v403
    %655 = vmatpush.bf16.msra.mxu0 %v400
    %656 = vmatmul.bf16.gmra.mxu0 %v620
    %v657 = vpop.f32.mrf.mxu0
    %v658 = vadd.f32 %v314, %v657
    %v659 = vpop.f32.mrf.mxu0
    %660 = vdwg.mxu0
    %v661 = vadd.f32 %v280, %v632
    %v662 = vxor.u32 %v661, 2147483648
    %v663 = vmul.f32 %v662, 1.442695
    %v664 = vpow.pop %v663
    %v665 = vadd.f32 %v664, 1.0
    %v666 = vrcp.pop %v665
    %v667 = vmul.f32 %v665, %v666
    %v668 = vsub.f32 1.0, %v667
    %v669 = vmul.f32 %v666, %v668
    %v670 = vadd.f32 %v666, %v669
    %vm671 = vweird.f32 %v665
    %vm672 = vweird.f32 %v666
    %vm673 = vmor %vm671, %vm672
    %v674 = vsel %vm673, %v666, %v670
    %v675 = vand.u32 2147483647, %v665
    %vm676 = vcmp.eq.f32.partialorder %v675, 8.507059e+37
    %v677 = vand.u32 %v665, 2147483648
    %v678 = vor.u32 1.1754944e-38, %v677
    %v679 = vsel %vm676, %v678, %v674
    %v680 = vmul.f32 1.0, %v679
    %v681 = vadd.f32 %v293, %v645
    %v682 = vxor.u32 %v681, 2147483648
    %v683 = vmul.f32 %v682, 1.442695
    %v684 = vpow.pop %v683
    %v685 = vadd.f32 %v684, 1.0
    %v686 = vrcp.pop %v685
    %v687 = vmul.f32 %v685, %v686
    %v688 = vsub.f32 1.0, %v687
    %v689 = vmul.f32 %v686, %v688
    %v690 = vadd.f32 %v686, %v689
    %vm691 = vweird.f32 %v685
    %vm692 = vweird.f32 %v686
    %vm693 = vmor %vm691, %vm692
    %v694 = vsel %vm693, %v686, %v690
    %v695 = vand.u32 2147483647, %v685
    %vm696 = vcmp.eq.f32.partialorder %v695, 8.507059e+37
    %v697 = vand.u32 %v685, 2147483648
    %v698 = vor.u32 1.1754944e-38, %v697
    %v699 = vsel %vm696, %v698, %v694
    %v700 = vmul.f32 1.0, %v699
    %v701 = vmul.f32 %v680, %v658
    %v702 = vadd.f32 %v306, %v701
    %v703 = vtanh.pop %v702
    %v704 = vsub.f32 1.0, %v700
    %v705 = vmul.f32 %v704, %v703
    %v706 = vmul.f32 %v700, %v619
    %v707 = vadd.f32 %v705, %v706
    %v708 = vpack.c.bf16 %v707, %v707
    %709 = vst [vmem:[#allocation2 + $0x8] sm:$0xf] %v708
    %710 = vmatpush.bf16.msra.mxu0 %v419
    %711 = vmatpush.bf16.msra.mxu0 %v416
    %712 = vmatpush.bf16.msra.mxu0 %v413
    %713 = vmatpush.bf16.msra.mxu0 %v410
    %714 = vmatpush.bf16.msra.mxu0 %v407
    %715 = vmatpush.bf16.msra.mxu0 %v404
    %716 = vmatpush.bf16.msra.mxu0 %v401
    %717 = vmatpush.bf16.msra.mxu0 %v398
    %718 = vmatmul.bf16.gmra.mxu0 %v708
    %v719 = vpop.f32.mrf.mxu0
    %v720 = vadd.f32 %v312, %v719
    %v721 = vpop.f32.mrf.mxu0
    %722 = vdwg.mxu0
    %723 = vmatpush.bf16.msra.mxu0 %v420
    %724 = vmatpush.bf16.msra.mxu0 %v417
    %725 = vmatpush.bf16.msra.mxu0 %v414
    %726 = vmatpush.bf16.msra.mxu0 %v411
    %727 = vmatpush.bf16.msra.mxu0 %v408
    %728 = vmatpush.bf16.msra.mxu0 %v405
    %729 = vmatpush.bf16.msra.mxu0 %v402
    %730 = vmatpush.bf16.msra.mxu0 %v399
    %731 = vmatmul.bf16.gmra.mxu0 %v708
    %v732 = vpop.f32.mrf.mxu0
    %v733 = vadd.f32 %v313, %v732
    %v734 = vpop.f32.mrf.mxu0
    %735 = vdwg.mxu0
    %736 = vmatpush.bf16.msra.mxu0 %v421
    %737 = vmatpush.bf16.msra.mxu0 %v418
    %738 = vmatpush.bf16.msra.mxu0 %v415
    %739 = vmatpush.bf16.msra.mxu0 %v412
    %740 = vmatpush.bf16.msra.mxu0 %v409
    %741 = vmatpush.bf16.msra.mxu0 %v406
    %742 = vmatpush.bf16.msra.mxu0 %v403
    %743 = vmatpush.bf16.msra.mxu0 %v400
    %744 = vmatmul.bf16.gmra.mxu0 %v708
    %v745 = vpop.f32.mrf.mxu0
    %v746 = vadd.f32 %v314, %v745
    %v747 = vpop.f32.mrf.mxu0
    %748 = vdwg.mxu0
    %v749 = vadd.f32 %v280, %v720
    %v750 = vxor.u32 %v749, 2147483648
    %v751 = vmul.f32 %v750, 1.442695
    %v752 = vpow.pop %v751
    %v753 = vadd.f32 %v752, 1.0
    %v754 = vrcp.pop %v753
    %v755 = vmul.f32 %v753, %v754
    %v756 = vsub.f32 1.0, %v755
    %v757 = vmul.f32 %v754, %v756
    %v758 = vadd.f32 %v754, %v757
    %vm759 = vweird.f32 %v753
    %vm760 = vweird.f32 %v754
    %vm761 = vmor %vm759, %vm760
    %v762 = vsel %vm761, %v754, %v758
    %v763 = vand.u32 2147483647, %v753
    %vm764 = vcmp.eq.f32.partialorder %v763, 8.507059e+37
    %v765 = vand.u32 %v753, 2147483648
    %v766 = vor.u32 1.1754944e-38, %v765
    %v767 = vsel %vm764, %v766, %v762
    %v768 = vmul.f32 1.0, %v767
    %v769 = vadd.f32 %v293, %v733
    %v770 = vxor.u32 %v769, 2147483648
    %v771 = vmul.f32 %v770, 1.442695
    %v772 = vpow.pop %v771
    %v773 = vadd.f32 %v772, 1.0
    %v774 = vrcp.pop %v773
    %v775 = vmul.f32 %v773, %v774
    %v776 = vsub.f32 1.0, %v775
    %v777 = vmul.f32 %v774, %v776
    %v778 = vadd.f32 %v774, %v777
    %vm779 = vweird.f32 %v773
    %vm780 = vweird.f32 %v774
    %vm781 = vmor %vm779, %vm780
    %v782 = vsel %vm781, %v774, %v778
    %v783 = vand.u32 2147483647, %v773
    %vm784 = vcmp.eq.f32.partialorder %v783, 8.507059e+37
    %v785 = vand.u32 %v773, 2147483648
    %v786 = vor.u32 1.1754944e-38, %v785
    %v787 = vsel %vm784, %v786, %v782
    %v788 = vmul.f32 1.0, %v787
    %v789 = vmul.f32 %v768, %v746
    %v790 = vadd.f32 %v306, %v789
    %v791 = vtanh.pop %v790
    %v792 = vsub.f32 1.0, %v788
    %v793 = vmul.f32 %v792, %v791
    %v794 = vmul.f32 %v788, %v707
    %v795 = vadd.f32 %v793, %v794
    %v796 = vpack.c.bf16 %v795, %v795
    %797 = vst [vmem:[#allocation2 + $0xc] sm:$0xf] %v796
    %798 = vmatpush.bf16.msra.mxu0 %v419
    %799 = vmatpush.bf16.msra.mxu0 %v416
    %800 = vmatpush.bf16.msra.mxu0 %v413
    %801 = vmatpush.bf16.msra.mxu0 %v410
    %802 = vmatpush.bf16.msra.mxu0 %v407
    %803 = vmatpush.bf16.msra.mxu0 %v404
    %804 = vmatpush.bf16.msra.mxu0 %v401
    %805 = vmatpush.bf16.msra.mxu0 %v398
    %806 = vmatmul.bf16.gmra.mxu0 %v796
    %v807 = vpop.f32.mrf.mxu0
    %v808 = vadd.f32 %v312, %v807
    %v809 = vpop.f32.mrf.mxu0
    %810 = vdwg.mxu0
    %811 = vmatpush.bf16.msra.mxu0 %v420
    %812 = vmatpush.bf16.msra.mxu0 %v417
    %813 = vmatpush.bf16.msra.mxu0 %v414
    %814 = vmatpush.bf16.msra.mxu0 %v411
    %815 = vmatpush.bf16.msra.mxu0 %v408
    %816 = vmatpush.bf16.msra.mxu0 %v405
    %817 = vmatpush.bf16.msra.mxu0 %v402
    %818 = vmatpush.bf16.msra.mxu0 %v399
    %819 = vmatmul.bf16.gmra.mxu0 %v796
    %v820 = vpop.f32.mrf.mxu0
    %v821 = vadd.f32 %v313, %v820
    %v822 = vpop.f32.mrf.mxu0
    %823 = vdwg.mxu0
    %824 = vmatpush.bf16.msra.mxu0 %v421
    %825 = vmatpush.bf16.msra.mxu0 %v418
    %826 = vmatpush.bf16.msra.mxu0 %v415
    %827 = vmatpush.bf16.msra.mxu0 %v412
    %828 = vmatpush.bf16.msra.mxu0 %v409
    %829 = vmatpush.bf16.msra.mxu0 %v406
    %830 = vmatpush.bf16.msra.mxu0 %v403
    %831 = vmatpush.bf16.msra.mxu0 %v400
    %832 = vmatmul.bf16.gmra.mxu0 %v796
    %v833 = vpop.f32.mrf.mxu0
    %v834 = vadd.f32 %v314, %v833
    %v835 = vpop.f32.mrf.mxu0
    %836 = vdwg.mxu0
    %v837 = vadd.f32 %v280, %v808
    %v838 = vxor.u32 %v837, 2147483648
    %v839 = vmul.f32 %v838, 1.442695
    %v840 = vpow.pop %v839
    %v841 = vadd.f32 %v840, 1.0
    %v842 = vrcp.pop %v841
    %v843 = vmul.f32 %v841, %v842
    %v844 = vsub.f32 1.0, %v843
    %v845 = vmul.f32 %v842, %v844
    %v846 = vadd.f32 %v842, %v845
    %vm847 = vweird.f32 %v841
    %vm848 = vweird.f32 %v842
    %vm849 = vmor %vm847, %vm848
    %v850 = vsel %vm849, %v842, %v846
    %v851 = vand.u32 2147483647, %v841
    %vm852 = vcmp.eq.f32.partialorder %v851, 8.507059e+37
    %v853 = vand.u32 %v841, 2147483648
    %v854 = vor.u32 1.1754944e-38, %v853
    %v855 = vsel %vm852, %v854, %v850
    %v856 = vmul.f32 1.0, %v855
    %v857 = vadd.f32 %v293, %v821
    %v858 = vxor.u32 %v857, 2147483648
    %v859 = vmul.f32 %v858, 1.442695
    %v860 = vpow.pop %v859
    %v861 = vadd.f32 %v860, 1.0
    %v862 = vrcp.pop %v861
    %v863 = vmul.f32 %v861, %v862
    %v864 = vsub.f32 1.0, %v863
    %v865 = vmul.f32 %v862, %v864
    %v866 = vadd.f32 %v862, %v865
    %vm867 = vweird.f32 %v861
    %vm868 = vweird.f32 %v862
    %vm869 = vmor %vm867, %vm868
    %v870 = vsel %vm869, %v862, %v866
    %v871 = vand.u32 2147483647, %v861
    %vm872 = vcmp.eq.f32.partialorder %v871, 8.507059e+37
    %v873 = vand.u32 %v861, 2147483648
    %v874 = vor.u32 1.1754944e-38, %v873
    %v875 = vsel %vm872, %v874, %v870
    %v876 = vmul.f32 1.0, %v875
    %v877 = vmul.f32 %v856, %v834
    %v878 = vadd.f32 %v306, %v877
    %v879 = vtanh.pop %v878
    %v880 = vsub.f32 1.0, %v876
    %v881 = vmul.f32 %v880, %v879
    %v882 = vmul.f32 %v876, %v795
    %v883 = vadd.f32 %v881, %v882
    %v884 = vpack.c.bf16 %v883, %v883
    %885 = vst [vmem:[#allocation2 + $0x10] sm:$0xf] %v884
    %886 = vmatpush.bf16.msra.mxu0 %v419
    %887 = vmatpush.bf16.msra.mxu0 %v416
    %888 = vmatpush.bf16.msra.mxu0 %v413
    %889 = vmatpush.bf16.msra.mxu0 %v410
    %890 = vmatpush.bf16.msra.mxu0 %v407
    %891 = vmatpush.bf16.msra.mxu0 %v404
    %892 = vmatpush.bf16.msra.mxu0 %v401
    %893 = vmatpush.bf16.msra.mxu0 %v398
    %894 = vmatmul.bf16.gmra.mxu0 %v884
    %v895 = vpop.f32.mrf.mxu0
    %v896 = vadd.f32 %v312, %v895
    %v897 = vpop.f32.mrf.mxu0
    %898 = vdwg.mxu0
    %899 = vmatpush.bf16.msra.mxu0 %v420
    %900 = vmatpush.bf16.msra.mxu0 %v417
    %901 = vmatpush.bf16.msra.mxu0 %v414
    %902 = vmatpush.bf16.msra.mxu0 %v411
    %903 = vmatpush.bf16.msra.mxu0 %v408
    %904 = vmatpush.bf16.msra.mxu0 %v405
    %905 = vmatpush.bf16.msra.mxu0 %v402
    %906 = vmatpush.bf16.msra.mxu0 %v399
    %907 = vmatmul.bf16.gmra.mxu0 %v884
    %v908 = vpop.f32.mrf.mxu0
    %v909 = vadd.f32 %v313, %v908
    %v910 = vpop.f32.mrf.mxu0
    %911 = vdwg.mxu0
    %912 = vmatpush.bf16.msra.mxu0 %v421
    %913 = vmatpush.bf16.msra.mxu0 %v418
    %914 = vmatpush.bf16.msra.mxu0 %v415
    %915 = vmatpush.bf16.msra.mxu0 %v412
    %916 = vmatpush.bf16.msra.mxu0 %v409
    %917 = vmatpush.bf16.msra.mxu0 %v406
    %918 = vmatpush.bf16.msra.mxu0 %v403
    %919 = vmatpush.bf16.msra.mxu0 %v400
    %920 = vmatmul.bf16.gmra.mxu0 %v884
    %v921 = vpop.f32.mrf.mxu0
    %v922 = vadd.f32 %v314, %v921
    %v923 = vpop.f32.mrf.mxu0
    %924 = vdwg.mxu0
    %v925 = vadd.f32 %v280, %v896
    %v926 = vxor.u32 %v925, 2147483648
    %v927 = vmul.f32 %v926, 1.442695
    %v928 = vpow.pop %v927
    %v929 = vadd.f32 %v928, 1.0
    %v930 = vrcp.pop %v929
    %v931 = vmul.f32 %v929, %v930
    %v932 = vsub.f32 1.0, %v931
    %v933 = vmul.f32 %v930, %v932
    %v934 = vadd.f32 %v930, %v933
    %vm935 = vweird.f32 %v929
    %vm936 = vweird.f32 %v930
    %vm937 = vmor %vm935, %vm936
    %v938 = vsel %vm937, %v930, %v934
    %v939 = vand.u32 2147483647, %v929
    %vm940 = vcmp.eq.f32.partialorder %v939, 8.507059e+37
    %v941 = vand.u32 %v929, 2147483648
    %v942 = vor.u32 1.1754944e-38, %v941
    %v943 = vsel %vm940, %v942, %v938
    %v944 = vmul.f32 1.0, %v943
    %v945 = vadd.f32 %v293, %v909
    %v946 = vxor.u32 %v945, 2147483648
    %v947 = vmul.f32 %v946, 1.442695
    %v948 = vpow.pop %v947
    %v949 = vadd.f32 %v948, 1.0
    %v950 = vrcp.pop %v949
    %v951 = vmul.f32 %v949, %v950
    %v952 = vsub.f32 1.0, %v951
    %v953 = vmul.f32 %v950, %v952
    %v954 = vadd.f32 %v950, %v953
    %vm955 = vweird.f32 %v949
    %vm956 = vweird.f32 %v950
    %vm957 = vmor %vm955, %vm956
    %v958 = vsel %vm957, %v950, %v954
    %v959 = vand.u32 2147483647, %v949
    %vm960 = vcmp.eq.f32.partialorder %v959, 8.507059e+37
    %v961 = vand.u32 %v949, 2147483648
    %v962 = vor.u32 1.1754944e-38, %v961
    %v963 = vsel %vm960, %v962, %v958
    %v964 = vmul.f32 1.0, %v963
    %v965 = vmul.f32 %v944, %v922
    %v966 = vadd.f32 %v306, %v965
    %v967 = vtanh.pop %v966
    %v968 = vsub.f32 1.0, %v964
    %v969 = vmul.f32 %v968, %v967
    %v970 = vmul.f32 %v964, %v883
    %v971 = vadd.f32 %v969, %v970
    %v972 = vpack.c.bf16 %v971, %v971
    %973 = vst [vmem:[#allocation2 + $0x14] sm:$0xf] %v972
    %974 = vmatpush.bf16.msra.mxu0 %v419
    %975 = vmatpush.bf16.msra.mxu0 %v416
    %976 = vmatpush.bf16.msra.mxu0 %v413
    %977 = vmatpush.bf16.msra.mxu0 %v410
    %978 = vmatpush.bf16.msra.mxu0 %v407
    %979 = vmatpush.bf16.msra.mxu0 %v404
    %980 = vmatpush.bf16.msra.mxu0 %v401
    %981 = vmatpush.bf16.msra.mxu0 %v398
    %982 = vmatmul.bf16.gmra.mxu0 %v972
    %v983 = vpop.f32.mrf.mxu0
    %v984 = vadd.f32 %v312, %v983
    %v985 = vpop.f32.mrf.mxu0
    %986 = vdwg.mxu0
    %987 = vmatpush.bf16.msra.mxu0 %v420
    %988 = vmatpush.bf16.msra.mxu0 %v417
    %989 = vmatpush.bf16.msra.mxu0 %v414
    %990 = vmatpush.bf16.msra.mxu0 %v411
    %991 = vmatpush.bf16.msra.mxu0 %v408
    %992 = vmatpush.bf16.msra.mxu0 %v405
    %993 = vmatpush.bf16.msra.mxu0 %v402
    %994 = vmatpush.bf16.msra.mxu0 %v399
    %995 = vmatmul.bf16.gmra.mxu0 %v972
    %v996 = vpop.f32.mrf.mxu0
    %v997 = vadd.f32 %v313, %v996
    %v998 = vpop.f32.mrf.mxu0
    %999 = vdwg.mxu0
    %1000 = vmatpush.bf16.msra.mxu0 %v421
    %1001 = vmatpush.bf16.msra.mxu0 %v418
    %1002 = vmatpush.bf16.msra.mxu0 %v415
    %1003 = vmatpush.bf16.msra.mxu0 %v412
    %1004 = vmatpush.bf16.msra.mxu0 %v409
    %1005 = vmatpush.bf16.msra.mxu0 %v406
    %1006 = vmatpush.bf16.msra.mxu0 %v403
    %1007 = vmatpush.bf16.msra.mxu0 %v400
    %1008 = vmatmul.bf16.gmra.mxu0 %v972
    %v1009 = vpop.f32.mrf.mxu0
    %v1010 = vadd.f32 %v314, %v1009
    %v1011 = vpop.f32.mrf.mxu0
    %1012 = vdwg.mxu0
    %v1013 = vadd.f32 %v280, %v984
    %v1014 = vxor.u32 %v1013, 2147483648
    %v1015 = vmul.f32 %v1014, 1.442695
    %v1016 = vpow.pop %v1015
    %v1017 = vadd.f32 %v1016, 1.0
    %v1018 = vrcp.pop %v1017
    %v1019 = vmul.f32 %v1017, %v1018
    %v1020 = vsub.f32 1.0, %v1019
    %v1021 = vmul.f32 %v1018, %v1020
    %v1022 = vadd.f32 %v1018, %v1021
    %vm1023 = vweird.f32 %v1017
    %vm1024 = vweird.f32 %v1018
    %vm1025 = vmor %vm1023, %vm1024
    %v1026 = vsel %vm1025, %v1018, %v1022
    %v1027 = vand.u32 2147483647, %v1017
    %vm1028 = vcmp.eq.f32.partialorder %v1027, 8.507059e+37
    %v1029 = vand.u32 %v1017, 2147483648
    %v1030 = vor.u32 1.1754944e-38, %v1029
    %v1031 = vsel %vm1028, %v1030, %v1026
    %v1032 = vmul.f32 1.0, %v1031
    %v1033 = vadd.f32 %v293, %v997
    %v1034 = vxor.u32 %v1033, 2147483648
    %v1035 = vmul.f32 %v1034, 1.442695
    %v1036 = vpow.pop %v1035
    %v1037 = vadd.f32 %v1036, 1.0
    %v1038 = vrcp.pop %v1037
    %v1039 = vmul.f32 %v1037, %v1038
    %v1040 = vsub.f32 1.0, %v1039
    %v1041 = vmul.f32 %v1038, %v1040
    %v1042 = vadd.f32 %v1038, %v1041
    %vm1043 = vweird.f32 %v1037
    %vm1044 = vweird.f32 %v1038
    %vm1045 = vmor %vm1043, %vm1044
    %v1046 = vsel %vm1045, %v1038, %v1042
    %v1047 = vand.u32 2147483647, %v1037
    %vm1048 = vcmp.eq.f32.partialorder %v1047, 8.507059e+37
    %v1049 = vand.u32 %v1037, 2147483648
    %v1050 = vor.u32 1.1754944e-38, %v1049
    %v1051 = vsel %vm1048, %v1050, %v1046
    %v1052 = vmul.f32 1.0, %v1051
    %v1053 = vmul.f32 %v1032, %v1010
    %v1054 = vadd.f32 %v306, %v1053
    %v1055 = vtanh.pop %v1054
    %v1056 = vsub.f32 1.0, %v1052
    %v1057 = vmul.f32 %v1056, %v1055
    %v1058 = vmul.f32 %v1052, %v971
    %v1059 = vadd.f32 %v1057, %v1058
    %v1060 = vpack.c.bf16 %v1059, %v1059
    %1061 = vst [vmem:[#allocation2 + $0x18] sm:$0xf] %v1060
    %1062 = vmatpush.bf16.msra.mxu0 %v419
    %1063 = vmatpush.bf16.msra.mxu0 %v416
    %1064 = vmatpush.bf16.msra.mxu0 %v413
    %1065 = vmatpush.bf16.msra.mxu0 %v410
    %1066 = vmatpush.bf16.msra.mxu0 %v407
    %1067 = vmatpush.bf16.msra.mxu0 %v404
    %1068 = vmatpush.bf16.msra.mxu0 %v401
    %1069 = vmatpush.bf16.msra.mxu0 %v398
    %1070 = vmatmul.bf16.gmra.mxu0 %v1060
    %v1071 = vpop.f32.mrf.mxu0
    %v1072 = vadd.f32 %v312, %v1071
    %v1073 = vpop.f32.mrf.mxu0
    %1074 = vdwg.mxu0
    %1075 = vmatpush.bf16.msra.mxu0 %v420
    %1076 = vmatpush.bf16.msra.mxu0 %v417
    %1077 = vmatpush.bf16.msra.mxu0 %v414
    %1078 = vmatpush.bf16.msra.mxu0 %v411
    %1079 = vmatpush.bf16.msra.mxu0 %v408
    %1080 = vmatpush.bf16.msra.mxu0 %v405
    %1081 = vmatpush.bf16.msra.mxu0 %v402
    %1082 = vmatpush.bf16.msra.mxu0 %v399
    %1083 = vmatmul.bf16.gmra.mxu0 %v1060
    %v1084 = vpop.f32.mrf.mxu0
    %v1085 = vadd.f32 %v313, %v1084
    %v1086 = vpop.f32.mrf.mxu0
    %1087 = vdwg.mxu0
    %1088 = vmatpush.bf16.msra.mxu0 %v421
    %1089 = vmatpush.bf16.msra.mxu0 %v418
    %1090 = vmatpush.bf16.msra.mxu0 %v415
    %1091 = vmatpush.bf16.msra.mxu0 %v412
    %1092 = vmatpush.bf16.msra.mxu0 %v409
    %1093 = vmatpush.bf16.msra.mxu0 %v406
    %1094 = vmatpush.bf16.msra.mxu0 %v403
    %1095 = vmatpush.bf16.msra.mxu0 %v400
    %1096 = vmatmul.bf16.gmra.mxu0 %v1060
    %v1097 = vpop.f32.mrf.mxu0
    %v1098 = vadd.f32 %v314, %v1097
    %v1099 = vpop.f32.mrf.mxu0
    %1100 = vdwg.mxu0
    %v1101 = vadd.f32 %v280, %v1072
    %v1102 = vxor.u32 %v1101, 2147483648
    %v1103 = vmul.f32 %v1102, 1.442695
    %v1104 = vpow.pop %v1103
    %v1105 = vadd.f32 %v1104, 1.0
    %v1106 = vrcp.pop %v1105
    %v1107 = vmul.f32 %v1105, %v1106
    %v1108 = vsub.f32 1.0, %v1107
    %v1109 = vmul.f32 %v1106, %v1108
    %v1110 = vadd.f32 %v1106, %v1109
    %vm1111 = vweird.f32 %v1105
    %vm1112 = vweird.f32 %v1106
    %vm1113 = vmor %vm1111, %vm1112
    %v1114 = vsel %vm1113, %v1106, %v1110
    %v1115 = vand.u32 2147483647, %v1105
    %vm1116 = vcmp.eq.f32.partialorder %v1115, 8.507059e+37
    %v1117 = vand.u32 %v1105, 2147483648
    %v1118 = vor.u32 1.1754944e-38, %v1117
    %v1119 = vsel %vm1116, %v1118, %v1114
    %v1120 = vmul.f32 1.0, %v1119
    %v1121 = vadd.f32 %v293, %v1085
    %v1122 = vxor.u32 %v1121, 2147483648
    %v1123 = vmul.f32 %v1122, 1.442695
    %v1124 = vpow.pop %v1123
    %v1125 = vadd.f32 %v1124, 1.0
    %v1126 = vrcp.pop %v1125
    %v1127 = vmul.f32 %v1125, %v1126
    %v1128 = vsub.f32 1.0, %v1127
    %v1129 = vmul.f32 %v1126, %v1128
    %v1130 = vadd.f32 %v1126, %v1129
    %vm1131 = vweird.f32 %v1125
    %vm1132 = vweird.f32 %v1126
    %vm1133 = vmor %vm1131, %vm1132
    %v1134 = vsel %vm1133, %v1126, %v1130
    %v1135 = vand.u32 2147483647, %v1125
    %vm1136 = vcmp.eq.f32.partialorder %v1135, 8.507059e+37
    %v1137 = vand.u32 %v1125, 2147483648
    %v1138 = vor.u32 1.1754944e-38, %v1137
    %v1139 = vsel %vm1136, %v1138, %v1134
    %v1140 = vmul.f32 1.0, %v1139
    %v1141 = vmul.f32 %v1120, %v1098
    %v1142 = vadd.f32 %v306, %v1141
    %v1143 = vtanh.pop %v1142
    %v1144 = vsub.f32 1.0, %v1140
    %v1145 = vmul.f32 %v1144, %v1143
    %v1146 = vmul.f32 %v1140, %v1059
    %v1147 = vadd.f32 %v1145, %v1146
    %v1148 = vpack.c.bf16 %v1147, %v1147
    %1149 = vst [vmem:[#allocation2 + $0x1c] sm:$0xf] %v1148
    %v1150 = vld [vmem:[#allocation10] sm:$0xff]
    %v1151 = vld [vmem:[#allocation10 + $0x8] sm:$0xf]
    %v1152 = vld [vmem:[#allocation10 + $0xc] sm:$0xff]
    %v1153 = vld [vmem:[#allocation10 + $0x14] sm:$0xf]
    %v1154 = vld [vmem:[#allocation10 + $0x18] sm:$0xff]
    %v1155 = vld [vmem:[#allocation10 + $0x20] sm:$0xf]
    %v1156 = vld [vmem:[#allocation10 + $0x24] sm:$0xff]
    %v1157 = vld [vmem:[#allocation10 + $0x2c] sm:$0xf]
    %v1158 = vld [vmem:[#allocation10 + $0x30] sm:$0xff]
    %v1159 = vld [vmem:[#allocation10 + $0x38] sm:$0xf]
    %v1160 = vld [vmem:[#allocation10 + $0x3c] sm:$0xff]
    %v1161 = vld [vmem:[#allocation10 + $0x44] sm:$0xf]
    %v1162 = vld [vmem:[#allocation10 + $0x48] sm:$0xff]
    %v1163 = vld [vmem:[#allocation10 + $0x50] sm:$0xf]
    %v1164 = vld [vmem:[#allocation10 + $0x54] sm:$0xff]
    %v1165 = vld [vmem:[#allocation10 + $0x5c] sm:$0xf]
    %v1166 = vld [vmem:[#allocation10 + $0x60] sm:$0xff]
    %v1167 = vld [vmem:[#allocation10 + $0x68] sm:$0xf]
    %v1168 = vld [vmem:[#allocation10 + $0x6c] sm:$0xff]
    %v1169 = vld [vmem:[#allocation10 + $0x74] sm:$0xf]
    %v1170 = vld [vmem:[#allocation10 + $0x78] sm:$0xff]
    %v1171 = vld [vmem:[#allocation10 + $0x80] sm:$0xf]
    %v1172 = vld [vmem:[#allocation10 + $0x84] sm:$0xff]
    %v1173 = vld [vmem:[#allocation10 + $0x8c] sm:$0xf]
    %v1174 = vld [vmem:[#allocation10 + $0x90] sm:$0xff]
    %v1175 = vld [vmem:[#allocation10 + $0x98] sm:$0xf]
    %v1176 = vld [vmem:[#allocation10 + $0x9c] sm:$0xff]
    %v1177 = vld [vmem:[#allocation10 + $0xa4] sm:$0xf]
    %v1178 = vld [vmem:[#allocation10 + $0xa8] sm:$0xff]
    %v1179 = vld [vmem:[#allocation10 + $0xb0] sm:$0xf]
    %v1180 = vld [vmem:[#allocation10 + $0xb4] sm:$0xff]
    %v1181 = vld [vmem:[#allocation10 + $0xbc] sm:$0xf]
    %v1182 = vld [vmem:[#allocation10 + $0xc0] sm:$0xff]
    %v1183 = vld [vmem:[#allocation10 + $0xc8] sm:$0xf]
    %v1184 = vld [vmem:[#allocation10 + $0xcc] sm:$0xff]
    %v1185 = vld [vmem:[#allocation10 + $0xd4] sm:$0xf]
    %v1186 = vld [vmem:[#allocation10 + $0xd8] sm:$0xff]
    %v1187 = vld [vmem:[#allocation10 + $0xe0] sm:$0xf]
    %v1188 = vld [vmem:[#allocation10 + $0xe4] sm:$0xff]
    %v1189 = vld [vmem:[#allocation10 + $0xec] sm:$0xf]
    %v1190 = vld [vmem:[#allocation10 + $0xf0] sm:$0xff]
    %v1191 = vld [vmem:[#allocation10 + $0xf8] sm:$0xf]
    %v1192 = vld [vmem:[#allocation10 + $0xfc] sm:$0xff]
    %v1193 = vld [vmem:[#allocation10 + $0x104] sm:$0xf]
    %v1194 = vld [vmem:[#allocation10 + $0x108] sm:$0xff]
    %v1195 = vld [vmem:[#allocation10 + $0x110] sm:$0xf]
    %v1196 = vld [vmem:[#allocation10 + $0x114] sm:$0xff]
    %v1197 = vld [vmem:[#allocation10 + $0x11c] sm:$0xf]
    %v1198 = vld [vmem:[#allocation10 + $0x120] sm:$0xff]
    %v1199 = vld [vmem:[#allocation10 + $0x128] sm:$0xf]
    %v1200 = vld [vmem:[#allocation10 + $0x12c] sm:$0xff]
    %v1201 = vld [vmem:[#allocation10 + $0x134] sm:$0xf]
    %v1202 = vld [vmem:[#allocation10 + $0x138] sm:$0xff]
    %v1203 = vld [vmem:[#allocation10 + $0x140] sm:$0xf]
    %v1204 = vld [vmem:[#allocation10 + $0x144] sm:$0xff]
    %v1205 = vld [vmem:[#allocation10 + $0x14c] sm:$0xf]
    %v1206 = vld [vmem:[#allocation10 + $0x150] sm:$0xff]
    %v1207 = vld [vmem:[#allocation10 + $0x158] sm:$0xf]
    %v1208 = vld [vmem:[#allocation10 + $0x15c] sm:$0xff]
    %v1209 = vld [vmem:[#allocation10 + $0x164] sm:$0xf]
    %v1210 = vld [vmem:[#allocation10 + $0x168] sm:$0xff]
    %v1211 = vld [vmem:[#allocation10 + $0x170] sm:$0xf]
    %v1212 = vld [vmem:[#allocation10 + $0x174] sm:$0xff]
    %v1213 = vld [vmem:[#allocation10 + $0x17c] sm:$0xf]
    %v1214 = vld [vmem:[#allocation2] sm:$0xf]
    %v1215 = vld [vmem:[#allocation2 + $0x4] sm:$0xf]
    %v1216 = vld [vmem:[#allocation2 + $0x8] sm:$0xf]
    %v1217 = vld [vmem:[#allocation2 + $0xc] sm:$0xf]
    %v1218 = vld [vmem:[#allocation2 + $0x10] sm:$0xf]
    %v1219 = vld [vmem:[#allocation2 + $0x14] sm:$0xf]
    %v1220 = vld [vmem:[#allocation2 + $0x18] sm:$0xf]
    %v1221 = vld [vmem:[#allocation2 + $0x1c] sm:$0xf]
    %s1222 = scalar_lea.vmem [#allocation13], 2
    %v1223 = vld [vmem:[%s1222] ss:$8 sm:$0x7]
    %v1225 = vperm.slane %v1223, 0
    %v1226 = vperm.slane %v1223, 1
    %v1227 = vperm.slane %v1223, 2
    %v1239 = vunpack.c.l.b16 %v1214
    %v1240 = vunpack.c.l.b16 %v1215
    %v1241 = vunpack.c.l.b16 %v1216
    %v1242 = vunpack.c.l.b16 %v1217
    %v1243 = vunpack.c.l.b16 %v1218
    %v1244 = vunpack.c.l.b16 %v1219
    %v1245 = vunpack.c.l.b16 %v1220
    %v1246 = vunpack.c.l.b16 %v1221
    %v1247 = vpack.c.b16 %v1240, %v1239
    %v1248 = vpack.c.b16 %v1242, %v1241
    %v1249 = vpack.c.b16 %v1244, %v1243
    %v1250 = vpack.c.b16 %v1246, %v1245
    %v1287 = vunpack.c.l.b16 %v1150
    %v1288 = vunpack.c.h.b16 %v1150
    %v1289 = vunpack.c.l.b16 %v1151
    %v1290 = vunpack.c.l.b16 %v1152
    %v1291 = vunpack.c.h.b16 %v1152
    %v1292 = vunpack.c.l.b16 %v1153
    %v1293 = vunpack.c.l.b16 %v1154
    %v1294 = vunpack.c.h.b16 %v1154
    %v1295 = vunpack.c.l.b16 %v1155
    %v1296 = vunpack.c.l.b16 %v1156
    %v1297 = vunpack.c.h.b16 %v1156
    %v1298 = vunpack.c.l.b16 %v1157
    %v1299 = vunpack.c.l.b16 %v1158
    %v1300 = vunpack.c.h.b16 %v1158
    %v1301 = vunpack.c.l.b16 %v1159
    %v1302 = vunpack.c.l.b16 %v1160
    %v1303 = vunpack.c.h.b16 %v1160
    %v1304 = vunpack.c.l.b16 %v1161
    %v1305 = vunpack.c.l.b16 %v1162
    %v1306 = vunpack.c.h.b16 %v1162
    %v1307 = vunpack.c.l.b16 %v1163
    %v1308 = vunpack.c.l.b16 %v1164
    %v1309 = vunpack.c.h.b16 %v1164
    %v1310 = vunpack.c.l.b16 %v1165
    %v1311 = vunpack.c.l.b16 %v1166
    %v1312 = vunpack.c.h.b16 %v1166
    %v1313 = vunpack.c.l.b16 %v1167
    %v1314 = vunpack.c.l.b16 %v1168
    %v1315 = vunpack.c.h.b16 %v1168
    %v1316 = vunpack.c.l.b16 %v1169
    %v1317 = vunpack.c.l.b16 %v1170
    %v1318 = vunpack.c.h.b16 %v1170
    %v1319 = vunpack.c.l.b16 %v1171
    %v1320 = vunpack.c.l.b16 %v1172
    %v1321 = vunpack.c.h.b16 %v1172
    %v1322 = vunpack.c.l.b16 %v1173
    %v1323 = vunpack.c.l.b16 %v1174
    %v1324 = vunpack.c.h.b16 %v1174
    %v1325 = vunpack.c.l.b16 %v1175
    %v1326 = vunpack.c.l.b16 %v1176
    %v1327 = vunpack.c.h.b16 %v1176
    %v1328 = vunpack.c.l.b16 %v1177
    %v1329 = vunpack.c.l.b16 %v1178
    %v1330 = vunpack.c.h.b16 %v1178
    %v1331 = vunpack.c.l.b16 %v1179
    %v1332 = vunpack.c.l.b16 %v1180
    %v1333 = vunpack.c.h.b16 %v1180
    %v1334 = vunpack.c.l.b16 %v1181
    %v1335 = vpack.c.b16 %v1290, %v1287
    %v1336 = vpack.c.b16 %v1291, %v1288
    %v1337 = vpack.c.b16 %v1292, %v1289
    %v1338 = vpack.c.b16 %v1296, %v1293
    %v1339 = vpack.c.b16 %v1297, %v1294
    %v1340 = vpack.c.b16 %v1298, %v1295
    %v1341 = vpack.c.b16 %v1302, %v1299
    %v1342 = vpack.c.b16 %v1303, %v1300
    %v1343 = vpack.c.b16 %v1304, %v1301
    %v1344 = vpack.c.b16 %v1308, %v1305
    %v1345 = vpack.c.b16 %v1309, %v1306
    %v1346 = vpack.c.b16 %v1310, %v1307
    %v1347 = vpack.c.b16 %v1314, %v1311
    %v1348 = vpack.c.b16 %v1315, %v1312
    %v1349 = vpack.c.b16 %v1316, %v1313
    %v1350 = vpack.c.b16 %v1320, %v1317
    %v1351 = vpack.c.b16 %v1321, %v1318
    %v1352 = vpack.c.b16 %v1322, %v1319
    %v1353 = vpack.c.b16 %v1326, %v1323
    %v1354 = vpack.c.b16 %v1327, %v1324
    %v1355 = vpack.c.b16 %v1328, %v1325
    %v1356 = vpack.c.b16 %v1332, %v1329
    %v1357 = vpack.c.b16 %v1333, %v1330
    %v1358 = vpack.c.b16 %v1334, %v1331
    %1383 = vmatpush.bf16.msra.mxu0 %v1356
    %1384 = vmatpush.bf16.msra.mxu0 %v1353
    %1385 = vmatpush.bf16.msra.mxu0 %v1350
    %1386 = vmatpush.bf16.msra.mxu0 %v1347
    %1387 = vmatpush.bf16.msra.mxu0 %v1344
    %1388 = vmatpush.bf16.msra.mxu0 %v1341
    %1389 = vmatpush.bf16.msra.mxu0 %v1338
    %1390 = vmatpush.bf16.msra.mxu0 %v1335
    %1391 = vmatmul.bf16.gmra.mxu0 %v1247
    %v1392 = vpop.f32.mrf.mxu0
    %v1393 = vadd.f32 %v1225, %v1392
    %v1394 = vpop.f32.mrf.mxu0
    %v1395 = vadd.f32 %v1225, %v1394
    %1396 = vmatmul.bf16.gmra.mxu0 %v1248
    %v1397 = vpop.f32.mrf.mxu0
    %v1398 = vadd.f32 %v1225, %v1397
    %v1399 = vpop.f32.mrf.mxu0
    %v1400 = vadd.f32 %v1225, %v1399
    %1401 = vmatmul.bf16.gmra.mxu0 %v1249
    %v1402 = vpop.f32.mrf.mxu0
    %v1403 = vadd.f32 %v1225, %v1402
    %v1404 = vpop.f32.mrf.mxu0
    %v1405 = vadd.f32 %v1225, %v1404
    %1406 = vmatmul.bf16.gmra.mxu0 %v1250
    %v1407 = vpop.f32.mrf.mxu0
    %v1408 = vadd.f32 %v1225, %v1407
    %v1409 = vpop.f32.mrf.mxu0
    %v1410 = vadd.f32 %v1225, %v1409
    %1411 = vdwg.mxu0
    %1412 = vmatpush.bf16.msra.mxu0 %v1357
    %1413 = vmatpush.bf16.msra.mxu0 %v1354
    %1414 = vmatpush.bf16.msra.mxu0 %v1351
    %1415 = vmatpush.bf16.msra.mxu0 %v1348
    %1416 = vmatpush.bf16.msra.mxu0 %v1345
    %1417 = vmatpush.bf16.msra.mxu0 %v1342
    %1418 = vmatpush.bf16.msra.mxu0 %v1339
    %1419 = vmatpush.bf16.msra.mxu0 %v1336
    %1420 = vmatmul.bf16.gmra.mxu0 %v1247
    %v1421 = vpop.f32.mrf.mxu0
    %v1422 = vadd.f32 %v1226, %v1421
    %v1423 = vpop.f32.mrf.mxu0
    %v1424 = vadd.f32 %v1226, %v1423
    %1425 = vmatmul.bf16.gmra.mxu0 %v1248
    %v1426 = vpop.f32.mrf.mxu0
    %v1427 = vadd.f32 %v1226, %v1426
    %v1428 = vpop.f32.mrf.mxu0
    %v1429 = vadd.f32 %v1226, %v1428
    %1430 = vmatmul.bf16.gmra.mxu0 %v1249
    %v1431 = vpop.f32.mrf.mxu0
    %v1432 = vadd.f32 %v1226, %v1431
    %v1433 = vpop.f32.mrf.mxu0
    %v1434 = vadd.f32 %v1226, %v1433
    %1435 = vmatmul.bf16.gmra.mxu0 %v1250
    %v1436 = vpop.f32.mrf.mxu0
    %v1437 = vadd.f32 %v1226, %v1436
    %v1438 = vpop.f32.mrf.mxu0
    %v1439 = vadd.f32 %v1226, %v1438
    %1440 = vdwg.mxu0
    %1441 = vmatpush.bf16.msra.mxu0 %v1358
    %1442 = vmatpush.bf16.msra.mxu0 %v1355
    %1443 = vmatpush.bf16.msra.mxu0 %v1352
    %1444 = vmatpush.bf16.msra.mxu0 %v1349
    %1445 = vmatpush.bf16.msra.mxu0 %v1346
    %1446 = vmatpush.bf16.msra.mxu0 %v1343
    %1447 = vmatpush.bf16.msra.mxu0 %v1340
    %1448 = vmatpush.bf16.msra.mxu0 %v1337
    %1449 = vmatmul.bf16.gmra.mxu0 %v1247
    %v1450 = vpop.f32.mrf.mxu0
    %v1451 = vadd.f32 %v1227, %v1450
    %v1452 = vpop.f32.mrf.mxu0
    %v1453 = vadd.f32 %v1227, %v1452
    %1454 = vmatmul.bf16.gmra.mxu0 %v1248
    %v1455 = vpop.f32.mrf.mxu0
    %v1456 = vadd.f32 %v1227, %v1455
    %v1457 = vpop.f32.mrf.mxu0
    %v1458 = vadd.f32 %v1227, %v1457
    %1459 = vmatmul.bf16.gmra.mxu0 %v1249
    %v1460 = vpop.f32.mrf.mxu0
    %v1461 = vadd.f32 %v1227, %v1460
    %v1462 = vpop.f32.mrf.mxu0
    %v1463 = vadd.f32 %v1227, %v1462
    %1464 = vmatmul.bf16.gmra.mxu0 %v1250
    %v1465 = vpop.f32.mrf.mxu0
    %v1466 = vadd.f32 %v1227, %v1465
    %v1467 = vpop.f32.mrf.mxu0
    %v1468 = vadd.f32 %v1227, %v1467
    %1469 = vdwg.mxu0
    %1470 = vst [vmem:[#allocation3] sm:$0xff] %v1393
    %1471 = vst [vmem:[#allocation3 + $0x8] sm:$0xff] %v1422
    %1472 = vst [vmem:[#allocation3 + $0x10] sm:$0xff] %v1451
    %1473 = vst [vmem:[#allocation3 + $0x18] sm:$0xff] %v1395
    %1474 = vst [vmem:[#allocation3 + $0x20] sm:$0xff] %v1424
    %1475 = vst [vmem:[#allocation3 + $0x28] sm:$0xff] %v1453
    %1476 = vst [vmem:[#allocation3 + $0x30] sm:$0xff] %v1398
    %1477 = vst [vmem:[#allocation3 + $0x38] sm:$0xff] %v1427
    %1478 = vst [vmem:[#allocation3 + $0x40] sm:$0xff] %v1456
    %1479 = vst [vmem:[#allocation3 + $0x48] sm:$0xff] %v1400
    %1480 = vst [vmem:[#allocation3 + $0x50] sm:$0xff] %v1429
    %1481 = vst [vmem:[#allocation3 + $0x58] sm:$0xff] %v1458
    %1482 = vst [vmem:[#allocation3 + $0x60] sm:$0xff] %v1403
    %1483 = vst [vmem:[#allocation3 + $0x68] sm:$0xff] %v1432
    %1484 = vst [vmem:[#allocation3 + $0x70] sm:$0xff] %v1461
    %1485 = vst [vmem:[#allocation3 + $0x78] sm:$0xff] %v1405
    %1486 = vst [vmem:[#allocation3 + $0x80] sm:$0xff] %v1434
    %1487 = vst [vmem:[#allocation3 + $0x88] sm:$0xff] %v1463
    %1488 = vst [vmem:[#allocation3 + $0x90] sm:$0xff] %v1408
    %1489 = vst [vmem:[#allocation3 + $0x98] sm:$0xff] %v1437
    %1490 = vst [vmem:[#allocation3 + $0xa0] sm:$0xff] %v1466
    %1491 = vst [vmem:[#allocation3 + $0xa8] sm:$0xff] %v1410
    %1492 = vst [vmem:[#allocation3 + $0xb0] sm:$0xff] %v1439
    %1493 = vst [vmem:[#allocation3 + $0xb8] sm:$0xff] %v1468
    %s1494 = scalar_lea.vmem [#allocation13], 3
    %v1495 = vld [vmem:[%s1494] ss:$8 sm:$0x7]
    %v1497 = vperm.slane %v1495, 0
    %v1498 = vperm.slane %v1495, 1
    %v1499 = vperm.slane %v1495, 2
    %v1503 = vld [vmem:[#allocation3] sm:$0xff]
    %v1504 = vld [vmem:[#allocation3 + $0x8] sm:$0xff]
    %v1505 = vld [vmem:[#allocation3 + $0x10] sm:$0xff]
    %v1538 = vunpack.c.l.b16 %v1182
    %v1539 = vunpack.c.h.b16 %v1182
    %v1540 = vunpack.c.l.b16 %v1183
    %v1541 = vunpack.c.l.b16 %v1184
    %v1542 = vunpack.c.h.b16 %v1184
    %v1543 = vunpack.c.l.b16 %v1185
    %v1544 = vunpack.c.l.b16 %v1186
    %v1545 = vunpack.c.h.b16 %v1186
    %v1546 = vunpack.c.l.b16 %v1187
    %v1547 = vunpack.c.l.b16 %v1188
    %v1548 = vunpack.c.h.b16 %v1188
    %v1549 = vunpack.c.l.b16 %v1189
    %v1550 = vunpack.c.l.b16 %v1190
    %v1551 = vunpack.c.h.b16 %v1190
    %v1552 = vunpack.c.l.b16 %v1191
    %v1553 = vunpack.c.l.b16 %v1192
    %v1554 = vunpack.c.h.b16 %v1192
    %v1555 = vunpack.c.l.b16 %v1193
    %v1556 = vunpack.c.l.b16 %v1194
    %v1557 = vunpack.c.h.b16 %v1194
    %v1558 = vunpack.c.l.b16 %v1195
    %v1559 = vunpack.c.l.b16 %v1196
    %v1560 = vunpack.c.h.b16 %v1196
    %v1561 = vunpack.c.l.b16 %v1197
    %v1562 = vunpack.c.l.b16 %v1198
    %v1563 = vunpack.c.h.b16 %v1198
    %v1564 = vunpack.c.l.b16 %v1199
    %v1565 = vunpack.c.l.b16 %v1200
    %v1566 = vunpack.c.h.b16 %v1200
    %v1567 = vunpack.c.l.b16 %v1201
    %v1568 = vunpack.c.l.b16 %v1202
    %v1569 = vunpack.c.h.b16 %v1202
    %v1570 = vunpack.c.l.b16 %v1203
    %v1571 = vunpack.c.l.b16 %v1204
    %v1572 = vunpack.c.h.b16 %v1204
    %v1573 = vunpack.c.l.b16 %v1205
    %v1574 = vunpack.c.l.b16 %v1206
    %v1575 = vunpack.c.h.b16 %v1206
    %v1576 = vunpack.c.l.b16 %v1207
    %v1577 = vunpack.c.l.b16 %v1208
    %v1578 = vunpack.c.h.b16 %v1208
    %v1579 = vunpack.c.l.b16 %v1209
    %v1580 = vunpack.c.l.b16 %v1210
    %v1581 = vunpack.c.h.b16 %v1210
    %v1582 = vunpack.c.l.b16 %v1211
    %v1583 = vunpack.c.l.b16 %v1212
    %v1584 = vunpack.c.h.b16 %v1212
    %v1585 = vunpack.c.l.b16 %v1213
    %v1586 = vpack.c.b16 %v1541, %v1538
    %v1587 = vpack.c.b16 %v1542, %v1539
    %v1588 = vpack.c.b16 %v1543, %v1540
    %v1589 = vpack.c.b16 %v1547, %v1544
    %v1590 = vpack.c.b16 %v1548, %v1545
    %v1591 = vpack.c.b16 %v1549, %v1546
    %v1592 = vpack.c.b16 %v1553, %v1550
    %v1593 = vpack.c.b16 %v1554, %v1551
    %v1594 = vpack.c.b16 %v1555, %v1552
    %v1595 = vpack.c.b16 %v1559, %v1556
    %v1596 = vpack.c.b16 %v1560, %v1557
    %v1597 = vpack.c.b16 %v1561, %v1558
    %v1598 = vpack.c.b16 %v1565, %v1562
    %v1599 = vpack.c.b16 %v1566, %v1563
    %v1600 = vpack.c.b16 %v1567, %v1564
    %v1601 = vpack.c.b16 %v1571, %v1568
    %v1602 = vpack.c.b16 %v1572, %v1569
    %v1603 = vpack.c.b16 %v1573, %v1570
    %v1604 = vpack.c.b16 %v1577, %v1574
    %v1605 = vpack.c.b16 %v1578, %v1575
    %v1606 = vpack.c.b16 %v1579, %v1576
    %v1607 = vpack.c.b16 %v1583, %v1580
    %v1608 = vpack.c.b16 %v1584, %v1581
    %v1609 = vpack.c.b16 %v1585, %v1582
    %1634 = vmatpush.bf16.msra.mxu0 %v1607
    %1635 = vmatpush.bf16.msra.mxu0 %v1604
    %1636 = vmatpush.bf16.msra.mxu0 %v1601
    %1637 = vmatpush.bf16.msra.mxu0 %v1598
    %1638 = vmatpush.bf16.msra.mxu0 %v1595
    %1639 = vmatpush.bf16.msra.mxu0 %v1592
    %1640 = vmatpush.bf16.msra.mxu0 %v1589
    %1641 = vmatpush.bf16.msra.mxu0 %v1586
    %1642 = vmatmul.bf16.gmra.mxu0 0
    %v1643 = vpop.f32.mrf.mxu0
    %v1644 = vadd.f32 %v1497, %v1643
    %v1645 = vpop.f32.mrf.mxu0
    %1646 = vdwg.mxu0
    %1647 = vmatpush.bf16.msra.mxu0 %v1608
    %1648 = vmatpush.bf16.msra.mxu0 %v1605
    %1649 = vmatpush.bf16.msra.mxu0 %v1602
    %1650 = vmatpush.bf16.msra.mxu0 %v1599
    %1651 = vmatpush.bf16.msra.mxu0 %v1596
    %1652 = vmatpush.bf16.msra.mxu0 %v1593
    %1653 = vmatpush.bf16.msra.mxu0 %v1590
    %1654 = vmatpush.bf16.msra.mxu0 %v1587
    %1655 = vmatmul.bf16.gmra.mxu0 0
    %v1656 = vpop.f32.mrf.mxu0
    %v1657 = vadd.f32 %v1498, %v1656
    %v1658 = vpop.f32.mrf.mxu0
    %1659 = vdwg.mxu0
    %1660 = vmatpush.bf16.msra.mxu0 %v1609
    %1661 = vmatpush.bf16.msra.mxu0 %v1606
    %1662 = vmatpush.bf16.msra.mxu0 %v1603
    %1663 = vmatpush.bf16.msra.mxu0 %v1600
    %1664 = vmatpush.bf16.msra.mxu0 %v1597
    %1665 = vmatpush.bf16.msra.mxu0 %v1594
    %1666 = vmatpush.bf16.msra.mxu0 %v1591
    %1667 = vmatpush.bf16.msra.mxu0 %v1588
    %1668 = vmatmul.bf16.gmra.mxu0 0
    %v1669 = vpop.f32.mrf.mxu0
    %v1670 = vadd.f32 %v1499, %v1669
    %v1671 = vpop.f32.mrf.mxu0
    %1672 = vdwg.mxu0
    %v1673 = vadd.f32 %v1503, %v1644
    %v1674 = vxor.u32 %v1673, 2147483648
    %v1675 = vmul.f32 %v1674, 1.442695
    %v1676 = vpow.pop %v1675
    %v1677 = vadd.f32 %v1676, 1.0
    %v1678 = vrcp.pop %v1677
    %v1679 = vmul.f32 %v1677, %v1678
    %v1680 = vsub.f32 1.0, %v1679
    %v1681 = vmul.f32 %v1678, %v1680
    %v1682 = vadd.f32 %v1678, %v1681
    %vm1683 = vweird.f32 %v1677
    %vm1684 = vweird.f32 %v1678
    %vm1685 = vmor %vm1683, %vm1684
    %v1686 = vsel %vm1685, %v1678, %v1682
    %v1687 = vand.u32 2147483647, %v1677
    %vm1688 = vcmp.eq.f32.partialorder %v1687, 8.507059e+37
    %v1689 = vand.u32 %v1677, 2147483648
    %v1690 = vor.u32 1.1754944e-38, %v1689
    %v1691 = vsel %vm1688, %v1690, %v1686
    %v1692 = vmul.f32 1.0, %v1691
    %v1693 = vadd.f32 %v1504, %v1657
    %v1694 = vxor.u32 %v1693, 2147483648
    %v1695 = vmul.f32 %v1694, 1.442695
    %v1696 = vpow.pop %v1695
    %v1697 = vadd.f32 %v1696, 1.0
    %v1698 = vrcp.pop %v1697
    %v1699 = vmul.f32 %v1697, %v1698
    %v1700 = vsub.f32 1.0, %v1699
    %v1701 = vmul.f32 %v1698, %v1700
    %v1702 = vadd.f32 %v1698, %v1701
    %vm1703 = vweird.f32 %v1697
    %vm1704 = vweird.f32 %v1698
    %vm1705 = vmor %vm1703, %vm1704
    %v1706 = vsel %vm1705, %v1698, %v1702
    %v1707 = vand.u32 2147483647, %v1697
    %vm1708 = vcmp.eq.f32.partialorder %v1707, 8.507059e+37
    %v1709 = vand.u32 %v1697, 2147483648
    %v1710 = vor.u32 1.1754944e-38, %v1709
    %v1711 = vsel %vm1708, %v1710, %v1706
    %v1712 = vmul.f32 1.0, %v1711
    %v1713 = vmul.f32 %v1692, %v1670
    %v1714 = vadd.f32 %v1505, %v1713
    %v1715 = vtanh.pop %v1714
    %v1716 = vsub.f32 1.0, %v1712
    %v1717 = vmul.f32 %v1716, %v1715
    %v1718 = vmul.f32 %v1712, 0.0
    %v1719 = vadd.f32 %v1717, %v1718
    %v1720 = vpack.c.bf16 %v1719, %v1719
    %1721 = vst [vmem:[#allocation2] sm:$0xf] %v1720
    %v1722 = vld [vmem:[#allocation3 + $0x18] sm:$0xff]
    %v1723 = vld [vmem:[#allocation3 + $0x20] sm:$0xff]
    %v1724 = vld [vmem:[#allocation3 + $0x28] sm:$0xff]
    %1725 = vmatpush.bf16.msra.mxu0 %v1607
    %1726 = vmatpush.bf16.msra.mxu0 %v1604
    %1727 = vmatpush.bf16.msra.mxu0 %v1601
    %1728 = vmatpush.bf16.msra.mxu0 %v1598
    %1729 = vmatpush.bf16.msra.mxu0 %v1595
    %1730 = vmatpush.bf16.msra.mxu0 %v1592
    %1731 = vmatpush.bf16.msra.mxu0 %v1589
    %1732 = vmatpush.bf16.msra.mxu0 %v1586
    %1733 = vmatmul.bf16.gmra.mxu0 %v1720
    %v1734 = vpop.f32.mrf.mxu0
    %v1735 = vadd.f32 %v1497, %v1734
    %v1736 = vpop.f32.mrf.mxu0
    %1737 = vdwg.mxu0
    %1738 = vmatpush.bf16.msra.mxu0 %v1608
    %1739 = vmatpush.bf16.msra.mxu0 %v1605
    %1740 = vmatpush.bf16.msra.mxu0 %v1602
    %1741 = vmatpush.bf16.msra.mxu0 %v1599
    %1742 = vmatpush.bf16.msra.mxu0 %v1596
    %1743 = vmatpush.bf16.msra.mxu0 %v1593
    %1744 = vmatpush.bf16.msra.mxu0 %v1590
    %1745 = vmatpush.bf16.msra.mxu0 %v1587
    %1746 = vmatmul.bf16.gmra.mxu0 %v1720
    %v1747 = vpop.f32.mrf.mxu0
    %v1748 = vadd.f32 %v1498, %v1747
    %v1749 = vpop.f32.mrf.mxu0
    %1750 = vdwg.mxu0
    %1751 = vmatpush.bf16.msra.mxu0 %v1609
    %1752 = vmatpush.bf16.msra.mxu0 %v1606
    %1753 = vmatpush.bf16.msra.mxu0 %v1603
    %1754 = vmatpush.bf16.msra.mxu0 %v1600
    %1755 = vmatpush.bf16.msra.mxu0 %v1597
    %1756 = vmatpush.bf16.msra.mxu0 %v1594
    %1757 = vmatpush.bf16.msra.mxu0 %v1591
    %1758 = vmatpush.bf16.msra.mxu0 %v1588
    %1759 = vmatmul.bf16.gmra.mxu0 %v1720
    %v1760 = vpop.f32.mrf.mxu0
    %v1761 = vadd.f32 %v1499, %v1760
    %v1762 = vpop.f32.mrf.mxu0
    %1763 = vdwg.mxu0
    %v1764 = vadd.f32 %v1722, %v1735
    %v1765 = vxor.u32 %v1764, 2147483648
    %v1766 = vmul.f32 %v1765, 1.442695
    %v1767 = vpow.pop %v1766
    %v1768 = vadd.f32 %v1767, 1.0
    %v1769 = vrcp.pop %v1768
    %v1770 = vmul.f32 %v1768, %v1769
    %v1771 = vsub.f32 1.0, %v1770
    %v1772 = vmul.f32 %v1769, %v1771
    %v1773 = vadd.f32 %v1769, %v1772
    %vm1774 = vweird.f32 %v1768
    %vm1775 = vweird.f32 %v1769
    %vm1776 = vmor %vm1774, %vm1775
    %v1777 = vsel %vm1776, %v1769, %v1773
    %v1778 = vand.u32 2147483647, %v1768
    %vm1779 = vcmp.eq.f32.partialorder %v1778, 8.507059e+37
    %v1780 = vand.u32 %v1768, 2147483648
    %v1781 = vor.u32 1.1754944e-38, %v1780
    %v1782 = vsel %vm1779, %v1781, %v1777
    %v1783 = vmul.f32 1.0, %v1782
    %v1784 = vadd.f32 %v1723, %v1748
    %v1785 = vxor.u32 %v1784, 2147483648
    %v1786 = vmul.f32 %v1785, 1.442695
    %v1787 = vpow.pop %v1786
    %v1788 = vadd.f32 %v1787, 1.0
    %v1789 = vrcp.pop %v1788
    %v1790 = vmul.f32 %v1788, %v1789
    %v1791 = vsub.f32 1.0, %v1790
    %v1792 = vmul.f32 %v1789, %v1791
    %v1793 = vadd.f32 %v1789, %v1792
    %vm1794 = vweird.f32 %v1788
    %vm1795 = vweird.f32 %v1789
    %vm1796 = vmor %vm1794, %vm1795
    %v1797 = vsel %vm1796, %v1789, %v1793
    %v1798 = vand.u32 2147483647, %v1788
    %vm1799 = vcmp.eq.f32.partialorder %v1798, 8.507059e+37
    %v1800 = vand.u32 %v1788, 2147483648
    %v1801 = vor.u32 1.1754944e-38, %v1800
    %v1802 = vsel %vm1799, %v1801, %v1797
    %v1803 = vmul.f32 1.0, %v1802
    %v1804 = vmul.f32 %v1783, %v1761
    %v1805 = vadd.f32 %v1724, %v1804
    %v1806 = vtanh.pop %v1805
    %v1807 = vsub.f32 1.0, %v1803
    %v1808 = vmul.f32 %v1807, %v1806
    %v1809 = vmul.f32 %v1803, %v1719
    %v1810 = vadd.f32 %v1808, %v1809
    %v1811 = vpack.c.bf16 %v1810, %v1810
    %1812 = vst [vmem:[#allocation2 + $0x4] sm:$0xf] %v1811
    %v1813 = vld [vmem:[#allocation3 + $0x30] sm:$0xff]
    %v1814 = vld [vmem:[#allocation3 + $0x38] sm:$0xff]
    %v1815 = vld [vmem:[#allocation3 + $0x40] sm:$0xff]
    %1816 = vmatpush.bf16.msra.mxu0 %v1607
    %1817 = vmatpush.bf16.msra.mxu0 %v1604
    %1818 = vmatpush.bf16.msra.mxu0 %v1601
    %1819 = vmatpush.bf16.msra.mxu0 %v1598
    %1820 = vmatpush.bf16.msra.mxu0 %v1595
    %1821 = vmatpush.bf16.msra.mxu0 %v1592
    %1822 = vmatpush.bf16.msra.mxu0 %v1589
    %1823 = vmatpush.bf16.msra.mxu0 %v1586
    %1824 = vmatmul.bf16.gmra.mxu0 %v1811
    %v1825 = vpop.f32.mrf.mxu0
    %v1826 = vadd.f32 %v1497, %v1825
    %v1827 = vpop.f32.mrf.mxu0
    %1828 = vdwg.mxu0
    %1829 = vmatpush.bf16.msra.mxu0 %v1608
    %1830 = vmatpush.bf16.msra.mxu0 %v1605
    %1831 = vmatpush.bf16.msra.mxu0 %v1602
    %1832 = vmatpush.bf16.msra.mxu0 %v1599
    %1833 = vmatpush.bf16.msra.mxu0 %v1596
    %1834 = vmatpush.bf16.msra.mxu0 %v1593
    %1835 = vmatpush.bf16.msra.mxu0 %v1590
    %1836 = vmatpush.bf16.msra.mxu0 %v1587
    %1837 = vmatmul.bf16.gmra.mxu0 %v1811
    %v1838 = vpop.f32.mrf.mxu0
    %v1839 = vadd.f32 %v1498, %v1838
    %v1840 = vpop.f32.mrf.mxu0
    %1841 = vdwg.mxu0
    %1842 = vmatpush.bf16.msra.mxu0 %v1609
    %1843 = vmatpush.bf16.msra.mxu0 %v1606
    %1844 = vmatpush.bf16.msra.mxu0 %v1603
    %1845 = vmatpush.bf16.msra.mxu0 %v1600
    %1846 = vmatpush.bf16.msra.mxu0 %v1597
    %1847 = vmatpush.bf16.msra.mxu0 %v1594
    %1848 = vmatpush.bf16.msra.mxu0 %v1591
    %1849 = vmatpush.bf16.msra.mxu0 %v1588
    %1850 = vmatmul.bf16.gmra.mxu0 %v1811
    %v1851 = vpop.f32.mrf.mxu0
    %v1852 = vadd.f32 %v1499, %v1851
    %v1853 = vpop.f32.mrf.mxu0
    %1854 = vdwg.mxu0
    %v1855 = vadd.f32 %v1813, %v1826
    %v1856 = vxor.u32 %v1855, 2147483648
    %v1857 = vmul.f32 %v1856, 1.442695
    %v1858 = vpow.pop %v1857
    %v1859 = vadd.f32 %v1858, 1.0
    %v1860 = vrcp.pop %v1859
    %v1861 = vmul.f32 %v1859, %v1860
    %v1862 = vsub.f32 1.0, %v1861
    %v1863 = vmul.f32 %v1860, %v1862
    %v1864 = vadd.f32 %v1860, %v1863
    %vm1865 = vweird.f32 %v1859
    %vm1866 = vweird.f32 %v1860
    %vm1867 = vmor %vm1865, %vm1866
    %v1868 = vsel %vm1867, %v1860, %v1864
    %v1869 = vand.u32 2147483647, %v1859
    %vm1870 = vcmp.eq.f32.partialorder %v1869, 8.507059e+37
    %v1871 = vand.u32 %v1859, 2147483648
    %v1872 = vor.u32 1.1754944e-38, %v1871
    %v1873 = vsel %vm1870, %v1872, %v1868
    %v1874 = vmul.f32 1.0, %v1873
    %v1875 = vadd.f32 %v1814, %v1839
    %v1876 = vxor.u32 %v1875, 2147483648
    %v1877 = vmul.f32 %v1876, 1.442695
    %v1878 = vpow.pop %v1877
    %v1879 = vadd.f32 %v1878, 1.0
    %v1880 = vrcp.pop %v1879
    %v1881 = vmul.f32 %v1879, %v1880
    %v1882 = vsub.f32 1.0, %v1881
    %v1883 = vmul.f32 %v1880, %v1882
    %v1884 = vadd.f32 %v1880, %v1883
    %vm1885 = vweird.f32 %v1879
    %vm1886 = vweird.f32 %v1880
    %vm1887 = vmor %vm1885, %vm1886
    %v1888 = vsel %vm1887, %v1880, %v1884
    %v1889 = vand.u32 2147483647, %v1879
    %vm1890 = vcmp.eq.f32.partialorder %v1889, 8.507059e+37
    %v1891 = vand.u32 %v1879, 2147483648
    %v1892 = vor.u32 1.1754944e-38, %v1891
    %v1893 = vsel %vm1890, %v1892, %v1888
    %v1894 = vmul.f32 1.0, %v1893
    %v1895 = vmul.f32 %v1874, %v1852
    %v1896 = vadd.f32 %v1815, %v1895
    %v1897 = vtanh.pop %v1896
    %v1898 = vsub.f32 1.0, %v1894
    %v1899 = vmul.f32 %v1898, %v1897
    %v1900 = vmul.f32 %v1894, %v1810
    %v1901 = vadd.f32 %v1899, %v1900
    %v1902 = vpack.c.bf16 %v1901, %v1901
    %1903 = vst [vmem:[#allocation2 + $0x8] sm:$0xf] %v1902
    %v1904 = vld [vmem:[#allocation3 + $0x48] sm:$0xff]
    %v1905 = vld [vmem:[#allocation3 + $0x50] sm:$0xff]
    %v1906 = vld [vmem:[#allocation3 + $0x58] sm:$0xff]
    %1907 = vmatpush.bf16.msra.mxu0 %v1607
    %1908 = vmatpush.bf16.msra.mxu0 %v1604
    %1909 = vmatpush.bf16.msra.mxu0 %v1601
    %1910 = vmatpush.bf16.msra.mxu0 %v1598
    %1911 = vmatpush.bf16.msra.mxu0 %v1595
    %1912 = vmatpush.bf16.msra.mxu0 %v1592
    %1913 = vmatpush.bf16.msra.mxu0 %v1589
    %1914 = vmatpush.bf16.msra.mxu0 %v1586
    %1915 = vmatmul.bf16.gmra.mxu0 %v1902
    %v1916 = vpop.f32.mrf.mxu0
    %v1917 = vadd.f32 %v1497, %v1916
    %v1918 = vpop.f32.mrf.mxu0
    %1919 = vdwg.mxu0
    %1920 = vmatpush.bf16.msra.mxu0 %v1608
    %1921 = vmatpush.bf16.msra.mxu0 %v1605
    %1922 = vmatpush.bf16.msra.mxu0 %v1602
    %1923 = vmatpush.bf16.msra.mxu0 %v1599
    %1924 = vmatpush.bf16.msra.mxu0 %v1596
    %1925 = vmatpush.bf16.msra.mxu0 %v1593
    %1926 = vmatpush.bf16.msra.mxu0 %v1590
    %1927 = vmatpush.bf16.msra.mxu0 %v1587
    %1928 = vmatmul.bf16.gmra.mxu0 %v1902
    %v1929 = vpop.f32.mrf.mxu0
    %v1930 = vadd.f32 %v1498, %v1929
    %v1931 = vpop.f32.mrf.mxu0
    %1932 = vdwg.mxu0
    %1933 = vmatpush.bf16.msra.mxu0 %v1609
    %1934 = vmatpush.bf16.msra.mxu0 %v1606
    %1935 = vmatpush.bf16.msra.mxu0 %v1603
    %1936 = vmatpush.bf16.msra.mxu0 %v1600
    %1937 = vmatpush.bf16.msra.mxu0 %v1597
    %1938 = vmatpush.bf16.msra.mxu0 %v1594
    %1939 = vmatpush.bf16.msra.mxu0 %v1591
    %1940 = vmatpush.bf16.msra.mxu0 %v1588
    %1941 = vmatmul.bf16.gmra.mxu0 %v1902
    %v1942 = vpop.f32.mrf.mxu0
    %v1943 = vadd.f32 %v1499, %v1942
    %v1944 = vpop.f32.mrf.mxu0
    %1945 = vdwg.mxu0
    %v1946 = vadd.f32 %v1904, %v1917
    %v1947 = vxor.u32 %v1946, 2147483648
    %v1948 = vmul.f32 %v1947, 1.442695
    %v1949 = vpow.pop %v1948
    %v1950 = vadd.f32 %v1949, 1.0
    %v1951 = vrcp.pop %v1950
    %v1952 = vmul.f32 %v1950, %v1951
    %v1953 = vsub.f32 1.0, %v1952
    %v1954 = vmul.f32 %v1951, %v1953
    %v1955 = vadd.f32 %v1951, %v1954
    %vm1956 = vweird.f32 %v1950
    %vm1957 = vweird.f32 %v1951
    %vm1958 = vmor %vm1956, %vm1957
    %v1959 = vsel %vm1958, %v1951, %v1955
    %v1960 = vand.u32 2147483647, %v1950
    %vm1961 = vcmp.eq.f32.partialorder %v1960, 8.507059e+37
    %v1962 = vand.u32 %v1950, 2147483648
    %v1963 = vor.u32 1.1754944e-38, %v1962
    %v1964 = vsel %vm1961, %v1963, %v1959
    %v1965 = vmul.f32 1.0, %v1964
    %v1966 = vadd.f32 %v1905, %v1930
    %v1967 = vxor.u32 %v1966, 2147483648
    %v1968 = vmul.f32 %v1967, 1.442695
    %v1969 = vpow.pop %v1968
    %v1970 = vadd.f32 %v1969, 1.0
    %v1971 = vrcp.pop %v1970
    %v1972 = vmul.f32 %v1970, %v1971
    %v1973 = vsub.f32 1.0, %v1972
    %v1974 = vmul.f32 %v1971, %v1973
    %v1975 = vadd.f32 %v1971, %v1974
    %vm1976 = vweird.f32 %v1970
    %vm1977 = vweird.f32 %v1971
    %vm1978 = vmor %vm1976, %vm1977
    %v1979 = vsel %vm1978, %v1971, %v1975
    %v1980 = vand.u32 2147483647, %v1970
    %vm1981 = vcmp.eq.f32.partialorder %v1980, 8.507059e+37
    %v1982 = vand.u32 %v1970, 2147483648
    %v1983 = vor.u32 1.1754944e-38, %v1982
    %v1984 = vsel %vm1981, %v1983, %v1979
    %v1985 = vmul.f32 1.0, %v1984
    %v1986 = vmul.f32 %v1965, %v1943
    %v1987 = vadd.f32 %v1906, %v1986
    %v1988 = vtanh.pop %v1987
    %v1989 = vsub.f32 1.0, %v1985
    %v1990 = vmul.f32 %v1989, %v1988
    %v1991 = vmul.f32 %v1985, %v1901
    %v1992 = vadd.f32 %v1990, %v1991
    %v1993 = vpack.c.bf16 %v1992, %v1992
    %1994 = vst [vmem:[#allocation2 + $0xc] sm:$0xf] %v1993
    %v1995 = vld [vmem:[#allocation3 + $0x60] sm:$0xff]
    %v1996 = vld [vmem:[#allocation3 + $0x68] sm:$0xff]
    %v1997 = vld [vmem:[#allocation3 + $0x70] sm:$0xff]
    %1998 = vmatpush.bf16.msra.mxu0 %v1607
    %1999 = vmatpush.bf16.msra.mxu0 %v1604
    %2000 = vmatpush.bf16.msra.mxu0 %v1601
    %2001 = vmatpush.bf16.msra.mxu0 %v1598
    %2002 = vmatpush.bf16.msra.mxu0 %v1595
    %2003 = vmatpush.bf16.msra.mxu0 %v1592
    %2004 = vmatpush.bf16.msra.mxu0 %v1589
    %2005 = vmatpush.bf16.msra.mxu0 %v1586
    %2006 = vmatmul.bf16.gmra.mxu0 %v1993
    %v2007 = vpop.f32.mrf.mxu0
    %v2008 = vadd.f32 %v1497, %v2007
    %v2009 = vpop.f32.mrf.mxu0
    %2010 = vdwg.mxu0
    %2011 = vmatpush.bf16.msra.mxu0 %v1608
    %2012 = vmatpush.bf16.msra.mxu0 %v1605
    %2013 = vmatpush.bf16.msra.mxu0 %v1602
    %2014 = vmatpush.bf16.msra.mxu0 %v1599
    %2015 = vmatpush.bf16.msra.mxu0 %v1596
    %2016 = vmatpush.bf16.msra.mxu0 %v1593
    %2017 = vmatpush.bf16.msra.mxu0 %v1590
    %2018 = vmatpush.bf16.msra.mxu0 %v1587
    %2019 = vmatmul.bf16.gmra.mxu0 %v1993
    %v2020 = vpop.f32.mrf.mxu0
    %v2021 = vadd.f32 %v1498, %v2020
    %v2022 = vpop.f32.mrf.mxu0
    %2023 = vdwg.mxu0
    %2024 = vmatpush.bf16.msra.mxu0 %v1609
    %2025 = vmatpush.bf16.msra.mxu0 %v1606
    %2026 = vmatpush.bf16.msra.mxu0 %v1603
    %2027 = vmatpush.bf16.msra.mxu0 %v1600
    %2028 = vmatpush.bf16.msra.mxu0 %v1597
    %2029 = vmatpush.bf16.msra.mxu0 %v1594
    %2030 = vmatpush.bf16.msra.mxu0 %v1591
    %2031 = vmatpush.bf16.msra.mxu0 %v1588
    %2032 = vmatmul.bf16.gmra.mxu0 %v1993
    %v2033 = vpop.f32.mrf.mxu0
    %v2034 = vadd.f32 %v1499, %v2033
    %v2035 = vpop.f32.mrf.mxu0
    %2036 = vdwg.mxu0
    %v2037 = vadd.f32 %v1995, %v2008
    %v2038 = vxor.u32 %v2037, 2147483648
    %v2039 = vmul.f32 %v2038, 1.442695
    %v2040 = vpow.pop %v2039
    %v2041 = vadd.f32 %v2040, 1.0
    %v2042 = vrcp.pop %v2041
    %v2043 = vmul.f32 %v2041, %v2042
    %v2044 = vsub.f32 1.0, %v2043
    %v2045 = vmul.f32 %v2042, %v2044
    %v2046 = vadd.f32 %v2042, %v2045
    %vm2047 = vweird.f32 %v2041
    %vm2048 = vweird.f32 %v2042
    %vm2049 = vmor %vm2047, %vm2048
    %v2050 = vsel %vm2049, %v2042, %v2046
    %v2051 = vand.u32 2147483647, %v2041
    %vm2052 = vcmp.eq.f32.partialorder %v2051, 8.507059e+37
    %v2053 = vand.u32 %v2041, 2147483648
    %v2054 = vor.u32 1.1754944e-38, %v2053
    %v2055 = vsel %vm2052, %v2054, %v2050
    %v2056 = vmul.f32 1.0, %v2055
    %v2057 = vadd.f32 %v1996, %v2021
    %v2058 = vxor.u32 %v2057, 2147483648
    %v2059 = vmul.f32 %v2058, 1.442695
    %v2060 = vpow.pop %v2059
    %v2061 = vadd.f32 %v2060, 1.0
    %v2062 = vrcp.pop %v2061
    %v2063 = vmul.f32 %v2061, %v2062
    %v2064 = vsub.f32 1.0, %v2063
    %v2065 = vmul.f32 %v2062, %v2064
    %v2066 = vadd.f32 %v2062, %v2065
    %vm2067 = vweird.f32 %v2061
    %vm2068 = vweird.f32 %v2062
    %vm2069 = vmor %vm2067, %vm2068
    %v2070 = vsel %vm2069, %v2062, %v2066
    %v2071 = vand.u32 2147483647, %v2061
    %vm2072 = vcmp.eq.f32.partialorder %v2071, 8.507059e+37
    %v2073 = vand.u32 %v2061, 2147483648
    %v2074 = vor.u32 1.1754944e-38, %v2073
    %v2075 = vsel %vm2072, %v2074, %v2070
    %v2076 = vmul.f32 1.0, %v2075
    %v2077 = vmul.f32 %v2056, %v2034
    %v2078 = vadd.f32 %v1997, %v2077
    %v2079 = vtanh.pop %v2078
    %v2080 = vsub.f32 1.0, %v2076
    %v2081 = vmul.f32 %v2080, %v2079
    %v2082 = vmul.f32 %v2076, %v1992
    %v2083 = vadd.f32 %v2081, %v2082
    %v2084 = vpack.c.bf16 %v2083, %v2083
    %2085 = vst [vmem:[#allocation2 + $0x10] sm:$0xf] %v2084
    %v2086 = vld [vmem:[#allocation3 + $0x78] sm:$0xff]
    %v2087 = vld [vmem:[#allocation3 + $0x80] sm:$0xff]
    %v2088 = vld [vmem:[#allocation3 + $0x88] sm:$0xff]
    %2089 = vmatpush.bf16.msra.mxu0 %v1607
    %2090 = vmatpush.bf16.msra.mxu0 %v1604
    %2091 = vmatpush.bf16.msra.mxu0 %v1601
    %2092 = vmatpush.bf16.msra.mxu0 %v1598
    %2093 = vmatpush.bf16.msra.mxu0 %v1595
    %2094 = vmatpush.bf16.msra.mxu0 %v1592
    %2095 = vmatpush.bf16.msra.mxu0 %v1589
    %2096 = vmatpush.bf16.msra.mxu0 %v1586
    %2097 = vmatmul.bf16.gmra.mxu0 %v2084
    %v2098 = vpop.f32.mrf.mxu0
    %v2099 = vadd.f32 %v1497, %v2098
    %v2100 = vpop.f32.mrf.mxu0
    %2101 = vdwg.mxu0
    %2102 = vmatpush.bf16.msra.mxu0 %v1608
    %2103 = vmatpush.bf16.msra.mxu0 %v1605
    %2104 = vmatpush.bf16.msra.mxu0 %v1602
    %2105 = vmatpush.bf16.msra.mxu0 %v1599
    %2106 = vmatpush.bf16.msra.mxu0 %v1596
    %2107 = vmatpush.bf16.msra.mxu0 %v1593
    %2108 = vmatpush.bf16.msra.mxu0 %v1590
    %2109 = vmatpush.bf16.msra.mxu0 %v1587
    %2110 = vmatmul.bf16.gmra.mxu0 %v2084
    %v2111 = vpop.f32.mrf.mxu0
    %v2112 = vadd.f32 %v1498, %v2111
    %v2113 = vpop.f32.mrf.mxu0
    %2114 = vdwg.mxu0
    %2115 = vmatpush.bf16.msra.mxu0 %v1609
    %2116 = vmatpush.bf16.msra.mxu0 %v1606
    %2117 = vmatpush.bf16.msra.mxu0 %v1603
    %2118 = vmatpush.bf16.msra.mxu0 %v1600
    %2119 = vmatpush.bf16.msra.mxu0 %v1597
    %2120 = vmatpush.bf16.msra.mxu0 %v1594
    %2121 = vmatpush.bf16.msra.mxu0 %v1591
    %2122 = vmatpush.bf16.msra.mxu0 %v1588
    %2123 = vmatmul.bf16.gmra.mxu0 %v2084
    %v2124 = vpop.f32.mrf.mxu0
    %v2125 = vadd.f32 %v1499, %v2124
    %v2126 = vpop.f32.mrf.mxu0
    %2127 = vdwg.mxu0
    %v2128 = vadd.f32 %v2086, %v2099
    %v2129 = vxor.u32 %v2128, 2147483648
    %v2130 = vmul.f32 %v2129, 1.442695
    %v2131 = vpow.pop %v2130
    %v2132 = vadd.f32 %v2131, 1.0
    %v2133 = vrcp.pop %v2132
    %v2134 = vmul.f32 %v2132, %v2133
    %v2135 = vsub.f32 1.0, %v2134
    %v2136 = vmul.f32 %v2133, %v2135
    %v2137 = vadd.f32 %v2133, %v2136
    %vm2138 = vweird.f32 %v2132
    %vm2139 = vweird.f32 %v2133
    %vm2140 = vmor %vm2138, %vm2139
    %v2141 = vsel %vm2140, %v2133, %v2137
    %v2142 = vand.u32 2147483647, %v2132
    %vm2143 = vcmp.eq.f32.partialorder %v2142, 8.507059e+37
    %v2144 = vand.u32 %v2132, 2147483648
    %v2145 = vor.u32 1.1754944e-38, %v2144
    %v2146 = vsel %vm2143, %v2145, %v2141
    %v2147 = vmul.f32 1.0, %v2146
    %v2148 = vadd.f32 %v2087, %v2112
    %v2149 = vxor.u32 %v2148, 2147483648
    %v2150 = vmul.f32 %v2149, 1.442695
    %v2151 = vpow.pop %v2150
    %v2152 = vadd.f32 %v2151, 1.0
    %v2153 = vrcp.pop %v2152
    %v2154 = vmul.f32 %v2152, %v2153
    %v2155 = vsub.f32 1.0, %v2154
    %v2156 = vmul.f32 %v2153, %v2155
    %v2157 = vadd.f32 %v2153, %v2156
    %vm2158 = vweird.f32 %v2152
    %vm2159 = vweird.f32 %v2153
    %vm2160 = vmor %vm2158, %vm2159
    %v2161 = vsel %vm2160, %v2153, %v2157
    %v2162 = vand.u32 2147483647, %v2152
    %vm2163 = vcmp.eq.f32.partialorder %v2162, 8.507059e+37
    %v2164 = vand.u32 %v2152, 2147483648
    %v2165 = vor.u32 1.1754944e-38, %v2164
    %v2166 = vsel %vm2163, %v2165, %v2161
    %v2167 = vmul.f32 1.0, %v2166
    %v2168 = vmul.f32 %v2147, %v2125
    %v2169 = vadd.f32 %v2088, %v2168
    %v2170 = vtanh.pop %v2169
    %v2171 = vsub.f32 1.0, %v2167
    %v2172 = vmul.f32 %v2171, %v2170
    %v2173 = vmul.f32 %v2167, %v2083
    %v2174 = vadd.f32 %v2172, %v2173
    %v2175 = vpack.c.bf16 %v2174, %v2174
    %2176 = vst [vmem:[#allocation2 + $0x14] sm:$0xf] %v2175
    %v2177 = vld [vmem:[#allocation3 + $0x90] sm:$0xff]
    %v2178 = vld [vmem:[#allocation3 + $0x98] sm:$0xff]
    %v2179 = vld [vmem:[#allocation3 + $0xa0] sm:$0xff]
    %2180 = vmatpush.bf16.msra.mxu0 %v1607
    %2181 = vmatpush.bf16.msra.mxu0 %v1604
    %2182 = vmatpush.bf16.msra.mxu0 %v1601
    %2183 = vmatpush.bf16.msra.mxu0 %v1598
    %2184 = vmatpush.bf16.msra.mxu0 %v1595
    %2185 = vmatpush.bf16.msra.mxu0 %v1592
    %2186 = vmatpush.bf16.msra.mxu0 %v1589
    %2187 = vmatpush.bf16.msra.mxu0 %v1586
    %2188 = vmatmul.bf16.gmra.mxu0 %v2175
    %v2189 = vpop.f32.mrf.mxu0
    %v2190 = vadd.f32 %v1497, %v2189
    %v2191 = vpop.f32.mrf.mxu0
    %2192 = vdwg.mxu0
    %2193 = vmatpush.bf16.msra.mxu0 %v1608
    %2194 = vmatpush.bf16.msra.mxu0 %v1605
    %2195 = vmatpush.bf16.msra.mxu0 %v1602
    %2196 = vmatpush.bf16.msra.mxu0 %v1599
    %2197 = vmatpush.bf16.msra.mxu0 %v1596
    %2198 = vmatpush.bf16.msra.mxu0 %v1593
    %2199 = vmatpush.bf16.msra.mxu0 %v1590
    %2200 = vmatpush.bf16.msra.mxu0 %v1587
    %2201 = vmatmul.bf16.gmra.mxu0 %v2175
    %v2202 = vpop.f32.mrf.mxu0
    %v2203 = vadd.f32 %v1498, %v2202
    %v2204 = vpop.f32.mrf.mxu0
    %2205 = vdwg.mxu0
    %2206 = vmatpush.bf16.msra.mxu0 %v1609
    %2207 = vmatpush.bf16.msra.mxu0 %v1606
    %2208 = vmatpush.bf16.msra.mxu0 %v1603
    %2209 = vmatpush.bf16.msra.mxu0 %v1600
    %2210 = vmatpush.bf16.msra.mxu0 %v1597
    %2211 = vmatpush.bf16.msra.mxu0 %v1594
    %2212 = vmatpush.bf16.msra.mxu0 %v1591
    %2213 = vmatpush.bf16.msra.mxu0 %v1588
    %2214 = vmatmul.bf16.gmra.mxu0 %v2175
    %v2215 = vpop.f32.mrf.mxu0
    %v2216 = vadd.f32 %v1499, %v2215
    %v2217 = vpop.f32.mrf.mxu0
    %2218 = vdwg.mxu0
    %v2219 = vadd.f32 %v2177, %v2190
    %v2220 = vxor.u32 %v2219, 2147483648
    %v2221 = vmul.f32 %v2220, 1.442695
    %v2222 = vpow.pop %v2221
    %v2223 = vadd.f32 %v2222, 1.0
    %v2224 = vrcp.pop %v2223
    %v2225 = vmul.f32 %v2223, %v2224
    %v2226 = vsub.f32 1.0, %v2225
    %v2227 = vmul.f32 %v2224, %v2226
    %v2228 = vadd.f32 %v2224, %v2227
    %vm2229 = vweird.f32 %v2223
    %vm2230 = vweird.f32 %v2224
    %vm2231 = vmor %vm2229, %vm2230
    %v2232 = vsel %vm2231, %v2224, %v2228
    %v2233 = vand.u32 2147483647, %v2223
    %vm2234 = vcmp.eq.f32.partialorder %v2233, 8.507059e+37
    %v2235 = vand.u32 %v2223, 2147483648
    %v2236 = vor.u32 1.1754944e-38, %v2235
    %v2237 = vsel %vm2234, %v2236, %v2232
    %v2238 = vmul.f32 1.0, %v2237
    %v2239 = vadd.f32 %v2178, %v2203
    %v2240 = vxor.u32 %v2239, 2147483648
    %v2241 = vmul.f32 %v2240, 1.442695
    %v2242 = vpow.pop %v2241
    %v2243 = vadd.f32 %v2242, 1.0
    %v2244 = vrcp.pop %v2243
    %v2245 = vmul.f32 %v2243, %v2244
    %v2246 = vsub.f32 1.0, %v2245
    %v2247 = vmul.f32 %v2244, %v2246
    %v2248 = vadd.f32 %v2244, %v2247
    %vm2249 = vweird.f32 %v2243
    %vm2250 = vweird.f32 %v2244
    %vm2251 = vmor %vm2249, %vm2250
    %v2252 = vsel %vm2251, %v2244, %v2248
    %v2253 = vand.u32 2147483647, %v2243
    %vm2254 = vcmp.eq.f32.partialorder %v2253, 8.507059e+37
    %v2255 = vand.u32 %v2243, 2147483648
    %v2256 = vor.u32 1.1754944e-38, %v2255
    %v2257 = vsel %vm2254, %v2256, %v2252
    %v2258 = vmul.f32 1.0, %v2257
    %v2259 = vmul.f32 %v2238, %v2216
    %v2260 = vadd.f32 %v2179, %v2259
    %v2261 = vtanh.pop %v2260
    %v2262 = vsub.f32 1.0, %v2258
    %v2263 = vmul.f32 %v2262, %v2261
    %v2264 = vmul.f32 %v2258, %v2174
    %v2265 = vadd.f32 %v2263, %v2264
    %v2266 = vpack.c.bf16 %v2265, %v2265
    %2267 = vst [vmem:[#allocation2 + $0x18] sm:$0xf] %v2266
    %v2268 = vld [vmem:[#allocation3 + $0xa8] sm:$0xff]
    %v2269 = vld [vmem:[#allocation3 + $0xb0] sm:$0xff]
    %v2270 = vld [vmem:[#allocation3 + $0xb8] sm:$0xff]
    %2271 = vmatpush.bf16.msra.mxu0 %v1607
    %2272 = vmatpush.bf16.msra.mxu0 %v1604
    %2273 = vmatpush.bf16.msra.mxu0 %v1601
    %2274 = vmatpush.bf16.msra.mxu0 %v1598
    %2275 = vmatpush.bf16.msra.mxu0 %v1595
    %2276 = vmatpush.bf16.msra.mxu0 %v1592
    %2277 = vmatpush.bf16.msra.mxu0 %v1589
    %2278 = vmatpush.bf16.msra.mxu0 %v1586
    %2279 = vmatmul.bf16.gmra.mxu0 %v2266
    %v2280 = vpop.f32.mrf.mxu0
    %v2281 = vadd.f32 %v1497, %v2280
    %v2282 = vpop.f32.mrf.mxu0
    %2283 = vdwg.mxu0
    %2284 = vmatpush.bf16.msra.mxu0 %v1608
    %2285 = vmatpush.bf16.msra.mxu0 %v1605
    %2286 = vmatpush.bf16.msra.mxu0 %v1602
    %2287 = vmatpush.bf16.msra.mxu0 %v1599
    %2288 = vmatpush.bf16.msra.mxu0 %v1596
    %2289 = vmatpush.bf16.msra.mxu0 %v1593
    %2290 = vmatpush.bf16.msra.mxu0 %v1590
    %2291 = vmatpush.bf16.msra.mxu0 %v1587
    %2292 = vmatmul.bf16.gmra.mxu0 %v2266
    %v2293 = vpop.f32.mrf.mxu0
    %v2294 = vadd.f32 %v1498, %v2293
    %v2295 = vpop.f32.mrf.mxu0
    %2296 = vdwg.mxu0
    %2297 = vmatpush.bf16.msra.mxu0 %v1609
    %2298 = vmatpush.bf16.msra.mxu0 %v1606
    %2299 = vmatpush.bf16.msra.mxu0 %v1603
    %2300 = vmatpush.bf16.msra.mxu0 %v1600
    %2301 = vmatpush.bf16.msra.mxu0 %v1597
    %2302 = vmatpush.bf16.msra.mxu0 %v1594
    %2303 = vmatpush.bf16.msra.mxu0 %v1591
    %2304 = vmatpush.bf16.msra.mxu0 %v1588
    %2305 = vmatmul.bf16.gmra.mxu0 %v2266
    %v2306 = vpop.f32.mrf.mxu0
    %v2307 = vadd.f32 %v1499, %v2306
    %v2308 = vpop.f32.mrf.mxu0
    %2309 = vdwg.mxu0
    %v2310 = vadd.f32 %v2268, %v2281
    %v2311 = vxor.u32 %v2310, 2147483648
    %v2312 = vmul.f32 %v2311, 1.442695
    %v2313 = vpow.pop %v2312
    %v2314 = vadd.f32 %v2313, 1.0
    %v2315 = vrcp.pop %v2314
    %v2316 = vmul.f32 %v2314, %v2315
    %v2317 = vsub.f32 1.0, %v2316
    %v2318 = vmul.f32 %v2315, %v2317
    %v2319 = vadd.f32 %v2315, %v2318
    %vm2320 = vweird.f32 %v2314
    %vm2321 = vweird.f32 %v2315
    %vm2322 = vmor %vm2320, %vm2321
    %v2323 = vsel %vm2322, %v2315, %v2319
    %v2324 = vand.u32 2147483647, %v2314
    %vm2325 = vcmp.eq.f32.partialorder %v2324, 8.507059e+37
    %v2326 = vand.u32 %v2314, 2147483648
    %v2327 = vor.u32 1.1754944e-38, %v2326
    %v2328 = vsel %vm2325, %v2327, %v2323
    %v2329 = vmul.f32 1.0, %v2328
    %v2330 = vadd.f32 %v2269, %v2294
    %v2331 = vxor.u32 %v2330, 2147483648
    %v2332 = vmul.f32 %v2331, 1.442695
    %v2333 = vpow.pop %v2332
    %v2334 = vadd.f32 %v2333, 1.0
    %v2335 = vrcp.pop %v2334
    %v2336 = vmul.f32 %v2334, %v2335
    %v2337 = vsub.f32 1.0, %v2336
    %v2338 = vmul.f32 %v2335, %v2337
    %v2339 = vadd.f32 %v2335, %v2338
    %vm2340 = vweird.f32 %v2334
    %vm2341 = vweird.f32 %v2335
    %vm2342 = vmor %vm2340, %vm2341
    %v2343 = vsel %vm2342, %v2335, %v2339
    %v2344 = vand.u32 2147483647, %v2334
    %vm2345 = vcmp.eq.f32.partialorder %v2344, 8.507059e+37
    %v2346 = vand.u32 %v2334, 2147483648
    %v2347 = vor.u32 1.1754944e-38, %v2346
    %v2348 = vsel %vm2345, %v2347, %v2343
    %v2349 = vmul.f32 1.0, %v2348
    %v2350 = vmul.f32 %v2329, %v2307
    %v2351 = vadd.f32 %v2270, %v2350
    %v2352 = vtanh.pop %v2351
    %v2353 = vsub.f32 1.0, %v2349
    %v2354 = vmul.f32 %v2353, %v2352
    %v2355 = vmul.f32 %v2349, %v2265
    %v2356 = vadd.f32 %v2354, %v2355
    %v2357 = vpack.c.bf16 %v2356, %v2356
    %2358 = vst [vmem:[#allocation2 + $0x1c] sm:$0xf] %v2357
    %v2359 = vld [vmem:[#allocation12] sm:$0xff]
    %v2360 = vld [vmem:[#allocation12 + $0x8] sm:$0xf]
    %v2361 = vld [vmem:[#allocation12 + $0xc] sm:$0xff]
    %v2362 = vld [vmem:[#allocation12 + $0x14] sm:$0xf]
    %v2363 = vld [vmem:[#allocation12 + $0x18] sm:$0xff]
    %v2364 = vld [vmem:[#allocation12 + $0x20] sm:$0xf]
    %v2365 = vld [vmem:[#allocation12 + $0x24] sm:$0xff]
    %v2366 = vld [vmem:[#allocation12 + $0x2c] sm:$0xf]
    %v2367 = vld [vmem:[#allocation12 + $0x30] sm:$0xff]
    %v2368 = vld [vmem:[#allocation12 + $0x38] sm:$0xf]
    %v2369 = vld [vmem:[#allocation12 + $0x3c] sm:$0xff]
    %v2370 = vld [vmem:[#allocation12 + $0x44] sm:$0xf]
    %v2371 = vld [vmem:[#allocation12 + $0x48] sm:$0xff]
    %v2372 = vld [vmem:[#allocation12 + $0x50] sm:$0xf]
    %v2373 = vld [vmem:[#allocation12 + $0x54] sm:$0xff]
    %v2374 = vld [vmem:[#allocation12 + $0x5c] sm:$0xf]
    %v2375 = vld [vmem:[#allocation12 + $0x60] sm:$0xff]
    %v2376 = vld [vmem:[#allocation12 + $0x68] sm:$0xf]
    %v2377 = vld [vmem:[#allocation12 + $0x6c] sm:$0xff]
    %v2378 = vld [vmem:[#allocation12 + $0x74] sm:$0xf]
    %v2379 = vld [vmem:[#allocation12 + $0x78] sm:$0xff]
    %v2380 = vld [vmem:[#allocation12 + $0x80] sm:$0xf]
    %v2381 = vld [vmem:[#allocation12 + $0x84] sm:$0xff]
    %v2382 = vld [vmem:[#allocation12 + $0x8c] sm:$0xf]
    %v2383 = vld [vmem:[#allocation12 + $0x90] sm:$0xff]
    %v2384 = vld [vmem:[#allocation12 + $0x98] sm:$0xf]
    %v2385 = vld [vmem:[#allocation12 + $0x9c] sm:$0xff]
    %v2386 = vld [vmem:[#allocation12 + $0xa4] sm:$0xf]
    %v2387 = vld [vmem:[#allocation12 + $0xa8] sm:$0xff]
    %v2388 = vld [vmem:[#allocation12 + $0xb0] sm:$0xf]
    %v2389 = vld [vmem:[#allocation12 + $0xb4] sm:$0xff]
    %v2390 = vld [vmem:[#allocation12 + $0xbc] sm:$0xf]
    %v2391 = vld [vmem:[#allocation12 + $0xc0] sm:$0xff]
    %v2392 = vld [vmem:[#allocation12 + $0xc8] sm:$0xf]
    %v2393 = vld [vmem:[#allocation12 + $0xcc] sm:$0xff]
    %v2394 = vld [vmem:[#allocation12 + $0xd4] sm:$0xf]
    %v2395 = vld [vmem:[#allocation12 + $0xd8] sm:$0xff]
    %v2396 = vld [vmem:[#allocation12 + $0xe0] sm:$0xf]
    %v2397 = vld [vmem:[#allocation12 + $0xe4] sm:$0xff]
    %v2398 = vld [vmem:[#allocation12 + $0xec] sm:$0xf]
    %v2399 = vld [vmem:[#allocation12 + $0xf0] sm:$0xff]
    %v2400 = vld [vmem:[#allocation12 + $0xf8] sm:$0xf]
    %v2401 = vld [vmem:[#allocation12 + $0xfc] sm:$0xff]
    %v2402 = vld [vmem:[#allocation12 + $0x104] sm:$0xf]
    %v2403 = vld [vmem:[#allocation12 + $0x108] sm:$0xff]
    %v2404 = vld [vmem:[#allocation12 + $0x110] sm:$0xf]
    %v2405 = vld [vmem:[#allocation12 + $0x114] sm:$0xff]
    %v2406 = vld [vmem:[#allocation12 + $0x11c] sm:$0xf]
    %v2407 = vld [vmem:[#allocation12 + $0x120] sm:$0xff]
    %v2408 = vld [vmem:[#allocation12 + $0x128] sm:$0xf]
    %v2409 = vld [vmem:[#allocation12 + $0x12c] sm:$0xff]
    %v2410 = vld [vmem:[#allocation12 + $0x134] sm:$0xf]
    %v2411 = vld [vmem:[#allocation12 + $0x138] sm:$0xff]
    %v2412 = vld [vmem:[#allocation12 + $0x140] sm:$0xf]
    %v2413 = vld [vmem:[#allocation12 + $0x144] sm:$0xff]
    %v2414 = vld [vmem:[#allocation12 + $0x14c] sm:$0xf]
    %v2415 = vld [vmem:[#allocation12 + $0x150] sm:$0xff]
    %v2416 = vld [vmem:[#allocation12 + $0x158] sm:$0xf]
    %v2417 = vld [vmem:[#allocation12 + $0x15c] sm:$0xff]
    %v2418 = vld [vmem:[#allocation12 + $0x164] sm:$0xf]
    %v2419 = vld [vmem:[#allocation12 + $0x168] sm:$0xff]
    %v2420 = vld [vmem:[#allocation12 + $0x170] sm:$0xf]
    %v2421 = vld [vmem:[#allocation12 + $0x174] sm:$0xff]
    %v2422 = vld [vmem:[#allocation12 + $0x17c] sm:$0xf]
    %v2423 = vld [vmem:[#allocation2] sm:$0xf]
    %v2424 = vld [vmem:[#allocation2 + $0x4] sm:$0xf]
    %v2425 = vld [vmem:[#allocation2 + $0x8] sm:$0xf]
    %v2426 = vld [vmem:[#allocation2 + $0xc] sm:$0xf]
    %v2427 = vld [vmem:[#allocation2 + $0x10] sm:$0xf]
    %v2428 = vld [vmem:[#allocation2 + $0x14] sm:$0xf]
    %v2429 = vld [vmem:[#allocation2 + $0x18] sm:$0xf]
    %v2430 = vld [vmem:[#allocation2 + $0x1c] sm:$0xf]
    %s2431 = scalar_lea.vmem [#allocation13], 4
    %v2432 = vld [vmem:[%s2431] ss:$8 sm:$0x7]
    %v2434 = vperm.slane %v2432, 0
    %v2435 = vperm.slane %v2432, 1
    %v2436 = vperm.slane %v2432, 2
    %v2448 = vunpack.c.l.b16 %v2423
    %v2449 = vunpack.c.l.b16 %v2424
    %v2450 = vunpack.c.l.b16 %v2425
    %v2451 = vunpack.c.l.b16 %v2426
    %v2452 = vunpack.c.l.b16 %v2427
    %v2453 = vunpack.c.l.b16 %v2428
    %v2454 = vunpack.c.l.b16 %v2429
    %v2455 = vunpack.c.l.b16 %v2430
    %v2456 = vpack.c.b16 %v2449, %v2448
    %v2457 = vpack.c.b16 %v2451, %v2450
    %v2458 = vpack.c.b16 %v2453, %v2452
    %v2459 = vpack.c.b16 %v2455, %v2454
    %v2496 = vunpack.c.l.b16 %v2359
    %v2497 = vunpack.c.h.b16 %v2359
    %v2498 = vunpack.c.l.b16 %v2360
    %v2499 = vunpack.c.l.b16 %v2361
    %v2500 = vunpack.c.h.b16 %v2361
    %v2501 = vunpack.c.l.b16 %v2362
    %v2502 = vunpack.c.l.b16 %v2363
    %v2503 = vunpack.c.h.b16 %v2363
    %v2504 = vunpack.c.l.b16 %v2364
    %v2505 = vunpack.c.l.b16 %v2365
    %v2506 = vunpack.c.h.b16 %v2365
    %v2507 = vunpack.c.l.b16 %v2366
    %v2508 = vunpack.c.l.b16 %v2367
    %v2509 = vunpack.c.h.b16 %v2367
    %v2510 = vunpack.c.l.b16 %v2368
    %v2511 = vunpack.c.l.b16 %v2369
    %v2512 = vunpack.c.h.b16 %v2369
    %v2513 = vunpack.c.l.b16 %v2370
    %v2514 = vunpack.c.l.b16 %v2371
    %v2515 = vunpack.c.h.b16 %v2371
    %v2516 = vunpack.c.l.b16 %v2372
    %v2517 = vunpack.c.l.b16 %v2373
    %v2518 = vunpack.c.h.b16 %v2373
    %v2519 = vunpack.c.l.b16 %v2374
    %v2520 = vunpack.c.l.b16 %v2375
    %v2521 = vunpack.c.h.b16 %v2375
    %v2522 = vunpack.c.l.b16 %v2376
    %v2523 = vunpack.c.l.b16 %v2377
    %v2524 = vunpack.c.h.b16 %v2377
    %v2525 = vunpack.c.l.b16 %v2378
    %v2526 = vunpack.c.l.b16 %v2379
    %v2527 = vunpack.c.h.b16 %v2379
    %v2528 = vunpack.c.l.b16 %v2380
    %v2529 = vunpack.c.l.b16 %v2381
    %v2530 = vunpack.c.h.b16 %v2381
    %v2531 = vunpack.c.l.b16 %v2382
    %v2532 = vunpack.c.l.b16 %v2383
    %v2533 = vunpack.c.h.b16 %v2383
    %v2534 = vunpack.c.l.b16 %v2384
    %v2535 = vunpack.c.l.b16 %v2385
    %v2536 = vunpack.c.h.b16 %v2385
    %v2537 = vunpack.c.l.b16 %v2386
    %v2538 = vunpack.c.l.b16 %v2387
    %v2539 = vunpack.c.h.b16 %v2387
    %v2540 = vunpack.c.l.b16 %v2388
    %v2541 = vunpack.c.l.b16 %v2389
    %v2542 = vunpack.c.h.b16 %v2389
    %v2543 = vunpack.c.l.b16 %v2390
    %v2544 = vpack.c.b16 %v2499, %v2496
    %v2545 = vpack.c.b16 %v2500, %v2497
    %v2546 = vpack.c.b16 %v2501, %v2498
    %v2547 = vpack.c.b16 %v2505, %v2502
    %v2548 = vpack.c.b16 %v2506, %v2503
    %v2549 = vpack.c.b16 %v2507, %v2504
    %v2550 = vpack.c.b16 %v2511, %v2508
    %v2551 = vpack.c.b16 %v2512, %v2509
    %v2552 = vpack.c.b16 %v2513, %v2510
    %v2553 = vpack.c.b16 %v2517, %v2514
    %v2554 = vpack.c.b16 %v2518, %v2515
    %v2555 = vpack.c.b16 %v2519, %v2516
    %v2556 = vpack.c.b16 %v2523, %v2520
    %v2557 = vpack.c.b16 %v2524, %v2521
    %v2558 = vpack.c.b16 %v2525, %v2522
    %v2559 = vpack.c.b16 %v2529, %v2526
    %v2560 = vpack.c.b16 %v2530, %v2527
    %v2561 = vpack.c.b16 %v2531, %v2528
    %v2562 = vpack.c.b16 %v2535, %v2532
    %v2563 = vpack.c.b16 %v2536, %v2533
    %v2564 = vpack.c.b16 %v2537, %v2534
    %v2565 = vpack.c.b16 %v2541, %v2538
    %v2566 = vpack.c.b16 %v2542, %v2539
    %v2567 = vpack.c.b16 %v2543, %v2540
    %2592 = vmatpush.bf16.msra.mxu0 %v2565
    %2593 = vmatpush.bf16.msra.mxu0 %v2562
    %2594 = vmatpush.bf16.msra.mxu0 %v2559
    %2595 = vmatpush.bf16.msra.mxu0 %v2556
    %2596 = vmatpush.bf16.msra.mxu0 %v2553
    %2597 = vmatpush.bf16.msra.mxu0 %v2550
    %2598 = vmatpush.bf16.msra.mxu0 %v2547
    %2599 = vmatpush.bf16.msra.mxu0 %v2544
    %2600 = vmatmul.bf16.gmra.mxu0 %v2456
    %v2601 = vpop.f32.mrf.mxu0
    %v2602 = vadd.f32 %v2434, %v2601
    %v2603 = vpop.f32.mrf.mxu0
    %v2604 = vadd.f32 %v2434, %v2603
    %2605 = vmatmul.bf16.gmra.mxu0 %v2457
    %v2606 = vpop.f32.mrf.mxu0
    %v2607 = vadd.f32 %v2434, %v2606
    %v2608 = vpop.f32.mrf.mxu0
    %v2609 = vadd.f32 %v2434, %v2608
    %2610 = vmatmul.bf16.gmra.mxu0 %v2458
    %v2611 = vpop.f32.mrf.mxu0
    %v2612 = vadd.f32 %v2434, %v2611
    %v2613 = vpop.f32.mrf.mxu0
    %v2614 = vadd.f32 %v2434, %v2613
    %2615 = vmatmul.bf16.gmra.mxu0 %v2459
    %v2616 = vpop.f32.mrf.mxu0
    %v2617 = vadd.f32 %v2434, %v2616
    %v2618 = vpop.f32.mrf.mxu0
    %v2619 = vadd.f32 %v2434, %v2618
    %2620 = vdwg.mxu0
    %2621 = vmatpush.bf16.msra.mxu0 %v2566
    %2622 = vmatpush.bf16.msra.mxu0 %v2563
    %2623 = vmatpush.bf16.msra.mxu0 %v2560
    %2624 = vmatpush.bf16.msra.mxu0 %v2557
    %2625 = vmatpush.bf16.msra.mxu0 %v2554
    %2626 = vmatpush.bf16.msra.mxu0 %v2551
    %2627 = vmatpush.bf16.msra.mxu0 %v2548
    %2628 = vmatpush.bf16.msra.mxu0 %v2545
    %2629 = vmatmul.bf16.gmra.mxu0 %v2456
    %v2630 = vpop.f32.mrf.mxu0
    %v2631 = vadd.f32 %v2435, %v2630
    %v2632 = vpop.f32.mrf.mxu0
    %v2633 = vadd.f32 %v2435, %v2632
    %2634 = vmatmul.bf16.gmra.mxu0 %v2457
    %v2635 = vpop.f32.mrf.mxu0
    %v2636 = vadd.f32 %v2435, %v2635
    %v2637 = vpop.f32.mrf.mxu0
    %v2638 = vadd.f32 %v2435, %v2637
    %2639 = vmatmul.bf16.gmra.mxu0 %v2458
    %v2640 = vpop.f32.mrf.mxu0
    %v2641 = vadd.f32 %v2435, %v2640
    %v2642 = vpop.f32.mrf.mxu0
    %v2643 = vadd.f32 %v2435, %v2642
    %2644 = vmatmul.bf16.gmra.mxu0 %v2459
    %v2645 = vpop.f32.mrf.mxu0
    %v2646 = vadd.f32 %v2435, %v2645
    %v2647 = vpop.f32.mrf.mxu0
    %v2648 = vadd.f32 %v2435, %v2647
    %2649 = vdwg.mxu0
    %2650 = vmatpush.bf16.msra.mxu0 %v2567
    %2651 = vmatpush.bf16.msra.mxu0 %v2564
    %2652 = vmatpush.bf16.msra.mxu0 %v2561
    %2653 = vmatpush.bf16.msra.mxu0 %v2558
    %2654 = vmatpush.bf16.msra.mxu0 %v2555
    %2655 = vmatpush.bf16.msra.mxu0 %v2552
    %2656 = vmatpush.bf16.msra.mxu0 %v2549
    %2657 = vmatpush.bf16.msra.mxu0 %v2546
    %2658 = vmatmul.bf16.gmra.mxu0 %v2456
    %v2659 = vpop.f32.mrf.mxu0
    %v2660 = vadd.f32 %v2436, %v2659
    %v2661 = vpop.f32.mrf.mxu0
    %v2662 = vadd.f32 %v2436, %v2661
    %2663 = vmatmul.bf16.gmra.mxu0 %v2457
    %v2664 = vpop.f32.mrf.mxu0
    %v2665 = vadd.f32 %v2436, %v2664
    %v2666 = vpop.f32.mrf.mxu0
    %v2667 = vadd.f32 %v2436, %v2666
    %2668 = vmatmul.bf16.gmra.mxu0 %v2458
    %v2669 = vpop.f32.mrf.mxu0
    %v2670 = vadd.f32 %v2436, %v2669
    %v2671 = vpop.f32.mrf.mxu0
    %v2672 = vadd.f32 %v2436, %v2671
    %2673 = vmatmul.bf16.gmra.mxu0 %v2459
    %v2674 = vpop.f32.mrf.mxu0
    %v2675 = vadd.f32 %v2436, %v2674
    %v2676 = vpop.f32.mrf.mxu0
    %v2677 = vadd.f32 %v2436, %v2676
    %2678 = vdwg.mxu0
    %2679 = vst [vmem:[#allocation3] sm:$0xff] %v2602
    %2680 = vst [vmem:[#allocation3 + $0x8] sm:$0xff] %v2631
    %2681 = vst [vmem:[#allocation3 + $0x10] sm:$0xff] %v2660
    %2682 = vst [vmem:[#allocation3 + $0x18] sm:$0xff] %v2604
    %2683 = vst [vmem:[#allocation3 + $0x20] sm:$0xff] %v2633
    %2684 = vst [vmem:[#allocation3 + $0x28] sm:$0xff] %v2662
    %2685 = vst [vmem:[#allocation3 + $0x30] sm:$0xff] %v2607
    %2686 = vst [vmem:[#allocation3 + $0x38] sm:$0xff] %v2636
    %2687 = vst [vmem:[#allocation3 + $0x40] sm:$0xff] %v2665
    %2688 = vst [vmem:[#allocation3 + $0x48] sm:$0xff] %v2609
    %2689 = vst [vmem:[#allocation3 + $0x50] sm:$0xff] %v2638
    %2690 = vst [vmem:[#allocation3 + $0x58] sm:$0xff] %v2667
    %2691 = vst [vmem:[#allocation3 + $0x60] sm:$0xff] %v2612
    %2692 = vst [vmem:[#allocation3 + $0x68] sm:$0xff] %v2641
    %2693 = vst [vmem:[#allocation3 + $0x70] sm:$0xff] %v2670
    %2694 = vst [vmem:[#allocation3 + $0x78] sm:$0xff] %v2614
    %2695 = vst [vmem:[#allocation3 + $0x80] sm:$0xff] %v2643
    %2696 = vst [vmem:[#allocation3 + $0x88] sm:$0xff] %v2672
    %2697 = vst [vmem:[#allocation3 + $0x90] sm:$0xff] %v2617
    %2698 = vst [vmem:[#allocation3 + $0x98] sm:$0xff] %v2646
    %2699 = vst [vmem:[#allocation3 + $0xa0] sm:$0xff] %v2675
    %2700 = vst [vmem:[#allocation3 + $0xa8] sm:$0xff] %v2619
    %2701 = vst [vmem:[#allocation3 + $0xb0] sm:$0xff] %v2648
    %2702 = vst [vmem:[#allocation3 + $0xb8] sm:$0xff] %v2677
    %s2703 = scalar_lea.vmem [#allocation13], 5
    %v2704 = vld [vmem:[%s2703] ss:$8 sm:$0x7]
    %v2706 = vperm.slane %v2704, 0
    %v2707 = vperm.slane %v2704, 1
    %v2708 = vperm.slane %v2704, 2
    %v2712 = vld [vmem:[#allocation3] sm:$0xff]
    %v2713 = vld [vmem:[#allocation3 + $0x8] sm:$0xff]
    %v2714 = vld [vmem:[#allocation3 + $0x10] sm:$0xff]
    %v2747 = vunpack.c.l.b16 %v2391
    %v2748 = vunpack.c.h.b16 %v2391
    %v2749 = vunpack.c.l.b16 %v2392
    %v2750 = vunpack.c.l.b16 %v2393
    %v2751 = vunpack.c.h.b16 %v2393
    %v2752 = vunpack.c.l.b16 %v2394
    %v2753 = vunpack.c.l.b16 %v2395
    %v2754 = vunpack.c.h.b16 %v2395
    %v2755 = vunpack.c.l.b16 %v2396
    %v2756 = vunpack.c.l.b16 %v2397
    %v2757 = vunpack.c.h.b16 %v2397
    %v2758 = vunpack.c.l.b16 %v2398
    %v2759 = vunpack.c.l.b16 %v2399
    %v2760 = vunpack.c.h.b16 %v2399
    %v2761 = vunpack.c.l.b16 %v2400
    %v2762 = vunpack.c.l.b16 %v2401
    %v2763 = vunpack.c.h.b16 %v2401
    %v2764 = vunpack.c.l.b16 %v2402
    %v2765 = vunpack.c.l.b16 %v2403
    %v2766 = vunpack.c.h.b16 %v2403
    %v2767 = vunpack.c.l.b16 %v2404
    %v2768 = vunpack.c.l.b16 %v2405
    %v2769 = vunpack.c.h.b16 %v2405
    %v2770 = vunpack.c.l.b16 %v2406
    %v2771 = vunpack.c.l.b16 %v2407
    %v2772 = vunpack.c.h.b16 %v2407
    %v2773 = vunpack.c.l.b16 %v2408
    %v2774 = vunpack.c.l.b16 %v2409
    %v2775 = vunpack.c.h.b16 %v2409
    %v2776 = vunpack.c.l.b16 %v2410
    %v2777 = vunpack.c.l.b16 %v2411
    %v2778 = vunpack.c.h.b16 %v2411
    %v2779 = vunpack.c.l.b16 %v2412
    %v2780 = vunpack.c.l.b16 %v2413
    %v2781 = vunpack.c.h.b16 %v2413
    %v2782 = vunpack.c.l.b16 %v2414
    %v2783 = vunpack.c.l.b16 %v2415
    %v2784 = vunpack.c.h.b16 %v2415
    %v2785 = vunpack.c.l.b16 %v2416
    %v2786 = vunpack.c.l.b16 %v2417
    %v2787 = vunpack.c.h.b16 %v2417
    %v2788 = vunpack.c.l.b16 %v2418
    %v2789 = vunpack.c.l.b16 %v2419
    %v2790 = vunpack.c.h.b16 %v2419
    %v2791 = vunpack.c.l.b16 %v2420
    %v2792 = vunpack.c.l.b16 %v2421
    %v2793 = vunpack.c.h.b16 %v2421
    %v2794 = vunpack.c.l.b16 %v2422
    %v2795 = vpack.c.b16 %v2750, %v2747
    %v2796 = vpack.c.b16 %v2751, %v2748
    %v2797 = vpack.c.b16 %v2752, %v2749
    %v2798 = vpack.c.b16 %v2756, %v2753
    %v2799 = vpack.c.b16 %v2757, %v2754
    %v2800 = vpack.c.b16 %v2758, %v2755
    %v2801 = vpack.c.b16 %v2762, %v2759
    %v2802 = vpack.c.b16 %v2763, %v2760
    %v2803 = vpack.c.b16 %v2764, %v2761
    %v2804 = vpack.c.b16 %v2768, %v2765
    %v2805 = vpack.c.b16 %v2769, %v2766
    %v2806 = vpack.c.b16 %v2770, %v2767
    %v2807 = vpack.c.b16 %v2774, %v2771
    %v2808 = vpack.c.b16 %v2775, %v2772
    %v2809 = vpack.c.b16 %v2776, %v2773
    %v2810 = vpack.c.b16 %v2780, %v2777
    %v2811 = vpack.c.b16 %v2781, %v2778
    %v2812 = vpack.c.b16 %v2782, %v2779
    %v2813 = vpack.c.b16 %v2786, %v2783
    %v2814 = vpack.c.b16 %v2787, %v2784
    %v2815 = vpack.c.b16 %v2788, %v2785
    %v2816 = vpack.c.b16 %v2792, %v2789
    %v2817 = vpack.c.b16 %v2793, %v2790
    %v2818 = vpack.c.b16 %v2794, %v2791
    %2843 = vmatpush.bf16.msra.mxu0 %v2816
    %2844 = vmatpush.bf16.msra.mxu0 %v2813
    %2845 = vmatpush.bf16.msra.mxu0 %v2810
    %2846 = vmatpush.bf16.msra.mxu0 %v2807
    %2847 = vmatpush.bf16.msra.mxu0 %v2804
    %2848 = vmatpush.bf16.msra.mxu0 %v2801
    %2849 = vmatpush.bf16.msra.mxu0 %v2798
    %2850 = vmatpush.bf16.msra.mxu0 %v2795
    %2851 = vmatmul.bf16.gmra.mxu0 0
    %v2852 = vpop.f32.mrf.mxu0
    %v2853 = vadd.f32 %v2706, %v2852
    %v2854 = vpop.f32.mrf.mxu0
    %2855 = vdwg.mxu0
    %2856 = vmatpush.bf16.msra.mxu0 %v2817
    %2857 = vmatpush.bf16.msra.mxu0 %v2814
    %2858 = vmatpush.bf16.msra.mxu0 %v2811
    %2859 = vmatpush.bf16.msra.mxu0 %v2808
    %2860 = vmatpush.bf16.msra.mxu0 %v2805
    %2861 = vmatpush.bf16.msra.mxu0 %v2802
    %2862 = vmatpush.bf16.msra.mxu0 %v2799
    %2863 = vmatpush.bf16.msra.mxu0 %v2796
    %2864 = vmatmul.bf16.gmra.mxu0 0
    %v2865 = vpop.f32.mrf.mxu0
    %v2866 = vadd.f32 %v2707, %v2865
    %v2867 = vpop.f32.mrf.mxu0
    %2868 = vdwg.mxu0
    %2869 = vmatpush.bf16.msra.mxu0 %v2818
    %2870 = vmatpush.bf16.msra.mxu0 %v2815
    %2871 = vmatpush.bf16.msra.mxu0 %v2812
    %2872 = vmatpush.bf16.msra.mxu0 %v2809
    %2873 = vmatpush.bf16.msra.mxu0 %v2806
    %2874 = vmatpush.bf16.msra.mxu0 %v2803
    %2875 = vmatpush.bf16.msra.mxu0 %v2800
    %2876 = vmatpush.bf16.msra.mxu0 %v2797
    %2877 = vmatmul.bf16.gmra.mxu0 0
    %v2878 = vpop.f32.mrf.mxu0
    %v2879 = vadd.f32 %v2708, %v2878
    %v2880 = vpop.f32.mrf.mxu0
    %2881 = vdwg.mxu0
    %v2882 = vadd.f32 %v2712, %v2853
    %v2883 = vxor.u32 %v2882, 2147483648
    %v2884 = vmul.f32 %v2883, 1.442695
    %v2885 = vpow.pop %v2884
    %v2886 = vadd.f32 %v2885, 1.0
    %v2887 = vrcp.pop %v2886
    %v2888 = vmul.f32 %v2886, %v2887
    %v2889 = vsub.f32 1.0, %v2888
    %v2890 = vmul.f32 %v2887, %v2889
    %v2891 = vadd.f32 %v2887, %v2890
    %vm2892 = vweird.f32 %v2886
    %vm2893 = vweird.f32 %v2887
    %vm2894 = vmor %vm2892, %vm2893
    %v2895 = vsel %vm2894, %v2887, %v2891
    %v2896 = vand.u32 2147483647, %v2886
    %vm2897 = vcmp.eq.f32.partialorder %v2896, 8.507059e+37
    %v2898 = vand.u32 %v2886, 2147483648
    %v2899 = vor.u32 1.1754944e-38, %v2898
    %v2900 = vsel %vm2897, %v2899, %v2895
    %v2901 = vmul.f32 1.0, %v2900
    %v2902 = vadd.f32 %v2713, %v2866
    %v2903 = vxor.u32 %v2902, 2147483648
    %v2904 = vmul.f32 %v2903, 1.442695
    %v2905 = vpow.pop %v2904
    %v2906 = vadd.f32 %v2905, 1.0
    %v2907 = vrcp.pop %v2906
    %v2908 = vmul.f32 %v2906, %v2907
    %v2909 = vsub.f32 1.0, %v2908
    %v2910 = vmul.f32 %v2907, %v2909
    %v2911 = vadd.f32 %v2907, %v2910
    %vm2912 = vweird.f32 %v2906
    %vm2913 = vweird.f32 %v2907
    %vm2914 = vmor %vm2912, %vm2913
    %v2915 = vsel %vm2914, %v2907, %v2911
    %v2916 = vand.u32 2147483647, %v2906
    %vm2917 = vcmp.eq.f32.partialorder %v2916, 8.507059e+37
    %v2918 = vand.u32 %v2906, 2147483648
    %v2919 = vor.u32 1.1754944e-38, %v2918
    %v2920 = vsel %vm2917, %v2919, %v2915
    %v2921 = vmul.f32 1.0, %v2920
    %v2922 = vmul.f32 %v2901, %v2879
    %v2923 = vadd.f32 %v2714, %v2922
    %v2924 = vtanh.pop %v2923
    %v2925 = vsub.f32 1.0, %v2921
    %v2926 = vmul.f32 %v2925, %v2924
    %v2927 = vmul.f32 %v2921, 0.0
    %v2928 = vadd.f32 %v2926, %v2927
    %v2929 = vpack.c.bf16 %v2928, %v2928
    %2930 = vst [vmem:[#allocation2] sm:$0xf] %v2929
    %v2931 = vld [vmem:[#allocation3 + $0x18] sm:$0xff]
    %v2932 = vld [vmem:[#allocation3 + $0x20] sm:$0xff]
    %v2933 = vld [vmem:[#allocation3 + $0x28] sm:$0xff]
    %2934 = vmatpush.bf16.msra.mxu0 %v2816
    %2935 = vmatpush.bf16.msra.mxu0 %v2813
    %2936 = vmatpush.bf16.msra.mxu0 %v2810
    %2937 = vmatpush.bf16.msra.mxu0 %v2807
    %2938 = vmatpush.bf16.msra.mxu0 %v2804
    %2939 = vmatpush.bf16.msra.mxu0 %v2801
    %2940 = vmatpush.bf16.msra.mxu0 %v2798
    %2941 = vmatpush.bf16.msra.mxu0 %v2795
    %2942 = vmatmul.bf16.gmra.mxu0 %v2929
    %v2943 = vpop.f32.mrf.mxu0
    %v2944 = vadd.f32 %v2706, %v2943
    %v2945 = vpop.f32.mrf.mxu0
    %2946 = vdwg.mxu0
    %2947 = vmatpush.bf16.msra.mxu0 %v2817
    %2948 = vmatpush.bf16.msra.mxu0 %v2814
    %2949 = vmatpush.bf16.msra.mxu0 %v2811
    %2950 = vmatpush.bf16.msra.mxu0 %v2808
    %2951 = vmatpush.bf16.msra.mxu0 %v2805
    %2952 = vmatpush.bf16.msra.mxu0 %v2802
    %2953 = vmatpush.bf16.msra.mxu0 %v2799
    %2954 = vmatpush.bf16.msra.mxu0 %v2796
    %2955 = vmatmul.bf16.gmra.mxu0 %v2929
    %v2956 = vpop.f32.mrf.mxu0
    %v2957 = vadd.f32 %v2707, %v2956
    %v2958 = vpop.f32.mrf.mxu0
    %2959 = vdwg.mxu0
    %2960 = vmatpush.bf16.msra.mxu0 %v2818
    %2961 = vmatpush.bf16.msra.mxu0 %v2815
    %2962 = vmatpush.bf16.msra.mxu0 %v2812
    %2963 = vmatpush.bf16.msra.mxu0 %v2809
    %2964 = vmatpush.bf16.msra.mxu0 %v2806
    %2965 = vmatpush.bf16.msra.mxu0 %v2803
    %2966 = vmatpush.bf16.msra.mxu0 %v2800
    %2967 = vmatpush.bf16.msra.mxu0 %v2797
    %2968 = vmatmul.bf16.gmra.mxu0 %v2929
    %v2969 = vpop.f32.mrf.mxu0
    %v2970 = vadd.f32 %v2708, %v2969
    %v2971 = vpop.f32.mrf.mxu0
    %2972 = vdwg.mxu0
    %v2973 = vadd.f32 %v2931, %v2944
    %v2974 = vxor.u32 %v2973, 2147483648
    %v2975 = vmul.f32 %v2974, 1.442695
    %v2976 = vpow.pop %v2975
    %v2977 = vadd.f32 %v2976, 1.0
    %v2978 = vrcp.pop %v2977
    %v2979 = vmul.f32 %v2977, %v2978
    %v2980 = vsub.f32 1.0, %v2979
    %v2981 = vmul.f32 %v2978, %v2980
    %v2982 = vadd.f32 %v2978, %v2981
    %vm2983 = vweird.f32 %v2977
    %vm2984 = vweird.f32 %v2978
    %vm2985 = vmor %vm2983, %vm2984
    %v2986 = vsel %vm2985, %v2978, %v2982
    %v2987 = vand.u32 2147483647, %v2977
    %vm2988 = vcmp.eq.f32.partialorder %v2987, 8.507059e+37
    %v2989 = vand.u32 %v2977, 2147483648
    %v2990 = vor.u32 1.1754944e-38, %v2989
    %v2991 = vsel %vm2988, %v2990, %v2986
    %v2992 = vmul.f32 1.0, %v2991
    %v2993 = vadd.f32 %v2932, %v2957
    %v2994 = vxor.u32 %v2993, 2147483648
    %v2995 = vmul.f32 %v2994, 1.442695
    %v2996 = vpow.pop %v2995
    %v2997 = vadd.f32 %v2996, 1.0
    %v2998 = vrcp.pop %v2997
    %v2999 = vmul.f32 %v2997, %v2998
    %v3000 = vsub.f32 1.0, %v2999
    %v3001 = vmul.f32 %v2998, %v3000
    %v3002 = vadd.f32 %v2998, %v3001
    %vm3003 = vweird.f32 %v2997
    %vm3004 = vweird.f32 %v2998
    %vm3005 = vmor %vm3003, %vm3004
    %v3006 = vsel %vm3005, %v2998, %v3002
    %v3007 = vand.u32 2147483647, %v2997
    %vm3008 = vcmp.eq.f32.partialorder %v3007, 8.507059e+37
    %v3009 = vand.u32 %v2997, 2147483648
    %v3010 = vor.u32 1.1754944e-38, %v3009
    %v3011 = vsel %vm3008, %v3010, %v3006
    %v3012 = vmul.f32 1.0, %v3011
    %v3013 = vmul.f32 %v2992, %v2970
    %v3014 = vadd.f32 %v2933, %v3013
    %v3015 = vtanh.pop %v3014
    %v3016 = vsub.f32 1.0, %v3012
    %v3017 = vmul.f32 %v3016, %v3015
    %v3018 = vmul.f32 %v3012, %v2928
    %v3019 = vadd.f32 %v3017, %v3018
    %v3020 = vpack.c.bf16 %v3019, %v3019
    %3021 = vst [vmem:[#allocation2 + $0x4] sm:$0xf] %v3020
    %v3022 = vld [vmem:[#allocation3 + $0x30] sm:$0xff]
    %v3023 = vld [vmem:[#allocation3 + $0x38] sm:$0xff]
    %v3024 = vld [vmem:[#allocation3 + $0x40] sm:$0xff]
    %3025 = vmatpush.bf16.msra.mxu0 %v2816
    %3026 = vmatpush.bf16.msra.mxu0 %v2813
    %3027 = vmatpush.bf16.msra.mxu0 %v2810
    %3028 = vmatpush.bf16.msra.mxu0 %v2807
    %3029 = vmatpush.bf16.msra.mxu0 %v2804
    %3030 = vmatpush.bf16.msra.mxu0 %v2801
    %3031 = vmatpush.bf16.msra.mxu0 %v2798
    %3032 = vmatpush.bf16.msra.mxu0 %v2795
    %3033 = vmatmul.bf16.gmra.mxu0 %v3020
    %v3034 = vpop.f32.mrf.mxu0
    %v3035 = vadd.f32 %v2706, %v3034
    %v3036 = vpop.f32.mrf.mxu0
    %3037 = vdwg.mxu0
    %3038 = vmatpush.bf16.msra.mxu0 %v2817
    %3039 = vmatpush.bf16.msra.mxu0 %v2814
    %3040 = vmatpush.bf16.msra.mxu0 %v2811
    %3041 = vmatpush.bf16.msra.mxu0 %v2808
    %3042 = vmatpush.bf16.msra.mxu0 %v2805
    %3043 = vmatpush.bf16.msra.mxu0 %v2802
    %3044 = vmatpush.bf16.msra.mxu0 %v2799
    %3045 = vmatpush.bf16.msra.mxu0 %v2796
    %3046 = vmatmul.bf16.gmra.mxu0 %v3020
    %v3047 = vpop.f32.mrf.mxu0
    %v3048 = vadd.f32 %v2707, %v3047
    %v3049 = vpop.f32.mrf.mxu0
    %3050 = vdwg.mxu0
    %3051 = vmatpush.bf16.msra.mxu0 %v2818
    %3052 = vmatpush.bf16.msra.mxu0 %v2815
    %3053 = vmatpush.bf16.msra.mxu0 %v2812
    %3054 = vmatpush.bf16.msra.mxu0 %v2809
    %3055 = vmatpush.bf16.msra.mxu0 %v2806
    %3056 = vmatpush.bf16.msra.mxu0 %v2803
    %3057 = vmatpush.bf16.msra.mxu0 %v2800
    %3058 = vmatpush.bf16.msra.mxu0 %v2797
    %3059 = vmatmul.bf16.gmra.mxu0 %v3020
    %v3060 = vpop.f32.mrf.mxu0
    %v3061 = vadd.f32 %v2708, %v3060
    %v3062 = vpop.f32.mrf.mxu0
    %3063 = vdwg.mxu0
    %v3064 = vadd.f32 %v3022, %v3035
    %v3065 = vxor.u32 %v3064, 2147483648
    %v3066 = vmul.f32 %v3065, 1.442695
    %v3067 = vpow.pop %v3066
    %v3068 = vadd.f32 %v3067, 1.0
    %v3069 = vrcp.pop %v3068
    %v3070 = vmul.f32 %v3068, %v3069
    %v3071 = vsub.f32 1.0, %v3070
    %v3072 = vmul.f32 %v3069, %v3071
    %v3073 = vadd.f32 %v3069, %v3072
    %vm3074 = vweird.f32 %v3068
    %vm3075 = vweird.f32 %v3069
    %vm3076 = vmor %vm3074, %vm3075
    %v3077 = vsel %vm3076, %v3069, %v3073
    %v3078 = vand.u32 2147483647, %v3068
    %vm3079 = vcmp.eq.f32.partialorder %v3078, 8.507059e+37
    %v3080 = vand.u32 %v3068, 2147483648
    %v3081 = vor.u32 1.1754944e-38, %v3080
    %v3082 = vsel %vm3079, %v3081, %v3077
    %v3083 = vmul.f32 1.0, %v3082
    %v3084 = vadd.f32 %v3023, %v3048
    %v3085 = vxor.u32 %v3084, 2147483648
    %v3086 = vmul.f32 %v3085, 1.442695
    %v3087 = vpow.pop %v3086
    %v3088 = vadd.f32 %v3087, 1.0
    %v3089 = vrcp.pop %v3088
    %v3090 = vmul.f32 %v3088, %v3089
    %v3091 = vsub.f32 1.0, %v3090
    %v3092 = vmul.f32 %v3089, %v3091
    %v3093 = vadd.f32 %v3089, %v3092
    %vm3094 = vweird.f32 %v3088
    %vm3095 = vweird.f32 %v3089
    %vm3096 = vmor %vm3094, %vm3095
    %v3097 = vsel %vm3096, %v3089, %v3093
    %v3098 = vand.u32 2147483647, %v3088
    %vm3099 = vcmp.eq.f32.partialorder %v3098, 8.507059e+37
    %v3100 = vand.u32 %v3088, 2147483648
    %v3101 = vor.u32 1.1754944e-38, %v3100
    %v3102 = vsel %vm3099, %v3101, %v3097
    %v3103 = vmul.f32 1.0, %v3102
    %v3104 = vmul.f32 %v3083, %v3061
    %v3105 = vadd.f32 %v3024, %v3104
    %v3106 = vtanh.pop %v3105
    %v3107 = vsub.f32 1.0, %v3103
    %v3108 = vmul.f32 %v3107, %v3106
    %v3109 = vmul.f32 %v3103, %v3019
    %v3110 = vadd.f32 %v3108, %v3109
    %v3111 = vpack.c.bf16 %v3110, %v3110
    %3112 = vst [vmem:[#allocation2 + $0x8] sm:$0xf] %v3111
    %v3113 = vld [vmem:[#allocation3 + $0x48] sm:$0xff]
    %v3114 = vld [vmem:[#allocation3 + $0x50] sm:$0xff]
    %v3115 = vld [vmem:[#allocation3 + $0x58] sm:$0xff]
    %3116 = vmatpush.bf16.msra.mxu0 %v2816
    %3117 = vmatpush.bf16.msra.mxu0 %v2813
    %3118 = vmatpush.bf16.msra.mxu0 %v2810
    %3119 = vmatpush.bf16.msra.mxu0 %v2807
    %3120 = vmatpush.bf16.msra.mxu0 %v2804
    %3121 = vmatpush.bf16.msra.mxu0 %v2801
    %3122 = vmatpush.bf16.msra.mxu0 %v2798
    %3123 = vmatpush.bf16.msra.mxu0 %v2795
    %3124 = vmatmul.bf16.gmra.mxu0 %v3111
    %v3125 = vpop.f32.mrf.mxu0
    %v3126 = vadd.f32 %v2706, %v3125
    %v3127 = vpop.f32.mrf.mxu0
    %3128 = vdwg.mxu0
    %3129 = vmatpush.bf16.msra.mxu0 %v2817
    %3130 = vmatpush.bf16.msra.mxu0 %v2814
    %3131 = vmatpush.bf16.msra.mxu0 %v2811
    %3132 = vmatpush.bf16.msra.mxu0 %v2808
    %3133 = vmatpush.bf16.msra.mxu0 %v2805
    %3134 = vmatpush.bf16.msra.mxu0 %v2802
    %3135 = vmatpush.bf16.msra.mxu0 %v2799
    %3136 = vmatpush.bf16.msra.mxu0 %v2796
    %3137 = vmatmul.bf16.gmra.mxu0 %v3111
    %v3138 = vpop.f32.mrf.mxu0
    %v3139 = vadd.f32 %v2707, %v3138
    %v3140 = vpop.f32.mrf.mxu0
    %3141 = vdwg.mxu0
    %3142 = vmatpush.bf16.msra.mxu0 %v2818
    %3143 = vmatpush.bf16.msra.mxu0 %v2815
    %3144 = vmatpush.bf16.msra.mxu0 %v2812
    %3145 = vmatpush.bf16.msra.mxu0 %v2809
    %3146 = vmatpush.bf16.msra.mxu0 %v2806
    %3147 = vmatpush.bf16.msra.mxu0 %v2803
    %3148 = vmatpush.bf16.msra.mxu0 %v2800
    %3149 = vmatpush.bf16.msra.mxu0 %v2797
    %3150 = vmatmul.bf16.gmra.mxu0 %v3111
    %v3151 = vpop.f32.mrf.mxu0
    %v3152 = vadd.f32 %v2708, %v3151
    %v3153 = vpop.f32.mrf.mxu0
    %3154 = vdwg.mxu0
    %v3155 = vadd.f32 %v3113, %v3126
    %v3156 = vxor.u32 %v3155, 2147483648
    %v3157 = vmul.f32 %v3156, 1.442695
    %v3158 = vpow.pop %v3157
    %v3159 = vadd.f32 %v3158, 1.0
    %v3160 = vrcp.pop %v3159
    %v3161 = vmul.f32 %v3159, %v3160
    %v3162 = vsub.f32 1.0, %v3161
    %v3163 = vmul.f32 %v3160, %v3162
    %v3164 = vadd.f32 %v3160, %v3163
    %vm3165 = vweird.f32 %v3159
    %vm3166 = vweird.f32 %v3160
    %vm3167 = vmor %vm3165, %vm3166
    %v3168 = vsel %vm3167, %v3160, %v3164
    %v3169 = vand.u32 2147483647, %v3159
    %vm3170 = vcmp.eq.f32.partialorder %v3169, 8.507059e+37
    %v3171 = vand.u32 %v3159, 2147483648
    %v3172 = vor.u32 1.1754944e-38, %v3171
    %v3173 = vsel %vm3170, %v3172, %v3168
    %v3174 = vmul.f32 1.0, %v3173
    %v3175 = vadd.f32 %v3114, %v3139
    %v3176 = vxor.u32 %v3175, 2147483648
    %v3177 = vmul.f32 %v3176, 1.442695
    %v3178 = vpow.pop %v3177
    %v3179 = vadd.f32 %v3178, 1.0
    %v3180 = vrcp.pop %v3179
    %v3181 = vmul.f32 %v3179, %v3180
    %v3182 = vsub.f32 1.0, %v3181
    %v3183 = vmul.f32 %v3180, %v3182
    %v3184 = vadd.f32 %v3180, %v3183
    %vm3185 = vweird.f32 %v3179
    %vm3186 = vweird.f32 %v3180
    %vm3187 = vmor %vm3185, %vm3186
    %v3188 = vsel %vm3187, %v3180, %v3184
    %v3189 = vand.u32 2147483647, %v3179
    %vm3190 = vcmp.eq.f32.partialorder %v3189, 8.507059e+37
    %v3191 = vand.u32 %v3179, 2147483648
    %v3192 = vor.u32 1.1754944e-38, %v3191
    %v3193 = vsel %vm3190, %v3192, %v3188
    %v3194 = vmul.f32 1.0, %v3193
    %v3195 = vmul.f32 %v3174, %v3152
    %v3196 = vadd.f32 %v3115, %v3195
    %v3197 = vtanh.pop %v3196
    %v3198 = vsub.f32 1.0, %v3194
    %v3199 = vmul.f32 %v3198, %v3197
    %v3200 = vmul.f32 %v3194, %v3110
    %v3201 = vadd.f32 %v3199, %v3200
    %v3202 = vpack.c.bf16 %v3201, %v3201
    %3203 = vst [vmem:[#allocation2 + $0xc] sm:$0xf] %v3202
    %v3204 = vld [vmem:[#allocation3 + $0x60] sm:$0xff]
    %v3205 = vld [vmem:[#allocation3 + $0x68] sm:$0xff]
    %v3206 = vld [vmem:[#allocation3 + $0x70] sm:$0xff]
    %3207 = vmatpush.bf16.msra.mxu0 %v2816
    %3208 = vmatpush.bf16.msra.mxu0 %v2813
    %3209 = vmatpush.bf16.msra.mxu0 %v2810
    %3210 = vmatpush.bf16.msra.mxu0 %v2807
    %3211 = vmatpush.bf16.msra.mxu0 %v2804
    %3212 = vmatpush.bf16.msra.mxu0 %v2801
    %3213 = vmatpush.bf16.msra.mxu0 %v2798
    %3214 = vmatpush.bf16.msra.mxu0 %v2795
    %3215 = vmatmul.bf16.gmra.mxu0 %v3202
    %v3216 = vpop.f32.mrf.mxu0
    %v3217 = vadd.f32 %v2706, %v3216
    %v3218 = vpop.f32.mrf.mxu0
    %3219 = vdwg.mxu0
    %3220 = vmatpush.bf16.msra.mxu0 %v2817
    %3221 = vmatpush.bf16.msra.mxu0 %v2814
    %3222 = vmatpush.bf16.msra.mxu0 %v2811
    %3223 = vmatpush.bf16.msra.mxu0 %v2808
    %3224 = vmatpush.bf16.msra.mxu0 %v2805
    %3225 = vmatpush.bf16.msra.mxu0 %v2802
    %3226 = vmatpush.bf16.msra.mxu0 %v2799
    %3227 = vmatpush.bf16.msra.mxu0 %v2796
    %3228 = vmatmul.bf16.gmra.mxu0 %v3202
    %v3229 = vpop.f32.mrf.mxu0
    %v3230 = vadd.f32 %v2707, %v3229
    %v3231 = vpop.f32.mrf.mxu0
    %3232 = vdwg.mxu0
    %3233 = vmatpush.bf16.msra.mxu0 %v2818
    %3234 = vmatpush.bf16.msra.mxu0 %v2815
    %3235 = vmatpush.bf16.msra.mxu0 %v2812
    %3236 = vmatpush.bf16.msra.mxu0 %v2809
    %3237 = vmatpush.bf16.msra.mxu0 %v2806
    %3238 = vmatpush.bf16.msra.mxu0 %v2803
    %3239 = vmatpush.bf16.msra.mxu0 %v2800
    %3240 = vmatpush.bf16.msra.mxu0 %v2797
    %3241 = vmatmul.bf16.gmra.mxu0 %v3202
    %v3242 = vpop.f32.mrf.mxu0
    %v3243 = vadd.f32 %v2708, %v3242
    %v3244 = vpop.f32.mrf.mxu0
    %3245 = vdwg.mxu0
    %v3246 = vadd.f32 %v3204, %v3217
    %v3247 = vxor.u32 %v3246, 2147483648
    %v3248 = vmul.f32 %v3247, 1.442695
    %v3249 = vpow.pop %v3248
    %v3250 = vadd.f32 %v3249, 1.0
    %v3251 = vrcp.pop %v3250
    %v3252 = vmul.f32 %v3250, %v3251
    %v3253 = vsub.f32 1.0, %v3252
    %v3254 = vmul.f32 %v3251, %v3253
    %v3255 = vadd.f32 %v3251, %v3254
    %vm3256 = vweird.f32 %v3250
    %vm3257 = vweird.f32 %v3251
    %vm3258 = vmor %vm3256, %vm3257
    %v3259 = vsel %vm3258, %v3251, %v3255
    %v3260 = vand.u32 2147483647, %v3250
    %vm3261 = vcmp.eq.f32.partialorder %v3260, 8.507059e+37
    %v3262 = vand.u32 %v3250, 2147483648
    %v3263 = vor.u32 1.1754944e-38, %v3262
    %v3264 = vsel %vm3261, %v3263, %v3259
    %v3265 = vmul.f32 1.0, %v3264
    %v3266 = vadd.f32 %v3205, %v3230
    %v3267 = vxor.u32 %v3266, 2147483648
    %v3268 = vmul.f32 %v3267, 1.442695
    %v3269 = vpow.pop %v3268
    %v3270 = vadd.f32 %v3269, 1.0
    %v3271 = vrcp.pop %v3270
    %v3272 = vmul.f32 %v3270, %v3271
    %v3273 = vsub.f32 1.0, %v3272
    %v3274 = vmul.f32 %v3271, %v3273
    %v3275 = vadd.f32 %v3271, %v3274
    %vm3276 = vweird.f32 %v3270
    %vm3277 = vweird.f32 %v3271
    %vm3278 = vmor %vm3276, %vm3277
    %v3279 = vsel %vm3278, %v3271, %v3275
    %v3280 = vand.u32 2147483647, %v3270
    %vm3281 = vcmp.eq.f32.partialorder %v3280, 8.507059e+37
    %v3282 = vand.u32 %v3270, 2147483648
    %v3283 = vor.u32 1.1754944e-38, %v3282
    %v3284 = vsel %vm3281, %v3283, %v3279
    %v3285 = vmul.f32 1.0, %v3284
    %v3286 = vmul.f32 %v3265, %v3243
    %v3287 = vadd.f32 %v3206, %v3286
    %v3288 = vtanh.pop %v3287
    %v3289 = vsub.f32 1.0, %v3285
    %v3290 = vmul.f32 %v3289, %v3288
    %v3291 = vmul.f32 %v3285, %v3201
    %v3292 = vadd.f32 %v3290, %v3291
    %v3293 = vpack.c.bf16 %v3292, %v3292
    %3294 = vst [vmem:[#allocation2 + $0x10] sm:$0xf] %v3293
    %v3295 = vld [vmem:[#allocation3 + $0x78] sm:$0xff]
    %v3296 = vld [vmem:[#allocation3 + $0x80] sm:$0xff]
    %v3297 = vld [vmem:[#allocation3 + $0x88] sm:$0xff]
    %3298 = vmatpush.bf16.msra.mxu0 %v2816
    %3299 = vmatpush.bf16.msra.mxu0 %v2813
    %3300 = vmatpush.bf16.msra.mxu0 %v2810
    %3301 = vmatpush.bf16.msra.mxu0 %v2807
    %3302 = vmatpush.bf16.msra.mxu0 %v2804
    %3303 = vmatpush.bf16.msra.mxu0 %v2801
    %3304 = vmatpush.bf16.msra.mxu0 %v2798
    %3305 = vmatpush.bf16.msra.mxu0 %v2795
    %3306 = vmatmul.bf16.gmra.mxu0 %v3293
    %v3307 = vpop.f32.mrf.mxu0
    %v3308 = vadd.f32 %v2706, %v3307
    %v3309 = vpop.f32.mrf.mxu0
    %3310 = vdwg.mxu0
    %3311 = vmatpush.bf16.msra.mxu0 %v2817
    %3312 = vmatpush.bf16.msra.mxu0 %v2814
    %3313 = vmatpush.bf16.msra.mxu0 %v2811
    %3314 = vmatpush.bf16.msra.mxu0 %v2808
    %3315 = vmatpush.bf16.msra.mxu0 %v2805
    %3316 = vmatpush.bf16.msra.mxu0 %v2802
    %3317 = vmatpush.bf16.msra.mxu0 %v2799
    %3318 = vmatpush.bf16.msra.mxu0 %v2796
    %3319 = vmatmul.bf16.gmra.mxu0 %v3293
    %v3320 = vpop.f32.mrf.mxu0
    %v3321 = vadd.f32 %v2707, %v3320
    %v3322 = vpop.f32.mrf.mxu0
    %3323 = vdwg.mxu0
    %3324 = vmatpush.bf16.msra.mxu0 %v2818
    %3325 = vmatpush.bf16.msra.mxu0 %v2815
    %3326 = vmatpush.bf16.msra.mxu0 %v2812
    %3327 = vmatpush.bf16.msra.mxu0 %v2809
    %3328 = vmatpush.bf16.msra.mxu0 %v2806
    %3329 = vmatpush.bf16.msra.mxu0 %v2803
    %3330 = vmatpush.bf16.msra.mxu0 %v2800
    %3331 = vmatpush.bf16.msra.mxu0 %v2797
    %3332 = vmatmul.bf16.gmra.mxu0 %v3293
    %v3333 = vpop.f32.mrf.mxu0
    %v3334 = vadd.f32 %v2708, %v3333
    %v3335 = vpop.f32.mrf.mxu0
    %3336 = vdwg.mxu0
    %v3337 = vadd.f32 %v3295, %v3308
    %v3338 = vxor.u32 %v3337, 2147483648
    %v3339 = vmul.f32 %v3338, 1.442695
    %v3340 = vpow.pop %v3339
    %v3341 = vadd.f32 %v3340, 1.0
    %v3342 = vrcp.pop %v3341
    %v3343 = vmul.f32 %v3341, %v3342
    %v3344 = vsub.f32 1.0, %v3343
    %v3345 = vmul.f32 %v3342, %v3344
    %v3346 = vadd.f32 %v3342, %v3345
    %vm3347 = vweird.f32 %v3341
    %vm3348 = vweird.f32 %v3342
    %vm3349 = vmor %vm3347, %vm3348
    %v3350 = vsel %vm3349, %v3342, %v3346
    %v3351 = vand.u32 2147483647, %v3341
    %vm3352 = vcmp.eq.f32.partialorder %v3351, 8.507059e+37
    %v3353 = vand.u32 %v3341, 2147483648
    %v3354 = vor.u32 1.1754944e-38, %v3353
    %v3355 = vsel %vm3352, %v3354, %v3350
    %v3356 = vmul.f32 1.0, %v3355
    %v3357 = vadd.f32 %v3296, %v3321
    %v3358 = vxor.u32 %v3357, 2147483648
    %v3359 = vmul.f32 %v3358, 1.442695
    %v3360 = vpow.pop %v3359
    %v3361 = vadd.f32 %v3360, 1.0
    %v3362 = vrcp.pop %v3361
    %v3363 = vmul.f32 %v3361, %v3362
    %v3364 = vsub.f32 1.0, %v3363
    %v3365 = vmul.f32 %v3362, %v3364
    %v3366 = vadd.f32 %v3362, %v3365
    %vm3367 = vweird.f32 %v3361
    %vm3368 = vweird.f32 %v3362
    %vm3369 = vmor %vm3367, %vm3368
    %v3370 = vsel %vm3369, %v3362, %v3366
    %v3371 = vand.u32 2147483647, %v3361
    %vm3372 = vcmp.eq.f32.partialorder %v3371, 8.507059e+37
    %v3373 = vand.u32 %v3361, 2147483648
    %v3374 = vor.u32 1.1754944e-38, %v3373
    %v3375 = vsel %vm3372, %v3374, %v3370
    %v3376 = vmul.f32 1.0, %v3375
    %v3377 = vmul.f32 %v3356, %v3334
    %v3378 = vadd.f32 %v3297, %v3377
    %v3379 = vtanh.pop %v3378
    %v3380 = vsub.f32 1.0, %v3376
    %v3381 = vmul.f32 %v3380, %v3379
    %v3382 = vmul.f32 %v3376, %v3292
    %v3383 = vadd.f32 %v3381, %v3382
    %v3384 = vpack.c.bf16 %v3383, %v3383
    %3385 = vst [vmem:[#allocation2 + $0x14] sm:$0xf] %v3384
    %v3386 = vld [vmem:[#allocation3 + $0x90] sm:$0xff]
    %v3387 = vld [vmem:[#allocation3 + $0x98] sm:$0xff]
    %v3388 = vld [vmem:[#allocation3 + $0xa0] sm:$0xff]
    %3389 = vmatpush.bf16.msra.mxu0 %v2816
    %3390 = vmatpush.bf16.msra.mxu0 %v2813
    %3391 = vmatpush.bf16.msra.mxu0 %v2810
    %3392 = vmatpush.bf16.msra.mxu0 %v2807
    %3393 = vmatpush.bf16.msra.mxu0 %v2804
    %3394 = vmatpush.bf16.msra.mxu0 %v2801
    %3395 = vmatpush.bf16.msra.mxu0 %v2798
    %3396 = vmatpush.bf16.msra.mxu0 %v2795
    %3397 = vmatmul.bf16.gmra.mxu0 %v3384
    %v3398 = vpop.f32.mrf.mxu0
    %v3399 = vadd.f32 %v2706, %v3398
    %v3400 = vpop.f32.mrf.mxu0
    %3401 = vdwg.mxu0
    %3402 = vmatpush.bf16.msra.mxu0 %v2817
    %3403 = vmatpush.bf16.msra.mxu0 %v2814
    %3404 = vmatpush.bf16.msra.mxu0 %v2811
    %3405 = vmatpush.bf16.msra.mxu0 %v2808
    %3406 = vmatpush.bf16.msra.mxu0 %v2805
    %3407 = vmatpush.bf16.msra.mxu0 %v2802
    %3408 = vmatpush.bf16.msra.mxu0 %v2799
    %3409 = vmatpush.bf16.msra.mxu0 %v2796
    %3410 = vmatmul.bf16.gmra.mxu0 %v3384
    %v3411 = vpop.f32.mrf.mxu0
    %v3412 = vadd.f32 %v2707, %v3411
    %v3413 = vpop.f32.mrf.mxu0
    %3414 = vdwg.mxu0
    %3415 = vmatpush.bf16.msra.mxu0 %v2818
    %3416 = vmatpush.bf16.msra.mxu0 %v2815
    %3417 = vmatpush.bf16.msra.mxu0 %v2812
    %3418 = vmatpush.bf16.msra.mxu0 %v2809
    %3419 = vmatpush.bf16.msra.mxu0 %v2806
    %3420 = vmatpush.bf16.msra.mxu0 %v2803
    %3421 = vmatpush.bf16.msra.mxu0 %v2800
    %3422 = vmatpush.bf16.msra.mxu0 %v2797
    %3423 = vmatmul.bf16.gmra.mxu0 %v3384
    %v3424 = vpop.f32.mrf.mxu0
    %v3425 = vadd.f32 %v2708, %v3424
    %v3426 = vpop.f32.mrf.mxu0
    %3427 = vdwg.mxu0
    %v3428 = vadd.f32 %v3386, %v3399
    %v3429 = vxor.u32 %v3428, 2147483648
    %v3430 = vmul.f32 %v3429, 1.442695
    %v3431 = vpow.pop %v3430
    %v3432 = vadd.f32 %v3431, 1.0
    %v3433 = vrcp.pop %v3432
    %v3434 = vmul.f32 %v3432, %v3433
    %v3435 = vsub.f32 1.0, %v3434
    %v3436 = vmul.f32 %v3433, %v3435
    %v3437 = vadd.f32 %v3433, %v3436
    %vm3438 = vweird.f32 %v3432
    %vm3439 = vweird.f32 %v3433
    %vm3440 = vmor %vm3438, %vm3439
    %v3441 = vsel %vm3440, %v3433, %v3437
    %v3442 = vand.u32 2147483647, %v3432
    %vm3443 = vcmp.eq.f32.partialorder %v3442, 8.507059e+37
    %v3444 = vand.u32 %v3432, 2147483648
    %v3445 = vor.u32 1.1754944e-38, %v3444
    %v3446 = vsel %vm3443, %v3445, %v3441
    %v3447 = vmul.f32 1.0, %v3446
    %v3448 = vadd.f32 %v3387, %v3412
    %v3449 = vxor.u32 %v3448, 2147483648
    %v3450 = vmul.f32 %v3449, 1.442695
    %v3451 = vpow.pop %v3450
    %v3452 = vadd.f32 %v3451, 1.0
    %v3453 = vrcp.pop %v3452
    %v3454 = vmul.f32 %v3452, %v3453
    %v3455 = vsub.f32 1.0, %v3454
    %v3456 = vmul.f32 %v3453, %v3455
    %v3457 = vadd.f32 %v3453, %v3456
    %vm3458 = vweird.f32 %v3452
    %vm3459 = vweird.f32 %v3453
    %vm3460 = vmor %vm3458, %vm3459
    %v3461 = vsel %vm3460, %v3453, %v3457
    %v3462 = vand.u32 2147483647, %v3452
    %vm3463 = vcmp.eq.f32.partialorder %v3462, 8.507059e+37
    %v3464 = vand.u32 %v3452, 2147483648
    %v3465 = vor.u32 1.1754944e-38, %v3464
    %v3466 = vsel %vm3463, %v3465, %v3461
    %v3467 = vmul.f32 1.0, %v3466
    %v3468 = vmul.f32 %v3447, %v3425
    %v3469 = vadd.f32 %v3388, %v3468
    %v3470 = vtanh.pop %v3469
    %v3471 = vsub.f32 1.0, %v3467
    %v3472 = vmul.f32 %v3471, %v3470
    %v3473 = vmul.f32 %v3467, %v3383
    %v3474 = vadd.f32 %v3472, %v3473
    %v3475 = vpack.c.bf16 %v3474, %v3474
    %3476 = vst [vmem:[#allocation2 + $0x18] sm:$0xf] %v3475
    %v3477 = vld [vmem:[#allocation3 + $0xa8] sm:$0xff]
    %v3478 = vld [vmem:[#allocation3 + $0xb0] sm:$0xff]
    %v3479 = vld [vmem:[#allocation3 + $0xb8] sm:$0xff]
    %3480 = vmatpush.bf16.msra.mxu0 %v2816
    %3481 = vmatpush.bf16.msra.mxu0 %v2813
    %3482 = vmatpush.bf16.msra.mxu0 %v2810
    %3483 = vmatpush.bf16.msra.mxu0 %v2807
    %3484 = vmatpush.bf16.msra.mxu0 %v2804
    %3485 = vmatpush.bf16.msra.mxu0 %v2801
    %3486 = vmatpush.bf16.msra.mxu0 %v2798
    %3487 = vmatpush.bf16.msra.mxu0 %v2795
    %3488 = vmatmul.bf16.gmra.mxu0 %v3475
    %v3489 = vpop.f32.mrf.mxu0
    %v3490 = vadd.f32 %v2706, %v3489
    %v3491 = vpop.f32.mrf.mxu0
    %3492 = vdwg.mxu0
    %3493 = vmatpush.bf16.msra.mxu0 %v2817
    %3494 = vmatpush.bf16.msra.mxu0 %v2814
    %3495 = vmatpush.bf16.msra.mxu0 %v2811
    %3496 = vmatpush.bf16.msra.mxu0 %v2808
    %3497 = vmatpush.bf16.msra.mxu0 %v2805
    %3498 = vmatpush.bf16.msra.mxu0 %v2802
    %3499 = vmatpush.bf16.msra.mxu0 %v2799
    %3500 = vmatpush.bf16.msra.mxu0 %v2796
    %3501 = vmatmul.bf16.gmra.mxu0 %v3475
    %v3502 = vpop.f32.mrf.mxu0
    %v3503 = vadd.f32 %v2707, %v3502
    %v3504 = vpop.f32.mrf.mxu0
    %3505 = vdwg.mxu0
    %3506 = vmatpush.bf16.msra.mxu0 %v2818
    %3507 = vmatpush.bf16.msra.mxu0 %v2815
    %3508 = vmatpush.bf16.msra.mxu0 %v2812
    %3509 = vmatpush.bf16.msra.mxu0 %v2809
    %3510 = vmatpush.bf16.msra.mxu0 %v2806
    %3511 = vmatpush.bf16.msra.mxu0 %v2803
    %3512 = vmatpush.bf16.msra.mxu0 %v2800
    %3513 = vmatpush.bf16.msra.mxu0 %v2797
    %3514 = vmatmul.bf16.gmra.mxu0 %v3475
    %v3515 = vpop.f32.mrf.mxu0
    %v3516 = vadd.f32 %v2708, %v3515
    %v3517 = vpop.f32.mrf.mxu0
    %3518 = vdwg.mxu0
    %v3519 = vadd.f32 %v3477, %v3490
    %v3520 = vxor.u32 %v3519, 2147483648
    %v3521 = vmul.f32 %v3520, 1.442695
    %v3522 = vpow.pop %v3521
    %v3523 = vadd.f32 %v3522, 1.0
    %v3524 = vrcp.pop %v3523
    %v3525 = vmul.f32 %v3523, %v3524
    %v3526 = vsub.f32 1.0, %v3525
    %v3527 = vmul.f32 %v3524, %v3526
    %v3528 = vadd.f32 %v3524, %v3527
    %vm3529 = vweird.f32 %v3523
    %vm3530 = vweird.f32 %v3524
    %vm3531 = vmor %vm3529, %vm3530
    %v3532 = vsel %vm3531, %v3524, %v3528
    %v3533 = vand.u32 2147483647, %v3523
    %vm3534 = vcmp.eq.f32.partialorder %v3533, 8.507059e+37
    %v3535 = vand.u32 %v3523, 2147483648
    %v3536 = vor.u32 1.1754944e-38, %v3535
    %v3537 = vsel %vm3534, %v3536, %v3532
    %v3538 = vmul.f32 1.0, %v3537
    %v3539 = vadd.f32 %v3478, %v3503
    %v3540 = vxor.u32 %v3539, 2147483648
    %v3541 = vmul.f32 %v3540, 1.442695
    %v3542 = vpow.pop %v3541
    %v3543 = vadd.f32 %v3542, 1.0
    %v3544 = vrcp.pop %v3543
    %v3545 = vmul.f32 %v3543, %v3544
    %v3546 = vsub.f32 1.0, %v3545
    %v3547 = vmul.f32 %v3544, %v3546
    %v3548 = vadd.f32 %v3544, %v3547
    %vm3549 = vweird.f32 %v3543
    %vm3550 = vweird.f32 %v3544
    %vm3551 = vmor %vm3549, %vm3550
    %v3552 = vsel %vm3551, %v3544, %v3548
    %v3553 = vand.u32 2147483647, %v3543
    %vm3554 = vcmp.eq.f32.partialorder %v3553, 8.507059e+37
    %v3555 = vand.u32 %v3543, 2147483648
    %v3556 = vor.u32 1.1754944e-38, %v3555
    %v3557 = vsel %vm3554, %v3556, %v3552
    %v3558 = vmul.f32 1.0, %v3557
    %v3559 = vmul.f32 %v3538, %v3516
    %v3560 = vadd.f32 %v3479, %v3559
    %v3561 = vtanh.pop %v3560
    %v3562 = vsub.f32 1.0, %v3558
    %v3563 = vmul.f32 %v3562, %v3561
    %v3564 = vmul.f32 %v3558, %v3474
    %v3565 = vadd.f32 %v3563, %v3564
    %v3566 = vpack.c.bf16 %v3565, %v3565
    %3567 = vst [vmem:[#allocation2 + $0x1c] sm:$0xf] %v3566
    %v3568 = vld [vmem:[#allocation2] sm:$0xf]
    %v3569 = vld [vmem:[#allocation2 + $0x4] sm:$0xf]
    %v3570 = vld [vmem:[#allocation2 + $0x8] sm:$0xf]
    %v3571 = vld [vmem:[#allocation2 + $0xc] sm:$0xf]
    %v3572 = vld [vmem:[#allocation2 + $0x10] sm:$0xf]
    %v3573 = vld [vmem:[#allocation2 + $0x14] sm:$0xf]
    %v3574 = vld [vmem:[#allocation2 + $0x18] sm:$0xf]
    %v3575 = vld [vmem:[#allocation2 + $0x1c] sm:$0xf]
    %v3576 = vld [vmem:[#allocation15] sm:$0xf]
    %v3577 = vld [vmem:[#allocation15 + $0x4] sm:$0xf]
    %v3578 = vld [vmem:[#allocation15 + $0x8] sm:$0xf]
    %v3579 = vld [vmem:[#allocation15 + $0xc] sm:$0xf]
    %v3580 = vld [vmem:[#allocation15 + $0x10] sm:$0xf]
    %v3581 = vld [vmem:[#allocation15 + $0x14] sm:$0xf]
    %v3582 = vld [vmem:[#allocation15 + $0x18] sm:$0xf]
    %v3583 = vld [vmem:[#allocation15 + $0x1c] sm:$0xf]
    %v3584 = vld [vmem:[#allocation15 + $0x20] sm:$0xf]
    %v3585 = vld [vmem:[#allocation15 + $0x24] sm:$0xf]
    %v3586 = vld [vmem:[#allocation15 + $0x28] sm:$0xf]
    %v3587 = vld [vmem:[#allocation15 + $0x2c] sm:$0xf]
    %v3588 = vld [vmem:[#allocation15 + $0x30] sm:$0xf]
    %v3589 = vld [vmem:[#allocation15 + $0x34] sm:$0xf]
    %v3590 = vld [vmem:[#allocation15 + $0x38] sm:$0xf]
    %v3591 = vld [vmem:[#allocation15 + $0x3c] sm:$0xf]
    %v3592 = vld [vmem:[%s8] sm:$0x1]
    %v3594 = vperm.slane %v3592, 0
    %v3604 = vunpack.c.l.b16 %v3568
    %v3605 = vunpack.c.l.b16 %v3569
    %v3606 = vunpack.c.l.b16 %v3570
    %v3607 = vunpack.c.l.b16 %v3571
    %v3608 = vunpack.c.l.b16 %v3572
    %v3609 = vunpack.c.l.b16 %v3573
    %v3610 = vunpack.c.l.b16 %v3574
    %v3611 = vunpack.c.l.b16 %v3575
    %v3612 = vpack.c.b16 %v3605, %v3604
    %v3613 = vpack.c.b16 %v3607, %v3606
    %v3614 = vpack.c.b16 %v3609, %v3608
    %v3615 = vpack.c.b16 %v3611, %v3610
    %v3636 = vunpack.c.l.b16 %v3576
    %v3637 = vunpack.c.l.b16 %v3577
    %v3638 = vunpack.c.l.b16 %v3578
    %v3639 = vunpack.c.l.b16 %v3579
    %v3640 = vunpack.c.l.b16 %v3580
    %v3641 = vunpack.c.l.b16 %v3581
    %v3642 = vunpack.c.l.b16 %v3582
    %v3643 = vunpack.c.l.b16 %v3583
    %v3644 = vunpack.c.l.b16 %v3584
    %v3645 = vunpack.c.l.b16 %v3585
    %v3646 = vunpack.c.l.b16 %v3586
    %v3647 = vunpack.c.l.b16 %v3587
    %v3648 = vunpack.c.l.b16 %v3588
    %v3649 = vunpack.c.l.b16 %v3589
    %v3650 = vunpack.c.l.b16 %v3590
    %v3651 = vunpack.c.l.b16 %v3591
    %v3652 = vpack.c.b16 %v3637, %v3636
    %v3653 = vpack.c.b16 %v3639, %v3638
    %v3654 = vpack.c.b16 %v3641, %v3640
    %v3655 = vpack.c.b16 %v3643, %v3642
    %v3656 = vpack.c.b16 %v3645, %v3644
    %v3657 = vpack.c.b16 %v3647, %v3646
    %v3658 = vpack.c.b16 %v3649, %v3648
    %v3659 = vpack.c.b16 %v3651, %v3650
    %3668 = vmatpush.bf16.msra.mxu0 %v3659
    %3669 = vmatpush.bf16.msra.mxu0 %v3658
    %3670 = vmatpush.bf16.msra.mxu0 %v3657
    %3671 = vmatpush.bf16.msra.mxu0 %v3656
    %3672 = vmatpush.bf16.msra.mxu0 %v3655
    %3673 = vmatpush.bf16.msra.mxu0 %v3654
    %3674 = vmatpush.bf16.msra.mxu0 %v3653
    %3675 = vmatpush.bf16.msra.mxu0 %v3652
    %3676 = vmatmul.bf16.gmra.mxu0 %v3612
    %v3677 = vpop.f32.mrf.mxu0
    %v3678 = vadd.f32 %v3594, %v3677
    %v3679 = vpop.f32.mrf.mxu0
    %v3680 = vadd.f32 %v3594, %v3679
    %3681 = vmatmul.bf16.gmra.mxu0 %v3613
    %v3682 = vpop.f32.mrf.mxu0
    %v3683 = vadd.f32 %v3594, %v3682
    %v3684 = vpop.f32.mrf.mxu0
    %v3685 = vadd.f32 %v3594, %v3684
    %3686 = vmatmul.bf16.gmra.mxu0 %v3614
    %v3687 = vpop.f32.mrf.mxu0
    %v3688 = vadd.f32 %v3594, %v3687
    %v3689 = vpop.f32.mrf.mxu0
    %v3690 = vadd.f32 %v3594, %v3689
    %3691 = vmatmul.bf16.gmra.mxu0 %v3615
    %v3692 = vpop.f32.mrf.mxu0
    %v3693 = vadd.f32 %v3594, %v3692
    %v3694 = vpop.f32.mrf.mxu0
    %v3695 = vadd.f32 %v3594, %v3694
    %3696 = vdwg.mxu0
    %3697 = vmax.xlane.f32.xlu0 %v3678
    %v3698 = vpop.xlane.xlu0 %3697
    %3699 = vmax.xlane.f32.xlu0 %v3680
    %v3700 = vpop.xlane.xlu0 %3699
    %3701 = vmax.xlane.f32.xlu0 %v3683
    %v3702 = vpop.xlane.xlu0 %3701
    %3703 = vmax.xlane.f32.xlu0 %v3685
    %v3704 = vpop.xlane.xlu0 %3703
    %3705 = vmax.xlane.f32.xlu0 %v3688
    %v3706 = vpop.xlane.xlu0 %3705
    %3707 = vmax.xlane.f32.xlu0 %v3690
    %v3708 = vpop.xlane.xlu0 %3707
    %3709 = vmax.xlane.f32.xlu0 %v3693
    %v3710 = vpop.xlane.xlu0 %3709
    %3711 = vmax.xlane.f32.xlu0 %v3695
    %v3712 = vpop.xlane.xlu0 %3711
    %v3713 = vsub.f32 %v3678, %v3698
    %v3714 = vsub.f32 %v3680, %v3700
    %v3715 = vsub.f32 %v3683, %v3702
    %v3716 = vsub.f32 %v3685, %v3704
    %v3717 = vsub.f32 %v3688, %v3706
    %v3718 = vsub.f32 %v3690, %v3708
    %v3719 = vsub.f32 %v3693, %v3710
    %v3720 = vsub.f32 %v3695, %v3712
    %v3721 = vmul.f32 %v3713, 1.442695
    %v3722 = vpow.pop %v3721
    %v3723 = vmul.f32 %v3714, 1.442695
    %v3724 = vpow.pop %v3723
    %v3725 = vmul.f32 %v3715, 1.442695
    %v3726 = vpow.pop %v3725
    %v3727 = vmul.f32 %v3716, 1.442695
    %v3728 = vpow.pop %v3727
    %v3729 = vmul.f32 %v3717, 1.442695
    %v3730 = vpow.pop %v3729
    %v3731 = vmul.f32 %v3718, 1.442695
    %v3732 = vpow.pop %v3731
    %v3733 = vmul.f32 %v3719, 1.442695
    %v3734 = vpow.pop %v3733
    %v3735 = vmul.f32 %v3720, 1.442695
    %v3736 = vpow.pop %v3735
    %3737 = vadd.xlane.f32.xlu0 %v3722
    %v3738 = vpop.xlane.xlu0 %3737
    %3739 = vadd.xlane.f32.xlu0 %v3724
    %v3740 = vpop.xlane.xlu0 %3739
    %3741 = vadd.xlane.f32.xlu0 %v3726
    %v3742 = vpop.xlane.xlu0 %3741
    %3743 = vadd.xlane.f32.xlu0 %v3728
    %v3744 = vpop.xlane.xlu0 %3743
    %3745 = vadd.xlane.f32.xlu0 %v3730
    %v3746 = vpop.xlane.xlu0 %3745
    %3747 = vadd.xlane.f32.xlu0 %v3732
    %v3748 = vpop.xlane.xlu0 %3747
    %3749 = vadd.xlane.f32.xlu0 %v3734
    %v3750 = vpop.xlane.xlu0 %3749
    %3751 = vadd.xlane.f32.xlu0 %v3736
    %v3752 = vpop.xlane.xlu0 %3751
    %v3753 = vrcp.pop %v3738
    %v3754 = vmul.f32 %v3738, %v3753
    %v3755 = vsub.f32 1.0, %v3754
    %v3756 = vmul.f32 %v3753, %v3755
    %v3757 = vadd.f32 %v3753, %v3756
    %vm3758 = vweird.f32 %v3738
    %vm3759 = vweird.f32 %v3753
    %vm3760 = vmor %vm3758, %vm3759
    %v3761 = vsel %vm3760, %v3753, %v3757
    %v3762 = vand.u32 2147483647, %v3738
    %vm3763 = vcmp.eq.f32.partialorder %v3762, 8.507059e+37
    %v3764 = vand.u32 %v3738, 2147483648
    %v3765 = vor.u32 1.1754944e-38, %v3764
    %v3766 = vsel %vm3763, %v3765, %v3761
    %v3767 = vmul.f32 %v3722, %v3766
    %v3768 = vrcp.pop %v3740
    %v3769 = vmul.f32 %v3740, %v3768
    %v3770 = vsub.f32 1.0, %v3769
    %v3771 = vmul.f32 %v3768, %v3770
    %v3772 = vadd.f32 %v3768, %v3771
    %vm3773 = vweird.f32 %v3740
    %vm3774 = vweird.f32 %v3768
    %vm3775 = vmor %vm3773, %vm3774
    %v3776 = vsel %vm3775, %v3768, %v3772
    %v3777 = vand.u32 2147483647, %v3740
    %vm3778 = vcmp.eq.f32.partialorder %v3777, 8.507059e+37
    %v3779 = vand.u32 %v3740, 2147483648
    %v3780 = vor.u32 1.1754944e-38, %v3779
    %v3781 = vsel %vm3778, %v3780, %v3776
    %v3782 = vmul.f32 %v3724, %v3781
    %v3783 = vrcp.pop %v3742
    %v3784 = vmul.f32 %v3742, %v3783
    %v3785 = vsub.f32 1.0, %v3784
    %v3786 = vmul.f32 %v3783, %v3785
    %v3787 = vadd.f32 %v3783, %v3786
    %vm3788 = vweird.f32 %v3742
    %vm3789 = vweird.f32 %v3783
    %vm3790 = vmor %vm3788, %vm3789
    %v3791 = vsel %vm3790, %v3783, %v3787
    %v3792 = vand.u32 2147483647, %v3742
    %vm3793 = vcmp.eq.f32.partialorder %v3792, 8.507059e+37
    %v3794 = vand.u32 %v3742, 2147483648
    %v3795 = vor.u32 1.1754944e-38, %v3794
    %v3796 = vsel %vm3793, %v3795, %v3791
    %v3797 = vmul.f32 %v3726, %v3796
    %v3798 = vrcp.pop %v3744
    %v3799 = vmul.f32 %v3744, %v3798
    %v3800 = vsub.f32 1.0, %v3799
    %v3801 = vmul.f32 %v3798, %v3800
    %v3802 = vadd.f32 %v3798, %v3801
    %vm3803 = vweird.f32 %v3744
    %vm3804 = vweird.f32 %v3798
    %vm3805 = vmor %vm3803, %vm3804
    %v3806 = vsel %vm3805, %v3798, %v3802
    %v3807 = vand.u32 2147483647, %v3744
    %vm3808 = vcmp.eq.f32.partialorder %v3807, 8.507059e+37
    %v3809 = vand.u32 %v3744, 2147483648
    %v3810 = vor.u32 1.1754944e-38, %v3809
    %v3811 = vsel %vm3808, %v3810, %v3806
    %v3812 = vmul.f32 %v3728, %v3811
    %v3813 = vrcp.pop %v3746
    %v3814 = vmul.f32 %v3746, %v3813
    %v3815 = vsub.f32 1.0, %v3814
    %v3816 = vmul.f32 %v3813, %v3815
    %v3817 = vadd.f32 %v3813, %v3816
    %vm3818 = vweird.f32 %v3746
    %vm3819 = vweird.f32 %v3813
    %vm3820 = vmor %vm3818, %vm3819
    %v3821 = vsel %vm3820, %v3813, %v3817
    %v3822 = vand.u32 2147483647, %v3746
    %vm3823 = vcmp.eq.f32.partialorder %v3822, 8.507059e+37
    %v3824 = vand.u32 %v3746, 2147483648
    %v3825 = vor.u32 1.1754944e-38, %v3824
    %v3826 = vsel %vm3823, %v3825, %v3821
    %v3827 = vmul.f32 %v3730, %v3826
    %v3828 = vrcp.pop %v3748
    %v3829 = vmul.f32 %v3748, %v3828
    %v3830 = vsub.f32 1.0, %v3829
    %v3831 = vmul.f32 %v3828, %v3830
    %v3832 = vadd.f32 %v3828, %v3831
    %vm3833 = vweird.f32 %v3748
    %vm3834 = vweird.f32 %v3828
    %vm3835 = vmor %vm3833, %vm3834
    %v3836 = vsel %vm3835, %v3828, %v3832
    %v3837 = vand.u32 2147483647, %v3748
    %vm3838 = vcmp.eq.f32.partialorder %v3837, 8.507059e+37
    %v3839 = vand.u32 %v3748, 2147483648
    %v3840 = vor.u32 1.1754944e-38, %v3839
    %v3841 = vsel %vm3838, %v3840, %v3836
    %v3842 = vmul.f32 %v3732, %v3841
    %v3843 = vrcp.pop %v3750
    %v3844 = vmul.f32 %v3750, %v3843
    %v3845 = vsub.f32 1.0, %v3844
    %v3846 = vmul.f32 %v3843, %v3845
    %v3847 = vadd.f32 %v3843, %v3846
    %vm3848 = vweird.f32 %v3750
    %vm3849 = vweird.f32 %v3843
    %vm3850 = vmor %vm3848, %vm3849
    %v3851 = vsel %vm3850, %v3843, %v3847
    %v3852 = vand.u32 2147483647, %v3750
    %vm3853 = vcmp.eq.f32.partialorder %v3852, 8.507059e+37
    %v3854 = vand.u32 %v3750, 2147483648
    %v3855 = vor.u32 1.1754944e-38, %v3854
    %v3856 = vsel %vm3853, %v3855, %v3851
    %v3857 = vmul.f32 %v3734, %v3856
    %v3858 = vrcp.pop %v3752
    %v3859 = vmul.f32 %v3752, %v3858
    %v3860 = vsub.f32 1.0, %v3859
    %v3861 = vmul.f32 %v3858, %v3860
    %v3862 = vadd.f32 %v3858, %v3861
    %vm3863 = vweird.f32 %v3752
    %vm3864 = vweird.f32 %v3858
    %vm3865 = vmor %vm3863, %vm3864
    %v3866 = vsel %vm3865, %v3858, %v3862
    %v3867 = vand.u32 2147483647, %v3752
    %vm3868 = vcmp.eq.f32.partialorder %v3867, 8.507059e+37
    %v3869 = vand.u32 %v3752, 2147483648
    %v3870 = vor.u32 1.1754944e-38, %v3869
    %v3871 = vsel %vm3868, %v3870, %v3866
    %v3872 = vmul.f32 %v3736, %v3871
    %3873 = vst [vmem:[#allocation16] sm:$0xff] %v3767
    %3874 = vst [vmem:[#allocation16 + $0x8] sm:$0xff] %v3782
    %3875 = vst [vmem:[#allocation16 + $0x10] sm:$0xff] %v3797
    %3876 = vst [vmem:[#allocation16 + $0x18] sm:$0xff] %v3812
    %3877 = vst [vmem:[#allocation16 + $0x20] sm:$0xff] %v3827
    %3878 = vst [vmem:[#allocation16 + $0x28] sm:$0xff] %v3842
    %3879 = vst [vmem:[#allocation16 + $0x30] sm:$0xff] %v3857
    %3880 = vst [vmem:[#allocation16 + $0x38] sm:$0xff] %v3872
    // Predicated region
    $region66: #{tpu_custom_call.1} parent=1 // pred_check
      _
    $region67: #{tpu_custom_call.1} parent=1 // pred_check_branch
      %3882 = sbr.rel (0) target = $region69
    $region68: #{tpu_custom_call.1} parent=1 // pred_region
      %3884 = vsyncadd [#allocation6], 0
      %s3886 = sshll.u32 [#allocation16], 4
      %s3887 = int_to_ptr.vmem [resolvable:$true] %s3886
      %s3888 = sshll.u32 %s9, 4
      %s3889 = int_to_ptr.hbm [resolvable:$true] %s3888
      %3891 = dma.vmem_to_hbm [thread:$0]  %s3887, 1024, %s3889, [#allocation6]
    $region69: #{tpu_custom_call.1} parent=1 // pred_fallthru
      _
    // Predicated region
    $region70: #{tpu_custom_call.1} parent=1 // pred_check
      _
    $region71: #{tpu_custom_call.1} parent=1 // pred_check_branch
      %3893 = sbr.rel (0) target = $region73
    $region72: #{tpu_custom_call.1} parent=1 // pred_region
      %3895 = dma.done [#allocation6], 1024
    $region73: #{tpu_custom_call.1} parent=1 // pred_fallthru
      _
    %3896 = vsyncpa [#allocation5], 1
    %3897 = vsyncpa [#allocation8], 1
    %3898 = vsyncpa [#allocation11], 1
    %3899 = vsyncpa [#allocation14], 1
    %3900 = vsyncpa [#allocation6], 1

</llo_original>
